<compile_context>
chip_gen: v7x
topology: tpu7x:2x2x1
jax: 0.10.0
libtpu: 0.0.40
codegen_flags: <defaults>
</compile_context>

<pallas_src>
import math
from typing import NamedTuple

import jax
import jax.numpy as jnp
from jax import lax
from jax.experimental import pallas as pl
from jax.experimental.pallas import tpu as pltpu

_VMEM = pl.BlockSpec(memory_space=pltpu.MemorySpace.VMEM)
_W_DTYPE = jnp.bfloat16      # MXU operand dtype (packed weights + casted activations)
_ALIGN = 16                  # bf16 sublane tile height -> keep every sub-block 16-row aligned
_SLAB = 128                  # lane-dense output width (one full lane tile)


def _round_up(x, a):
    return ((x + a - 1) // a) * a


# --------------------------- packed weight layout --------------------------- #

class PackedLayout(NamedTuple):
    n: int          # number of couplings
    dim: int        # coupling dimension (input_size for flow, latent_size for dynamics)
    hidden: int     # hidden units of each s/t MLP
    width: int      # lane width of the packed buffer (>= 2*hidden, >= 2*dim, multiple of 128)
    rows: int       # rows per coupling
    r_w1: int
    r_b1: int
    r_w2: int
    r_b2: int
    r_w3: int
    r_b3: int


def make_layout(n, dim, hidden):
    width = max(128, _round_up(2 * hidden, 128), _round_up(2 * dim, 128))
    r_w1 = 0
    r_b1 = _round_up(dim, _ALIGN)
    r_w2 = r_b1 + _ALIGN
    r_b2 = r_w2 + width
    r_w3 = r_b2 + _ALIGN
    r_b3 = r_w3 + width
    rows = r_b3 + _ALIGN
    return PackedLayout(n, dim, hidden, width, rows, r_w1, r_b1, r_w2, r_b2, r_w3, r_b3)


# ------------------------------ kernel helpers ------------------------------ #

def _leaky_relu(x, slope=0.01):
    # nn.LeakyReLU default negative_slope = 0.01
    return jnp.where(x > 0, x, slope * x)


def _half_mask(dim):
    # mask1 = [0]*(dim//2) + [1]*(dim//2), shape (1, dim)
    col = lax.broadcasted_iota(jnp.int32, (1, dim), 1)
    return (col >= dim // 2).astype(jnp.float32)


def _fused_st(z_masked, w_ref, base, lay):
    """Fused s/t MLP read from one packed bf16 slab; tanh applied only to the s half.

    All layer widths are zero-padded to `lay.width` lanes, so full-width matmuls are exact;
    biases live in single rows of the same slab (cast to f32 before the add).
    """
    f32 = jnp.float32
    dim = lay.dim
    W1 = w_ref[base + lay.r_w1: base + lay.r_w1 + dim, :]
    b1 = w_ref[base + lay.r_b1: base + lay.r_b1 + 1, :].astype(f32)
    W2 = w_ref[base + lay.r_w2: base + lay.r_w2 + lay.width, :]
    b2 = w_ref[base + lay.r_b2: base + lay.r_b2 + 1, :].astype(f32)
    W3 = w_ref[base + lay.r_w3: base + lay.r_w3 + lay.width, :]
    b3 = w_ref[base + lay.r_b3: base + lay.r_b3 + 1, :].astype(f32)

    h = _leaky_relu(jnp.dot(z_masked.astype(_W_DTYPE), W1, preferred_element_type=f32) + b1)
    h = _leaky_relu(jnp.dot(h.astype(_W_DTYPE), W2, preferred_element_type=f32) + b2)
    y = jnp.dot(h.astype(_W_DTYPE), W3, preferred_element_type=f32) + b3
    s = jnp.tanh(y[:, :dim])
    t = y[:, dim:2 * dim]
    return s, t


def _inn_f(x, w_ref, lay):
    """InvertibleNN.f : reversed coupling order.  z = (1-m)*(z-t)*exp(-s) + m*z"""
    m1 = _half_mask(lay.dim)
    m2 = 1.0 - m1
    z = x
    for i in reversed(range(lay.n)):
        m, om = (m1, m2) if i % 2 == 0 else (m2, m1)
        base = i * lay.rows
        z_ = m * z
        s, t = _fused_st(z_, w_ref, base, lay)
        s = s * om
        t = t * om
        z = om * (z - t) * jnp.exp(-s) + z_
    return z


def _inn_g(x, w_ref, lay):
    """InvertibleNN.g : forward coupling order.  x = m*x + (1-m)*(x*exp(s)+t)"""
    m1 = _half_mask(lay.dim)
    m2 = 1.0 - m1
    for i in range(lay.n):
        m, om = (m1, m2) if i % 2 == 0 else (m2, m1)
        base = i * lay.rows
        x_ = m * x
        s, t = _fused_st(x_, w_ref, base, lay)
        s = s * om
        t = t * om
        x = x_ + om * (x * jnp.exp(s) + t)
    return x


# ------------------------------- wrappers ----------------------------------- #

def build_forward_fn(flow_lay, dyn_lay, input_size, latent_size):
    """Whole RNISNet.forward hot path in ONE pallas_call (3 inputs, 1 lane-dense output)."""
    D, L = input_size, latent_size
    sz = D - L
    has_noise = sz > 0

    def fwd(flow_w, dyn_w, x_t, x_t1, noise_key):
        B = x_t.shape[0]

        def kernel(data_ref, flow_w_ref, dyn_w_ref, out_ref, *scratch):
            # encode x_t and x_t1 together (stacked along batch): flow.f
            z = _inn_f(data_ref[0:2 * B, :].astype(jnp.float32), flow_w_ref, flow_lay)
            h_t = z[0:B, 0:L]
            h_t1 = z[B:2 * B, 0:L]
            # latent dynamics: dynamics.f(h_t)
            h_hat = _inn_f(h_t, dyn_w_ref, dyn_lay)
            # decode input [h_hat | noise]: VMEM scratch + static-slice stores (no MXU scatter)
            if has_noise:
                dec_ref = scratch[0]
                dec_ref[...] = data_ref[2 * B:3 * B, :].astype(jnp.float32)   # [0 | noise]
                dec_ref[:, 0:L] = h_hat
                dec_in = dec_ref[...]
            else:
                dec_in = h_hat
            x_hat = _inn_g(dec_in, flow_w_ref, flow_lay)
            # ONE lane-dense (B, 128) output slab -> single whole-block writeback DMA
            out_ref[...] = jnp.zeros(out_ref.shape, out_ref.dtype)
            out_ref[:, 0:D] = x_hat
            out_ref[:, D:D + L] = h_t
            out_ref[:, D + L:D + 2 * L] = h_t1
            out_ref[:, D + 2 * L:D + 3 * L] = h_hat

        # one (2B or 3B, D) data slab: [x_t ; x_t1 ; (zeros|noise)]
        parts = [x_t.astype(jnp.float32), x_t1.astype(jnp.float32)]
        if has_noise:
            # MultivariateNormal(0, I).sample((B,)) == standard normal noise
            noise = jax.random.normal(noise_key, (B, sz), jnp.float32)
            parts.append(jnp.concatenate([jnp.zeros((B, L), jnp.float32), noise], axis=1))
        data = jnp.concatenate(parts, axis=0)

        slab = pl.pallas_call(
            kernel,
            out_shape=jax.ShapeDtypeStruct((B, _SLAB), jnp.float32),
            in_specs=[_VMEM, _VMEM, _VMEM],
            out_specs=_VMEM,
            scratch_shapes=([pltpu.VMEM((B, D), jnp.float32)] if has_noise else []),
        )(data, flow_w, dyn_w)
        # TODO(synk): for training-scale batches add a batch grid axis with
        # dimension_semantics=("parallel",) so v7x's two TensorCores split the rows.

        x_hat = slab[:, 0:D]
        h_t = slab[:, D:D + L]
        h_t1 = slab[:, D + L:D + 2 * L]
        h_hat = slab[:, D + 2 * L:D + 3 * L]
        return x_hat, h_t, h_t1, h_hat

    return jax.jit(fwd)


def build_pass_fn(lay, direction):
    """Standalone InvertibleNN pass (encoding / decoding / dynamics helper API)."""
    assert direction in ("f", "g")
    fn = _inn_f if direction == "f" else _inn_g

    def kernel(x_ref, w_ref, o_ref):
        o_ref[...] = fn(x_ref[...].astype(jnp.float32), w_ref, lay).astype(o_ref.dtype)

    def run(x, w):
        return pl.pallas_call(
            kernel,
            out_shape=jax.ShapeDtypeStruct(x.shape, jnp.float32),
            in_specs=[_VMEM, _VMEM],
            out_specs=_VMEM,
        )(x.astype(jnp.float32), w)

    return jax.jit(run)


# ----------------------------- parameter init ------------------------------- #

def init_linear(key, fan_in, fan_out):
    # matches nn.Linear's U(-1/sqrt(fan_in), 1/sqrt(fan_in)) init distribution
    k1, k2 = jax.random.split(key)
    bound = 1.0 / math.sqrt(fan_in)
    W = jax.random.uniform(k1, (fan_in, fan_out), jnp.float32, -bound, bound)
    b = jax.random.uniform(k2, (fan_out,), jnp.float32, -bound, bound)
    return W, b


def init_packed_network(key, n_coupling, dim, hidden):
    """Init separate s/t 3-layer MLPs per coupling, fuse each pair:
         layer1: [sW1 | tW1]            (dim, 2H)
         layer2: blockdiag(sW2, tW2)    (2H, 2H)
         layer3: blockdiag(sW3, tW3)    (2H, 2*dim)
       and pack weights + biases of ALL couplings into ONE bf16 (n*rows, width) buffer
       (zero padded, 16-row-aligned sub-blocks) so the kernel takes a single weight operand."""
    lay = make_layout(n_coupling, dim, hidden)
    H = hidden
    bufs = []
    for kk in jax.random.split(key, n_coupling):
        ks = jax.random.split(kk, 6)
        sW1, sb1 = init_linear(ks[0], dim, H)
        sW2, sb2 = init_linear(ks[1], H, H)
        sW3, sb3 = init_linear(ks[2], H, dim)
        tW1, tb1 = init_linear(ks[3], dim, H)
        tW2, tb2 = init_linear(ks[4], H, H)
        tW3, tb3 = init_linear(ks[5], H, dim)

        buf = jnp.zeros((lay.rows, lay.width), jnp.float32)
        buf = buf.at[lay.r_w1:lay.r_w1 + dim, 0:H].set(sW1)
        buf = buf.at[lay.r_w1:lay.r_w1 + dim, H:2 * H].set(tW1)
        buf = buf.at[lay.r_b1, 0:H].set(sb1)
        buf = buf.at[lay.r_b1, H:2 * H].set(tb1)
        buf = buf.at[lay.r_w2:lay.r_w2 + H, 0:H].set(sW2)
        buf = buf.at[lay.r_w2 + H:lay.r_w2 + 2 * H, H:2 * H].set(tW2)
        buf = buf.at[lay.r_b2, 0:H].set(sb2)
        buf = buf.at[lay.r_b2, H:2 * H].set(tb2)
        buf = buf.at[lay.r_w3:lay.r_w3 + H, 0:dim].set(sW3)
        buf = buf.at[lay.r_w3 + H:lay.r_w3 + 2 * H, dim:2 * dim].set(tW3)
        buf = buf.at[lay.r_b3, 0:dim].set(sb3)
        buf = buf.at[lay.r_b3, dim:2 * dim].set(tb3)
        bufs.append(buf)
    packed = jnp.concatenate(bufs, axis=0).astype(_W_DTYPE)
    return packed, lay


# --------------------------------- RNISNet ----------------------------------- #

class RNISNetPallas:
    def __init__(self, key, input_size=4, latent_size=2,
                 hidden_units=64, hidden_units_dyn=64, is_normalized=True):
        if input_size % 2 != 0:
            input_size += 1
        self.input_size = input_size
        self.latent_size = latent_size
        self.is_normalized = is_normalized   # unused by RNISNet.forward (parity with reference)

        k_flow, k_dyn = jax.random.split(key)
        # flow: masks [m1,m2,m1,m2,m1,m2] -> mask.size(0)//2 = 3 couplings over input_size
        self.flow_w, self.flow_lay = init_packed_network(k_flow, 3, input_size, hidden_units)
        # dynamics: masks [m1,m2,m1,m2] over latent_size -> 2 couplings
        self.dyn_w, self.dyn_lay = init_packed_network(k_dyn, 2, latent_size, hidden_units_dyn)

        self._fwd = build_forward_fn(self.flow_lay, self.dyn_lay, input_size, latent_size)
        self._flow_f = build_pass_fn(self.flow_lay, "f")
        self._flow_g = build_pass_fn(self.flow_lay, "g")
        self._dyn_f = build_pass_fn(self.dyn_lay, "f")
        self._dyn_g = build_pass_fn(self.dyn_lay, "g")

    # ---- standalone pieces (parity with the reference API) ----
    def encoding(self, x):
        return self._flow_f(x, self.flow_w)[:, :self.latent_size]

    def decoding(self, h_t1_hat, noise_key):
        sz = self.input_size - self.latent_size
        if sz > 0:
            noise = jax.random.normal(noise_key, (h_t1_hat.shape[0], sz), jnp.float32)
            h_t1_hat = jnp.concatenate([h_t1_hat.astype(jnp.float32), noise], axis=1)
        return self._flow_g(h_t1_hat, self.flow_w)

    def dynamics_f(self, h):
        return self._dyn_f(h, self.dyn_w)

    def back_forward(self, x_t1):
        return self._dyn_g(self.encoding(x_t1), self.dyn_w)

    # ---- fused forward (single pallas_call, jitted) ----
    def forward(self, x_t, x_t1, noise_key, L=1, num_samples=1000):
        # cal_EI_1: module defaults to training mode -> (count, avg_log_jacobian) = (0, 0).
        # TODO(synk): eval-mode EI (autograd jacobian of dynamics.f + log|det|) not ported;
        #             it needs AD through the Pallas kernel (custom JVP rule).
        count = 0
        avg_log_jacobian = jnp.float32(0.0)

        x_t1_hat, h_t, h_t1, h_t1_hat = self._fwd(self.flow_w, self.dyn_w, x_t, x_t1, noise_key)

        ei_items = {"h_t": h_t, "h_t1": h_t1, "h_t1_hat": h_t1_hat,
                    "avg_log_jacobian": avg_log_jacobian, "count": count}
        return x_t1_hat, ei_items


# ------------------------------------ main ------------------------------------ #

if __name__ == "__main__":
    key = jax.random.PRNGKey(0)
    k_params, k_xt, k_xt1, k_noise = jax.random.split(key, 4)

    B = 8
    INPUT_SIZE = 4
    LATENT_SIZE = 2
    HIDDEN = 64
    HIDDEN_DYN = 64

    model = RNISNetPallas(k_params, input_size=INPUT_SIZE, latent_size=LATENT_SIZE,
                          hidden_units=HIDDEN, hidden_units_dyn=HIDDEN_DYN)

    x_t = jax.random.normal(k_xt, (B, INPUT_SIZE), jnp.float32)
    x_t1 = jax.random.normal(k_xt1, (B, INPUT_SIZE), jnp.float32)

    x_t1_hat, ei_items = model.forward(x_t, x_t1, k_noise)

    jax.block_until_ready(x_t1_hat)
    jax.block_until_ready(ei_items["h_t"])
    jax.block_until_ready(ei_items["h_t1"])
    jax.block_until_ready(ei_items["h_t1_hat"])

    assert x_t1_hat.shape == (B, INPUT_SIZE)
    assert ei_items["h_t"].shape == (B, LATENT_SIZE)
    assert ei_items["h_t1"].shape == (B, LATENT_SIZE)
    assert ei_items["h_t1_hat"].shape == (B, LATENT_SIZE)

    # internal consistency: fused single-call forward == standalone per-stage kernels
    h_t_ref = model.encoding(x_t)
    h_t1_ref = model.encoding(x_t1)
    h_hat_ref = model.dynamics_f(h_t_ref)
    jax.block_until_ready(h_hat_ref)
    assert jnp.allclose(ei_items["h_t"], h_t_ref, atol=1e-3, rtol=1e-3)
    assert jnp.allclose(ei_items["h_t1"], h_t1_ref, atol=1e-3, rtol=1e-3)
    assert jnp.allclose(ei_items["h_t1_hat"], h_hat_ref, atol=1e-3, rtol=1e-3)

    print("KERNEL_OK")
</pallas_src>

<mosaic_0001>
module attributes {stable_mosaic.version = 11 : i64} {
  func.func @kernel(%arg0: memref<24x4xf32, #tpu.memory_space<vmem>>, %arg1: memref<960x128xbf16, #tpu.memory_space<vmem>>, %arg2: memref<640x128xbf16, #tpu.memory_space<vmem>>, %arg3: memref<8x128xf32, #tpu.memory_space<vmem>>, %arg4: memref<8x4xf32, #tpu.memory_space<vmem>>) attributes {dimension_semantics = [], scalar_prefetch = 0 : i64, scratch_operands = 1 : i64, tpu.core_type = #tpu.core_type<tc>} {
    %c0 = arith.constant 0 : index
    %c0_0 = arith.constant 0 : index
    %0 = vector.load %arg0[%c0, %c0_0] : memref<24x4xf32, #tpu.memory_space<vmem>>, vector<16x4xf32>
    %1 = tpu.iota {dimensions = array<i32: 1>} : vector<1x4xi32>
    %c2_i32 = arith.constant 2 : i32
    %2 = vector.broadcast %c2_i32 : i32 to vector<1x4xi32>
    %3 = arith.cmpi sge, %1, %2 : vector<1x4xi32>
    %4 = arith.extui %3 : vector<1x4xi1> to vector<1x4xi32>
    %5 = arith.sitofp %4 : vector<1x4xi32> to vector<1x4xf32>
    %cst = arith.constant 1.000000e+00 : f32
    %6 = vector.broadcast %cst : f32 to vector<1x4xf32>
    %7 = arith.subf %6, %5 : vector<1x4xf32>
    %8 = vector.broadcast %5 : vector<1x4xf32> to vector<16x4xf32>
    %9 = arith.mulf %8, %0 : vector<16x4xf32>
    %c640 = arith.constant 640 : index
    %c0_1 = arith.constant 0 : index
    %10 = vector.load %arg1[%c640, %c0_1] : memref<960x128xbf16, #tpu.memory_space<vmem>>, vector<4x128xbf16>
    %c656 = arith.constant 656 : index
    %c0_2 = arith.constant 0 : index
    %11 = vector.load %arg1[%c656, %c0_2] : memref<960x128xbf16, #tpu.memory_space<vmem>>, vector<1x128xbf16>
    %12 = arith.extf %11 : vector<1x128xbf16> to vector<1x128xf32>
    %c672 = arith.constant 672 : index
    %c0_3 = arith.constant 0 : index
    %13 = vector.load %arg1[%c672, %c0_3] : memref<960x128xbf16, #tpu.memory_space<vmem>>, vector<128x128xbf16>
    %c800 = arith.constant 800 : index
    %c0_4 = arith.constant 0 : index
    %14 = vector.load %arg1[%c800, %c0_4] : memref<960x128xbf16, #tpu.memory_space<vmem>>, vector<1x128xbf16>
    %15 = arith.extf %14 : vector<1x128xbf16> to vector<1x128xf32>
    %c816 = arith.constant 816 : index
    %c0_5 = arith.constant 0 : index
    %16 = vector.load %arg1[%c816, %c0_5] : memref<960x128xbf16, #tpu.memory_space<vmem>>, vector<128x128xbf16>
    %c944 = arith.constant 944 : index
    %c0_6 = arith.constant 0 : index
    %17 = vector.load %arg1[%c944, %c0_6] : memref<960x128xbf16, #tpu.memory_space<vmem>>, vector<1x128xbf16>
    %18 = arith.extf %17 : vector<1x128xbf16> to vector<1x128xf32>
    %19 = arith.truncf %9 : vector<16x4xf32> to vector<16x4xbf16>
    %cst_7 = arith.constant dense<0.000000e+00> : vector<16x128xf32>
    %20 = tpu.matmul %19, %10, %cst_7 {dimension_numbers = #tpu.dot_dimension_numbers<[1], [0], [0], [1], [0, 0, 1, 1], [], []>} : vector<16x4xbf16>, vector<4x128xbf16>, vector<16x128xf32> -> vector<16x128xf32>
    %21 = vector.broadcast %12 : vector<1x128xf32> to vector<16x128xf32>
    %22 = arith.addf %20, %21 : vector<16x128xf32>
    %cst_8 = arith.constant 0.000000e+00 : f32
    %23 = vector.broadcast %cst_8 : f32 to vector<16x128xf32>
    %24 = arith.cmpf ogt, %22, %23 : vector<16x128xf32>
    %cst_9 = arith.constant 0.00999999977 : f32
    %25 = vector.broadcast %cst_9 : f32 to vector<16x128xf32>
    %26 = arith.mulf %25, %22 : vector<16x128xf32>
    %27 = arith.select %24, %22, %26 : vector<16x128xi1>, vector<16x128xf32>
    %28 = arith.truncf %27 : vector<16x128xf32> to vector<16x128xbf16>
    %cst_10 = arith.constant dense<0.000000e+00> : vector<16x128xf32>
    %29 = tpu.matmul %28, %13, %cst_10 {dimension_numbers = #tpu.dot_dimension_numbers<[1], [0], [0], [1], [0, 0, 1, 1], [], []>} : vector<16x128xbf16>, vector<128x128xbf16>, vector<16x128xf32> -> vector<16x128xf32>
    %30 = vector.broadcast %15 : vector<1x128xf32> to vector<16x128xf32>
    %31 = arith.addf %29, %30 : vector<16x128xf32>
    %cst_11 = arith.constant 0.000000e+00 : f32
    %32 = vector.broadcast %cst_11 : f32 to vector<16x128xf32>
    %33 = arith.cmpf ogt, %31, %32 : vector<16x128xf32>
    %cst_12 = arith.constant 0.00999999977 : f32
    %34 = vector.broadcast %cst_12 : f32 to vector<16x128xf32>
    %35 = arith.mulf %34, %31 : vector<16x128xf32>
    %36 = arith.select %33, %31, %35 : vector<16x128xi1>, vector<16x128xf32>
    %37 = arith.truncf %36 : vector<16x128xf32> to vector<16x128xbf16>
    %cst_13 = arith.constant dense<0.000000e+00> : vector<16x128xf32>
    %38 = tpu.matmul %37, %16, %cst_13 {dimension_numbers = #tpu.dot_dimension_numbers<[1], [0], [0], [1], [0, 0, 1, 1], [], []>} : vector<16x128xbf16>, vector<128x128xbf16>, vector<16x128xf32> -> vector<16x128xf32>
    %39 = vector.broadcast %18 : vector<1x128xf32> to vector<16x128xf32>
    %40 = arith.addf %38, %39 : vector<16x128xf32>
    %41 = vector.extract_strided_slice %40 {offsets = [0, 0], sizes = [16, 4], strides = [1, 1]} : vector<16x128xf32> to vector<16x4xf32>
    %42 = math.tanh %41 : vector<16x4xf32>
    %43 = vector.extract_strided_slice %40 {offsets = [0, 4], sizes = [16, 4], strides = [1, 1]} : vector<16x128xf32> to vector<16x4xf32>
    %44 = vector.broadcast %7 : vector<1x4xf32> to vector<16x4xf32>
    %45 = arith.mulf %42, %44 : vector<16x4xf32>
    %46 = vector.broadcast %7 : vector<1x4xf32> to vector<16x4xf32>
    %47 = arith.mulf %43, %46 : vector<16x4xf32>
    %48 = arith.subf %0, %47 : vector<16x4xf32>
    %49 = vector.broadcast %7 : vector<1x4xf32> to vector<16x4xf32>
    %50 = arith.mulf %49, %48 : vector<16x4xf32>
    %cst_14 = arith.constant 0.000000e+00 : f32
    %51 = vector.broadcast %cst_14 : f32 to vector<16x4xf32>
    %52 = arith.subf %51, %45 : vector<16x4xf32>
    %53 = math.exp %52 : vector<16x4xf32>
    %54 = arith.mulf %50, %53 : vector<16x4xf32>
    %55 = arith.addf %54, %9 : vector<16x4xf32>
    %56 = vector.broadcast %7 : vector<1x4xf32> to vector<16x4xf32>
    %57 = arith.mulf %56, %55 : vector<16x4xf32>
    %c320 = arith.constant 320 : index
    %c0_15 = arith.constant 0 : index
    %58 = vector.load %arg1[%c320, %c0_15] : memref<960x128xbf16, #tpu.memory_space<vmem>>, vector<4x128xbf16>
    %c336 = arith.constant 336 : index
    %c0_16 = arith.constant 0 : index
    %59 = vector.load %arg1[%c336, %c0_16] : memref<960x128xbf16, #tpu.memory_space<vmem>>, vector<1x128xbf16>
    %60 = arith.extf %59 : vector<1x128xbf16> to vector<1x128xf32>
    %c352 = arith.constant 352 : index
    %c0_17 = arith.constant 0 : index
    %61 = vector.load %arg1[%c352, %c0_17] : memref<960x128xbf16, #tpu.memory_space<vmem>>, vector<128x128xbf16>
    %c480 = arith.constant 480 : index
    %c0_18 = arith.constant 0 : index
    %62 = vector.load %arg1[%c480, %c0_18] : memref<960x128xbf16, #tpu.memory_space<vmem>>, vector<1x128xbf16>
    %63 = arith.extf %62 : vector<1x128xbf16> to vector<1x128xf32>
    %c496 = arith.constant 496 : index
    %c0_19 = arith.constant 0 : index
    %64 = vector.load %arg1[%c496, %c0_19] : memref<960x128xbf16, #tpu.memory_space<vmem>>, vector<128x128xbf16>
    %c624 = arith.constant 624 : index
    %c0_20 = arith.constant 0 : index
    %65 = vector.load %arg1[%c624, %c0_20] : memref<960x128xbf16, #tpu.memory_space<vmem>>, vector<1x128xbf16>
    %66 = arith.extf %65 : vector<1x128xbf16> to vector<1x128xf32>
    %67 = arith.truncf %57 : vector<16x4xf32> to vector<16x4xbf16>
    %cst_21 = arith.constant dense<0.000000e+00> : vector<16x128xf32>
    %68 = tpu.matmul %67, %58, %cst_21 {dimension_numbers = #tpu.dot_dimension_numbers<[1], [0], [0], [1], [0, 0, 1, 1], [], []>} : vector<16x4xbf16>, vector<4x128xbf16>, vector<16x128xf32> -> vector<16x128xf32>
    %69 = vector.broadcast %60 : vector<1x128xf32> to vector<16x128xf32>
    %70 = arith.addf %68, %69 : vector<16x128xf32>
    %cst_22 = arith.constant 0.000000e+00 : f32
    %71 = vector.broadcast %cst_22 : f32 to vector<16x128xf32>
    %72 = arith.cmpf ogt, %70, %71 : vector<16x128xf32>
    %cst_23 = arith.constant 0.00999999977 : f32
    %73 = vector.broadcast %cst_23 : f32 to vector<16x128xf32>
    %74 = arith.mulf %73, %70 : vector<16x128xf32>
    %75 = arith.select %72, %70, %74 : vector<16x128xi1>, vector<16x128xf32>
    %76 = arith.truncf %75 : vector<16x128xf32> to vector<16x128xbf16>
    %cst_24 = arith.constant dense<0.000000e+00> : vector<16x128xf32>
    %77 = tpu.matmul %76, %61, %cst_24 {dimension_numbers = #tpu.dot_dimension_numbers<[1], [0], [0], [1], [0, 0, 1, 1], [], []>} : vector<16x128xbf16>, vector<128x128xbf16>, vector<16x128xf32> -> vector<16x128xf32>
    %78 = vector.broadcast %63 : vector<1x128xf32> to vector<16x128xf32>
    %79 = arith.addf %77, %78 : vector<16x128xf32>
    %cst_25 = arith.constant 0.000000e+00 : f32
    %80 = vector.broadcast %cst_25 : f32 to vector<16x128xf32>
    %81 = arith.cmpf ogt, %79, %80 : vector<16x128xf32>
    %cst_26 = arith.constant 0.00999999977 : f32
    %82 = vector.broadcast %cst_26 : f32 to vector<16x128xf32>
    %83 = arith.mulf %82, %79 : vector<16x128xf32>
    %84 = arith.select %81, %79, %83 : vector<16x128xi1>, vector<16x128xf32>
    %85 = arith.truncf %84 : vector<16x128xf32> to vector<16x128xbf16>
    %cst_27 = arith.constant dense<0.000000e+00> : vector<16x128xf32>
    %86 = tpu.matmul %85, %64, %cst_27 {dimension_numbers = #tpu.dot_dimension_numbers<[1], [0], [0], [1], [0, 0, 1, 1], [], []>} : vector<16x128xbf16>, vector<128x128xbf16>, vector<16x128xf32> -> vector<16x128xf32>
    %87 = vector.broadcast %66 : vector<1x128xf32> to vector<16x128xf32>
    %88 = arith.addf %86, %87 : vector<16x128xf32>
    %89 = vector.extract_strided_slice %88 {offsets = [0, 0], sizes = [16, 4], strides = [1, 1]} : vector<16x128xf32> to vector<16x4xf32>
    %90 = math.tanh %89 : vector<16x4xf32>
    %91 = vector.extract_strided_slice %88 {offsets = [0, 4], sizes = [16, 4], strides = [1, 1]} : vector<16x128xf32> to vector<16x4xf32>
    %92 = vector.broadcast %5 : vector<1x4xf32> to vector<16x4xf32>
    %93 = arith.mulf %90, %92 : vector<16x4xf32>
    %94 = vector.broadcast %5 : vector<1x4xf32> to vector<16x4xf32>
    %95 = arith.mulf %91, %94 : vector<16x4xf32>
    %96 = arith.subf %55, %95 : vector<16x4xf32>
    %97 = vector.broadcast %5 : vector<1x4xf32> to vector<16x4xf32>
    %98 = arith.mulf %97, %96 : vector<16x4xf32>
    %cst_28 = arith.constant 0.000000e+00 : f32
    %99 = vector.broadcast %cst_28 : f32 to vector<16x4xf32>
    %100 = arith.subf %99, %93 : vector<16x4xf32>
    %101 = math.exp %100 : vector<16x4xf32>
    %102 = arith.mulf %98, %101 : vector<16x4xf32>
    %103 = arith.addf %102, %57 : vector<16x4xf32>
    %104 = vector.broadcast %5 : vector<1x4xf32> to vector<16x4xf32>
    %105 = arith.mulf %104, %103 : vector<16x4xf32>
    %c0_29 = arith.constant 0 : index
    %c0_30 = arith.constant 0 : index
    %106 = vector.load %arg1[%c0_29, %c0_30] : memref<960x128xbf16, #tpu.memory_space<vmem>>, vector<4x128xbf16>
    %c16 = arith.constant 16 : index
    %c0_31 = arith.constant 0 : index
    %107 = vector.load %arg1[%c16, %c0_31] : memref<960x128xbf16, #tpu.memory_space<vmem>>, vector<1x128xbf16>
    %108 = arith.extf %107 : vector<1x128xbf16> to vector<1x128xf32>
    %c32 = arith.constant 32 : index
    %c0_32 = arith.constant 0 : index
    %109 = vector.load %arg1[%c32, %c0_32] : memref<960x128xbf16, #tpu.memory_space<vmem>>, vector<128x128xbf16>
    %c160 = arith.constant 160 : index
    %c0_33 = arith.constant 0 : index
    %110 = vector.load %arg1[%c160, %c0_33] : memref<960x128xbf16, #tpu.memory_space<vmem>>, vector<1x128xbf16>
    %111 = arith.extf %110 : vector<1x128xbf16> to vector<1x128xf32>
    %c176 = arith.constant 176 : index
    %c0_34 = arith.constant 0 : index
    %112 = vector.load %arg1[%c176, %c0_34] : memref<960x128xbf16, #tpu.memory_space<vmem>>, vector<128x128xbf16>
    %c304 = arith.constant 304 : index
    %c0_35 = arith.constant 0 : index
    %113 = vector.load %arg1[%c304, %c0_35] : memref<960x128xbf16, #tpu.memory_space<vmem>>, vector<1x128xbf16>
    %114 = arith.extf %113 : vector<1x128xbf16> to vector<1x128xf32>
    %115 = arith.truncf %105 : vector<16x4xf32> to vector<16x4xbf16>
    %cst_36 = arith.constant dense<0.000000e+00> : vector<16x128xf32>
    %116 = tpu.matmul %115, %106, %cst_36 {dimension_numbers = #tpu.dot_dimension_numbers<[1], [0], [0], [1], [0, 0, 1, 1], [], []>} : vector<16x4xbf16>, vector<4x128xbf16>, vector<16x128xf32> -> vector<16x128xf32>
    %117 = vector.broadcast %108 : vector<1x128xf32> to vector<16x128xf32>
    %118 = arith.addf %116, %117 : vector<16x128xf32>
    %cst_37 = arith.constant 0.000000e+00 : f32
    %119 = vector.broadcast %cst_37 : f32 to vector<16x128xf32>
    %120 = arith.cmpf ogt, %118, %119 : vector<16x128xf32>
    %cst_38 = arith.constant 0.00999999977 : f32
    %121 = vector.broadcast %cst_38 : f32 to vector<16x128xf32>
    %122 = arith.mulf %121, %118 : vector<16x128xf32>
    %123 = arith.select %120, %118, %122 : vector<16x128xi1>, vector<16x128xf32>
    %124 = arith.truncf %123 : vector<16x128xf32> to vector<16x128xbf16>
    %cst_39 = arith.constant dense<0.000000e+00> : vector<16x128xf32>
    %125 = tpu.matmul %124, %109, %cst_39 {dimension_numbers = #tpu.dot_dimension_numbers<[1], [0], [0], [1], [0, 0, 1, 1], [], []>} : vector<16x128xbf16>, vector<128x128xbf16>, vector<16x128xf32> -> vector<16x128xf32>
    %126 = vector.broadcast %111 : vector<1x128xf32> to vector<16x128xf32>
    %127 = arith.addf %125, %126 : vector<16x128xf32>
    %cst_40 = arith.constant 0.000000e+00 : f32
    %128 = vector.broadcast %cst_40 : f32 to vector<16x128xf32>
    %129 = arith.cmpf ogt, %127, %128 : vector<16x128xf32>
    %cst_41 = arith.constant 0.00999999977 : f32
    %130 = vector.broadcast %cst_41 : f32 to vector<16x128xf32>
    %131 = arith.mulf %130, %127 : vector<16x128xf32>
    %132 = arith.select %129, %127, %131 : vector<16x128xi1>, vector<16x128xf32>
    %133 = arith.truncf %132 : vector<16x128xf32> to vector<16x128xbf16>
    %cst_42 = arith.constant dense<0.000000e+00> : vector<16x128xf32>
    %134 = tpu.matmul %133, %112, %cst_42 {dimension_numbers = #tpu.dot_dimension_numbers<[1], [0], [0], [1], [0, 0, 1, 1], [], []>} : vector<16x128xbf16>, vector<128x128xbf16>, vector<16x128xf32> -> vector<16x128xf32>
    %135 = vector.broadcast %114 : vector<1x128xf32> to vector<16x128xf32>
    %136 = arith.addf %134, %135 : vector<16x128xf32>
    %137 = vector.extract_strided_slice %136 {offsets = [0, 0], sizes = [16, 4], strides = [1, 1]} : vector<16x128xf32> to vector<16x4xf32>
    %138 = math.tanh %137 : vector<16x4xf32>
    %139 = vector.extract_strided_slice %136 {offsets = [0, 4], sizes = [16, 4], strides = [1, 1]} : vector<16x128xf32> to vector<16x4xf32>
    %140 = vector.broadcast %7 : vector<1x4xf32> to vector<16x4xf32>
    %141 = arith.mulf %138, %140 : vector<16x4xf32>
    %142 = vector.broadcast %7 : vector<1x4xf32> to vector<16x4xf32>
    %143 = arith.mulf %139, %142 : vector<16x4xf32>
    %144 = arith.subf %103, %143 : vector<16x4xf32>
    %145 = vector.broadcast %7 : vector<1x4xf32> to vector<16x4xf32>
    %146 = arith.mulf %145, %144 : vector<16x4xf32>
    %cst_43 = arith.constant 0.000000e+00 : f32
    %147 = vector.broadcast %cst_43 : f32 to vector<16x4xf32>
    %148 = arith.subf %147, %141 : vector<16x4xf32>
    %149 = math.exp %148 : vector<16x4xf32>
    %150 = arith.mulf %146, %149 : vector<16x4xf32>
    %151 = arith.addf %150, %105 : vector<16x4xf32>
    %152 = vector.extract_strided_slice %151 {offsets = [0, 0], sizes = [8, 2], strides = [1, 1]} : vector<16x4xf32> to vector<8x2xf32>
    %153 = vector.extract_strided_slice %151 {offsets = [8, 0], sizes = [8, 2], strides = [1, 1]} : vector<16x4xf32> to vector<8x2xf32>
    %154 = tpu.iota {dimensions = array<i32: 1>} : vector<1x2xi32>
    %c1_i32 = arith.constant 1 : i32
    %155 = vector.broadcast %c1_i32 : i32 to vector<1x2xi32>
    %156 = arith.cmpi sge, %154, %155 : vector<1x2xi32>
    %157 = arith.extui %156 : vector<1x2xi1> to vector<1x2xi32>
    %158 = arith.sitofp %157 : vector<1x2xi32> to vector<1x2xf32>
    %cst_44 = arith.constant 1.000000e+00 : f32
    %159 = vector.broadcast %cst_44 : f32 to vector<1x2xf32>
    %160 = arith.subf %159, %158 : vector<1x2xf32>
    %161 = vector.broadcast %160 : vector<1x2xf32> to vector<8x2xf32>
    %162 = arith.mulf %161, %152 : vector<8x2xf32>
    %c320_45 = arith.constant 320 : index
    %c0_46 = arith.constant 0 : index
    %163 = vector.load %arg2[%c320_45, %c0_46] : memref<640x128xbf16, #tpu.memory_space<vmem>>, vector<2x128xbf16>
    %c336_47 = arith.constant 336 : index
    %c0_48 = arith.constant 0 : index
    %164 = vector.load %arg2[%c336_47, %c0_48] : memref<640x128xbf16, #tpu.memory_space<vmem>>, vector<1x128xbf16>
    %165 = arith.extf %164 : vector<1x128xbf16> to vector<1x128xf32>
    %c352_49 = arith.constant 352 : index
    %c0_50 = arith.constant 0 : index
    %166 = vector.load %arg2[%c352_49, %c0_50] : memref<640x128xbf16, #tpu.memory_space<vmem>>, vector<128x128xbf16>
    %c480_51 = arith.constant 480 : index
    %c0_52 = arith.constant 0 : index
    %167 = vector.load %arg2[%c480_51, %c0_52] : memref<640x128xbf16, #tpu.memory_space<vmem>>, vector<1x128xbf16>
    %168 = arith.extf %167 : vector<1x128xbf16> to vector<1x128xf32>
    %c496_53 = arith.constant 496 : index
    %c0_54 = arith.constant 0 : index
    %169 = vector.load %arg2[%c496_53, %c0_54] : memref<640x128xbf16, #tpu.memory_space<vmem>>, vector<128x128xbf16>
    %c624_55 = arith.constant 624 : index
    %c0_56 = arith.constant 0 : index
    %170 = vector.load %arg2[%c624_55, %c0_56] : memref<640x128xbf16, #tpu.memory_space<vmem>>, vector<1x128xbf16>
    %171 = arith.extf %170 : vector<1x128xbf16> to vector<1x128xf32>
    %172 = arith.truncf %162 : vector<8x2xf32> to vector<8x2xbf16>
    %cst_57 = arith.constant dense<0.000000e+00> : vector<8x128xf32>
    %173 = tpu.matmul %172, %163, %cst_57 {dimension_numbers = #tpu.dot_dimension_numbers<[1], [0], [0], [1], [0, 0, 1, 1], [], []>} : vector<8x2xbf16>, vector<2x128xbf16>, vector<8x128xf32> -> vector<8x128xf32>
    %174 = vector.broadcast %165 : vector<1x128xf32> to vector<8x128xf32>
    %175 = arith.addf %173, %174 : vector<8x128xf32>
    %cst_58 = arith.constant 0.000000e+00 : f32
    %176 = vector.broadcast %cst_58 : f32 to vector<8x128xf32>
    %177 = arith.cmpf ogt, %175, %176 : vector<8x128xf32>
    %cst_59 = arith.constant 0.00999999977 : f32
    %178 = vector.broadcast %cst_59 : f32 to vector<8x128xf32>
    %179 = arith.mulf %178, %175 : vector<8x128xf32>
    %180 = arith.select %177, %175, %179 : vector<8x128xi1>, vector<8x128xf32>
    %181 = arith.truncf %180 : vector<8x128xf32> to vector<8x128xbf16>
    %cst_60 = arith.constant dense<0.000000e+00> : vector<8x128xf32>
    %182 = tpu.matmul %181, %166, %cst_60 {dimension_numbers = #tpu.dot_dimension_numbers<[1], [0], [0], [1], [0, 0, 1, 1], [], []>} : vector<8x128xbf16>, vector<128x128xbf16>, vector<8x128xf32> -> vector<8x128xf32>
    %183 = vector.broadcast %168 : vector<1x128xf32> to vector<8x128xf32>
    %184 = arith.addf %182, %183 : vector<8x128xf32>
    %cst_61 = arith.constant 0.000000e+00 : f32
    %185 = vector.broadcast %cst_61 : f32 to vector<8x128xf32>
    %186 = arith.cmpf ogt, %184, %185 : vector<8x128xf32>
    %cst_62 = arith.constant 0.00999999977 : f32
    %187 = vector.broadcast %cst_62 : f32 to vector<8x128xf32>
    %188 = arith.mulf %187, %184 : vector<8x128xf32>
    %189 = arith.select %186, %184, %188 : vector<8x128xi1>, vector<8x128xf32>
    %190 = arith.truncf %189 : vector<8x128xf32> to vector<8x128xbf16>
    %cst_63 = arith.constant dense<0.000000e+00> : vector<8x128xf32>
    %191 = tpu.matmul %190, %169, %cst_63 {dimension_numbers = #tpu.dot_dimension_numbers<[1], [0], [0], [1], [0, 0, 1, 1], [], []>} : vector<8x128xbf16>, vector<128x128xbf16>, vector<8x128xf32> -> vector<8x128xf32>
    %192 = vector.broadcast %171 : vector<1x128xf32> to vector<8x128xf32>
    %193 = arith.addf %191, %192 : vector<8x128xf32>
    %194 = vector.extract_strided_slice %193 {offsets = [0, 0], sizes = [8, 2], strides = [1, 1]} : vector<8x128xf32> to vector<8x2xf32>
    %195 = math.tanh %194 : vector<8x2xf32>
    %196 = vector.extract_strided_slice %193 {offsets = [0, 2], sizes = [8, 2], strides = [1, 1]} : vector<8x128xf32> to vector<8x2xf32>
    %197 = vector.broadcast %158 : vector<1x2xf32> to vector<8x2xf32>
    %198 = arith.mulf %195, %197 : vector<8x2xf32>
    %199 = vector.broadcast %158 : vector<1x2xf32> to vector<8x2xf32>
    %200 = arith.mulf %196, %199 : vector<8x2xf32>
    %201 = arith.subf %152, %200 : vector<8x2xf32>
    %202 = vector.broadcast %158 : vector<1x2xf32> to vector<8x2xf32>
    %203 = arith.mulf %202, %201 : vector<8x2xf32>
    %cst_64 = arith.constant 0.000000e+00 : f32
    %204 = vector.broadcast %cst_64 : f32 to vector<8x2xf32>
    %205 = arith.subf %204, %198 : vector<8x2xf32>
    %206 = math.exp %205 : vector<8x2xf32>
    %207 = arith.mulf %203, %206 : vector<8x2xf32>
    %208 = arith.addf %207, %162 : vector<8x2xf32>
    %209 = vector.broadcast %158 : vector<1x2xf32> to vector<8x2xf32>
    %210 = arith.mulf %209, %208 : vector<8x2xf32>
    %c0_65 = arith.constant 0 : index
    %c0_66 = arith.constant 0 : index
    %211 = vector.load %arg2[%c0_65, %c0_66] : memref<640x128xbf16, #tpu.memory_space<vmem>>, vector<2x128xbf16>
    %c16_67 = arith.constant 16 : index
    %c0_68 = arith.constant 0 : index
    %212 = vector.load %arg2[%c16_67, %c0_68] : memref<640x128xbf16, #tpu.memory_space<vmem>>, vector<1x128xbf16>
    %213 = arith.extf %212 : vector<1x128xbf16> to vector<1x128xf32>
    %c32_69 = arith.constant 32 : index
    %c0_70 = arith.constant 0 : index
    %214 = vector.load %arg2[%c32_69, %c0_70] : memref<640x128xbf16, #tpu.memory_space<vmem>>, vector<128x128xbf16>
    %c160_71 = arith.constant 160 : index
    %c0_72 = arith.constant 0 : index
    %215 = vector.load %arg2[%c160_71, %c0_72] : memref<640x128xbf16, #tpu.memory_space<vmem>>, vector<1x128xbf16>
    %216 = arith.extf %215 : vector<1x128xbf16> to vector<1x128xf32>
    %c176_73 = arith.constant 176 : index
    %c0_74 = arith.constant 0 : index
    %217 = vector.load %arg2[%c176_73, %c0_74] : memref<640x128xbf16, #tpu.memory_space<vmem>>, vector<128x128xbf16>
    %c304_75 = arith.constant 304 : index
    %c0_76 = arith.constant 0 : index
    %218 = vector.load %arg2[%c304_75, %c0_76] : memref<640x128xbf16, #tpu.memory_space<vmem>>, vector<1x128xbf16>
    %219 = arith.extf %218 : vector<1x128xbf16> to vector<1x128xf32>
    %220 = arith.truncf %210 : vector<8x2xf32> to vector<8x2xbf16>
    %cst_77 = arith.constant dense<0.000000e+00> : vector<8x128xf32>
    %221 = tpu.matmul %220, %211, %cst_77 {dimension_numbers = #tpu.dot_dimension_numbers<[1], [0], [0], [1], [0, 0, 1, 1], [], []>} : vector<8x2xbf16>, vector<2x128xbf16>, vector<8x128xf32> -> vector<8x128xf32>
    %222 = vector.broadcast %213 : vector<1x128xf32> to vector<8x128xf32>
    %223 = arith.addf %221, %222 : vector<8x128xf32>
    %cst_78 = arith.constant 0.000000e+00 : f32
    %224 = vector.broadcast %cst_78 : f32 to vector<8x128xf32>
    %225 = arith.cmpf ogt, %223, %224 : vector<8x128xf32>
    %cst_79 = arith.constant 0.00999999977 : f32
    %226 = vector.broadcast %cst_79 : f32 to vector<8x128xf32>
    %227 = arith.mulf %226, %223 : vector<8x128xf32>
    %228 = arith.select %225, %223, %227 : vector<8x128xi1>, vector<8x128xf32>
    %229 = arith.truncf %228 : vector<8x128xf32> to vector<8x128xbf16>
    %cst_80 = arith.constant dense<0.000000e+00> : vector<8x128xf32>
    %230 = tpu.matmul %229, %214, %cst_80 {dimension_numbers = #tpu.dot_dimension_numbers<[1], [0], [0], [1], [0, 0, 1, 1], [], []>} : vector<8x128xbf16>, vector<128x128xbf16>, vector<8x128xf32> -> vector<8x128xf32>
    %231 = vector.broadcast %216 : vector<1x128xf32> to vector<8x128xf32>
    %232 = arith.addf %230, %231 : vector<8x128xf32>
    %cst_81 = arith.constant 0.000000e+00 : f32
    %233 = vector.broadcast %cst_81 : f32 to vector<8x128xf32>
    %234 = arith.cmpf ogt, %232, %233 : vector<8x128xf32>
    %cst_82 = arith.constant 0.00999999977 : f32
    %235 = vector.broadcast %cst_82 : f32 to vector<8x128xf32>
    %236 = arith.mulf %235, %232 : vector<8x128xf32>
    %237 = arith.select %234, %232, %236 : vector<8x128xi1>, vector<8x128xf32>
    %238 = arith.truncf %237 : vector<8x128xf32> to vector<8x128xbf16>
    %cst_83 = arith.constant dense<0.000000e+00> : vector<8x128xf32>
    %239 = tpu.matmul %238, %217, %cst_83 {dimension_numbers = #tpu.dot_dimension_numbers<[1], [0], [0], [1], [0, 0, 1, 1], [], []>} : vector<8x128xbf16>, vector<128x128xbf16>, vector<8x128xf32> -> vector<8x128xf32>
    %240 = vector.broadcast %219 : vector<1x128xf32> to vector<8x128xf32>
    %241 = arith.addf %239, %240 : vector<8x128xf32>
    %242 = vector.extract_strided_slice %241 {offsets = [0, 0], sizes = [8, 2], strides = [1, 1]} : vector<8x128xf32> to vector<8x2xf32>
    %243 = math.tanh %242 : vector<8x2xf32>
    %244 = vector.extract_strided_slice %241 {offsets = [0, 2], sizes = [8, 2], strides = [1, 1]} : vector<8x128xf32> to vector<8x2xf32>
    %245 = vector.broadcast %160 : vector<1x2xf32> to vector<8x2xf32>
    %246 = arith.mulf %243, %245 : vector<8x2xf32>
    %247 = vector.broadcast %160 : vector<1x2xf32> to vector<8x2xf32>
    %248 = arith.mulf %244, %247 : vector<8x2xf32>
    %249 = arith.subf %208, %248 : vector<8x2xf32>
    %250 = vector.broadcast %160 : vector<1x2xf32> to vector<8x2xf32>
    %251 = arith.mulf %250, %249 : vector<8x2xf32>
    %cst_84 = arith.constant 0.000000e+00 : f32
    %252 = vector.broadcast %cst_84 : f32 to vector<8x2xf32>
    %253 = arith.subf %252, %246 : vector<8x2xf32>
    %254 = math.exp %253 : vector<8x2xf32>
    %255 = arith.mulf %251, %254 : vector<8x2xf32>
    %256 = arith.addf %255, %210 : vector<8x2xf32>
    %c16_85 = arith.constant 16 : index
    %c0_86 = arith.constant 0 : index
    %257 = vector.load %arg0[%c16_85, %c0_86] : memref<24x4xf32, #tpu.memory_space<vmem>>, vector<8x4xf32>
    %c0_87 = arith.constant 0 : index
    %c0_88 = arith.constant 0 : index
    %258 = vector.load %arg4[%c0_87, %c0_88] : memref<8x4xf32, #tpu.memory_space<vmem>>, vector<8x4xf32>
    tpu.vector_store %arg4[%c0_87, %c0_88], %257 {strides = array<i32>} : memref<8x4xf32, #tpu.memory_space<vmem>>, vector<8x4xf32>,
    %c0_89 = arith.constant 0 : index
    %c0_90 = arith.constant 0 : index
    %259 = vector.load %arg4[%c0_89, %c0_90] : memref<8x4xf32, #tpu.memory_space<vmem>>, vector<8x2xf32>
    tpu.vector_store %arg4[%c0_89, %c0_90], %256 {strides = array<i32>} : memref<8x4xf32, #tpu.memory_space<vmem>>, vector<8x2xf32>,
    %c0_91 = arith.constant 0 : index
    %c0_92 = arith.constant 0 : index
    %260 = vector.load %arg4[%c0_91, %c0_92] : memref<8x4xf32, #tpu.memory_space<vmem>>, vector<8x4xf32>
    %261 = tpu.iota {dimensions = array<i32: 1>} : vector<1x4xi32>
    %c2_i32_93 = arith.constant 2 : i32
    %262 = vector.broadcast %c2_i32_93 : i32 to vector<1x4xi32>
    %263 = arith.cmpi sge, %261, %262 : vector<1x4xi32>
    %264 = arith.extui %263 : vector<1x4xi1> to vector<1x4xi32>
    %265 = arith.sitofp %264 : vector<1x4xi32> to vector<1x4xf32>
    %cst_94 = arith.constant 1.000000e+00 : f32
    %266 = vector.broadcast %cst_94 : f32 to vector<1x4xf32>
    %267 = arith.subf %266, %265 : vector<1x4xf32>
    %268 = vector.broadcast %265 : vector<1x4xf32> to vector<8x4xf32>
    %269 = arith.mulf %268, %260 : vector<8x4xf32>
    %c0_95 = arith.constant 0 : index
    %c0_96 = arith.constant 0 : index
    %270 = vector.load %arg1[%c0_95, %c0_96] : memref<960x128xbf16, #tpu.memory_space<vmem>>, vector<4x128xbf16>
    %c16_97 = arith.constant 16 : index
    %c0_98 = arith.constant 0 : index
    %271 = vector.load %arg1[%c16_97, %c0_98] : memref<960x128xbf16, #tpu.memory_space<vmem>>, vector<1x128xbf16>
    %272 = arith.extf %271 : vector<1x128xbf16> to vector<1x128xf32>
    %c32_99 = arith.constant 32 : index
    %c0_100 = arith.constant 0 : index
    %273 = vector.load %arg1[%c32_99, %c0_100] : memref<960x128xbf16, #tpu.memory_space<vmem>>, vector<128x128xbf16>
    %c160_101 = arith.constant 160 : index
    %c0_102 = arith.constant 0 : index
    %274 = vector.load %arg1[%c160_101, %c0_102] : memref<960x128xbf16, #tpu.memory_space<vmem>>, vector<1x128xbf16>
    %275 = arith.extf %274 : vector<1x128xbf16> to vector<1x128xf32>
    %c176_103 = arith.constant 176 : index
    %c0_104 = arith.constant 0 : index
    %276 = vector.load %arg1[%c176_103, %c0_104] : memref<960x128xbf16, #tpu.memory_space<vmem>>, vector<128x128xbf16>
    %c304_105 = arith.constant 304 : index
    %c0_106 = arith.constant 0 : index
    %277 = vector.load %arg1[%c304_105, %c0_106] : memref<960x128xbf16, #tpu.memory_space<vmem>>, vector<1x128xbf16>
    %278 = arith.extf %277 : vector<1x128xbf16> to vector<1x128xf32>
    %279 = arith.truncf %269 : vector<8x4xf32> to vector<8x4xbf16>
    %cst_107 = arith.constant dense<0.000000e+00> : vector<8x128xf32>
    %280 = tpu.matmul %279, %270, %cst_107 {dimension_numbers = #tpu.dot_dimension_numbers<[1], [0], [0], [1], [0, 0, 1, 1], [], []>} : vector<8x4xbf16>, vector<4x128xbf16>, vector<8x128xf32> -> vector<8x128xf32>
    %281 = vector.broadcast %272 : vector<1x128xf32> to vector<8x128xf32>
    %282 = arith.addf %280, %281 : vector<8x128xf32>
    %cst_108 = arith.constant 0.000000e+00 : f32
    %283 = vector.broadcast %cst_108 : f32 to vector<8x128xf32>
    %284 = arith.cmpf ogt, %282, %283 : vector<8x128xf32>
    %cst_109 = arith.constant 0.00999999977 : f32
    %285 = vector.broadcast %cst_109 : f32 to vector<8x128xf32>
    %286 = arith.mulf %285, %282 : vector<8x128xf32>
    %287 = arith.select %284, %282, %286 : vector<8x128xi1>, vector<8x128xf32>
    %288 = arith.truncf %287 : vector<8x128xf32> to vector<8x128xbf16>
    %cst_110 = arith.constant dense<0.000000e+00> : vector<8x128xf32>
    %289 = tpu.matmul %288, %273, %cst_110 {dimension_numbers = #tpu.dot_dimension_numbers<[1], [0], [0], [1], [0, 0, 1, 1], [], []>} : vector<8x128xbf16>, vector<128x128xbf16>, vector<8x128xf32> -> vector<8x128xf32>
    %290 = vector.broadcast %275 : vector<1x128xf32> to vector<8x128xf32>
    %291 = arith.addf %289, %290 : vector<8x128xf32>
    %cst_111 = arith.constant 0.000000e+00 : f32
    %292 = vector.broadcast %cst_111 : f32 to vector<8x128xf32>
    %293 = arith.cmpf ogt, %291, %292 : vector<8x128xf32>
    %cst_112 = arith.constant 0.00999999977 : f32
    %294 = vector.broadcast %cst_112 : f32 to vector<8x128xf32>
    %295 = arith.mulf %294, %291 : vector<8x128xf32>
    %296 = arith.select %293, %291, %295 : vector<8x128xi1>, vector<8x128xf32>
    %297 = arith.truncf %296 : vector<8x128xf32> to vector<8x128xbf16>
    %cst_113 = arith.constant dense<0.000000e+00> : vector<8x128xf32>
    %298 = tpu.matmul %297, %276, %cst_113 {dimension_numbers = #tpu.dot_dimension_numbers<[1], [0], [0], [1], [0, 0, 1, 1], [], []>} : vector<8x128xbf16>, vector<128x128xbf16>, vector<8x128xf32> -> vector<8x128xf32>
    %299 = vector.broadcast %278 : vector<1x128xf32> to vector<8x128xf32>
    %300 = arith.addf %298, %299 : vector<8x128xf32>
    %301 = vector.extract_strided_slice %300 {offsets = [0, 0], sizes = [8, 4], strides = [1, 1]} : vector<8x128xf32> to vector<8x4xf32>
    %302 = math.tanh %301 : vector<8x4xf32>
    %303 = vector.extract_strided_slice %300 {offsets = [0, 4], sizes = [8, 4], strides = [1, 1]} : vector<8x128xf32> to vector<8x4xf32>
    %304 = vector.broadcast %267 : vector<1x4xf32> to vector<8x4xf32>
    %305 = arith.mulf %302, %304 : vector<8x4xf32>
    %306 = vector.broadcast %267 : vector<1x4xf32> to vector<8x4xf32>
    %307 = arith.mulf %303, %306 : vector<8x4xf32>
    %308 = math.exp %305 : vector<8x4xf32>
    %309 = arith.mulf %260, %308 : vector<8x4xf32>
    %310 = arith.addf %309, %307 : vector<8x4xf32>
    %311 = vector.broadcast %267 : vector<1x4xf32> to vector<8x4xf32>
    %312 = arith.mulf %311, %310 : vector<8x4xf32>
    %313 = arith.addf %269, %312 : vector<8x4xf32>
    %314 = vector.broadcast %267 : vector<1x4xf32> to vector<8x4xf32>
    %315 = arith.mulf %314, %313 : vector<8x4xf32>
    %c320_114 = arith.constant 320 : index
    %c0_115 = arith.constant 0 : index
    %316 = vector.load %arg1[%c320_114, %c0_115] : memref<960x128xbf16, #tpu.memory_space<vmem>>, vector<4x128xbf16>
    %c336_116 = arith.constant 336 : index
    %c0_117 = arith.constant 0 : index
    %317 = vector.load %arg1[%c336_116, %c0_117] : memref<960x128xbf16, #tpu.memory_space<vmem>>, vector<1x128xbf16>
    %318 = arith.extf %317 : vector<1x128xbf16> to vector<1x128xf32>
    %c352_118 = arith.constant 352 : index
    %c0_119 = arith.constant 0 : index
    %319 = vector.load %arg1[%c352_118, %c0_119] : memref<960x128xbf16, #tpu.memory_space<vmem>>, vector<128x128xbf16>
    %c480_120 = arith.constant 480 : index
    %c0_121 = arith.constant 0 : index
    %320 = vector.load %arg1[%c480_120, %c0_121] : memref<960x128xbf16, #tpu.memory_space<vmem>>, vector<1x128xbf16>
    %321 = arith.extf %320 : vector<1x128xbf16> to vector<1x128xf32>
    %c496_122 = arith.constant 496 : index
    %c0_123 = arith.constant 0 : index
    %322 = vector.load %arg1[%c496_122, %c0_123] : memref<960x128xbf16, #tpu.memory_space<vmem>>, vector<128x128xbf16>
    %c624_124 = arith.constant 624 : index
    %c0_125 = arith.constant 0 : index
    %323 = vector.load %arg1[%c624_124, %c0_125] : memref<960x128xbf16, #tpu.memory_space<vmem>>, vector<1x128xbf16>
    %324 = arith.extf %323 : vector<1x128xbf16> to vector<1x128xf32>
    %325 = arith.truncf %315 : vector<8x4xf32> to vector<8x4xbf16>
    %cst_126 = arith.constant dense<0.000000e+00> : vector<8x128xf32>
    %326 = tpu.matmul %325, %316, %cst_126 {dimension_numbers = #tpu.dot_dimension_numbers<[1], [0], [0], [1], [0, 0, 1, 1], [], []>} : vector<8x4xbf16>, vector<4x128xbf16>, vector<8x128xf32> -> vector<8x128xf32>
    %327 = vector.broadcast %318 : vector<1x128xf32> to vector<8x128xf32>
    %328 = arith.addf %326, %327 : vector<8x128xf32>
    %cst_127 = arith.constant 0.000000e+00 : f32
    %329 = vector.broadcast %cst_127 : f32 to vector<8x128xf32>
    %330 = arith.cmpf ogt, %328, %329 : vector<8x128xf32>
    %cst_128 = arith.constant 0.00999999977 : f32
    %331 = vector.broadcast %cst_128 : f32 to vector<8x128xf32>
    %332 = arith.mulf %331, %328 : vector<8x128xf32>
    %333 = arith.select %330, %328, %332 : vector<8x128xi1>, vector<8x128xf32>
    %334 = arith.truncf %333 : vector<8x128xf32> to vector<8x128xbf16>
    %cst_129 = arith.constant dense<0.000000e+00> : vector<8x128xf32>
    %335 = tpu.matmul %334, %319, %cst_129 {dimension_numbers = #tpu.dot_dimension_numbers<[1], [0], [0], [1], [0, 0, 1, 1], [], []>} : vector<8x128xbf16>, vector<128x128xbf16>, vector<8x128xf32> -> vector<8x128xf32>
    %336 = vector.broadcast %321 : vector<1x128xf32> to vector<8x128xf32>
    %337 = arith.addf %335, %336 : vector<8x128xf32>
    %cst_130 = arith.constant 0.000000e+00 : f32
    %338 = vector.broadcast %cst_130 : f32 to vector<8x128xf32>
    %339 = arith.cmpf ogt, %337, %338 : vector<8x128xf32>
    %cst_131 = arith.constant 0.00999999977 : f32
    %340 = vector.broadcast %cst_131 : f32 to vector<8x128xf32>
    %341 = arith.mulf %340, %337 : vector<8x128xf32>
    %342 = arith.select %339, %337, %341 : vector<8x128xi1>, vector<8x128xf32>
    %343 = arith.truncf %342 : vector<8x128xf32> to vector<8x128xbf16>
    %cst_132 = arith.constant dense<0.000000e+00> : vector<8x128xf32>
    %344 = tpu.matmul %343, %322, %cst_132 {dimension_numbers = #tpu.dot_dimension_numbers<[1], [0], [0], [1], [0, 0, 1, 1], [], []>} : vector<8x128xbf16>, vector<128x128xbf16>, vector<8x128xf32> -> vector<8x128xf32>
    %345 = vector.broadcast %324 : vector<1x128xf32> to vector<8x128xf32>
    %346 = arith.addf %344, %345 : vector<8x128xf32>
    %347 = vector.extract_strided_slice %346 {offsets = [0, 0], sizes = [8, 4], strides = [1, 1]} : vector<8x128xf32> to vector<8x4xf32>
    %348 = math.tanh %347 : vector<8x4xf32>
    %349 = vector.extract_strided_slice %346 {offsets = [0, 4], sizes = [8, 4], strides = [1, 1]} : vector<8x128xf32> to vector<8x4xf32>
    %350 = vector.broadcast %265 : vector<1x4xf32> to vector<8x4xf32>
    %351 = arith.mulf %348, %350 : vector<8x4xf32>
    %352 = vector.broadcast %265 : vector<1x4xf32> to vector<8x4xf32>
    %353 = arith.mulf %349, %352 : vector<8x4xf32>
    %354 = math.exp %351 : vector<8x4xf32>
    %355 = arith.mulf %313, %354 : vector<8x4xf32>
    %356 = arith.addf %355, %353 : vector<8x4xf32>
    %357 = vector.broadcast %265 : vector<1x4xf32> to vector<8x4xf32>
    %358 = arith.mulf %357, %356 : vector<8x4xf32>
    %359 = arith.addf %315, %358 : vector<8x4xf32>
    %360 = vector.broadcast %265 : vector<1x4xf32> to vector<8x4xf32>
    %361 = arith.mulf %360, %359 : vector<8x4xf32>
    %c640_133 = arith.constant 640 : index
    %c0_134 = arith.constant 0 : index
    %362 = vector.load %arg1[%c640_133, %c0_134] : memref<960x128xbf16, #tpu.memory_space<vmem>>, vector<4x128xbf16>
    %c656_135 = arith.constant 656 : index
    %c0_136 = arith.constant 0 : index
    %363 = vector.load %arg1[%c656_135, %c0_136] : memref<960x128xbf16, #tpu.memory_space<vmem>>, vector<1x128xbf16>
    %364 = arith.extf %363 : vector<1x128xbf16> to vector<1x128xf32>
    %c672_137 = arith.constant 672 : index
    %c0_138 = arith.constant 0 : index
    %365 = vector.load %arg1[%c672_137, %c0_138] : memref<960x128xbf16, #tpu.memory_space<vmem>>, vector<128x128xbf16>
    %c800_139 = arith.constant 800 : index
    %c0_140 = arith.constant 0 : index
    %366 = vector.load %arg1[%c800_139, %c0_140] : memref<960x128xbf16, #tpu.memory_space<vmem>>, vector<1x128xbf16>
    %367 = arith.extf %366 : vector<1x128xbf16> to vector<1x128xf32>
    %c816_141 = arith.constant 816 : index
    %c0_142 = arith.constant 0 : index
    %368 = vector.load %arg1[%c816_141, %c0_142] : memref<960x128xbf16, #tpu.memory_space<vmem>>, vector<128x128xbf16>
    %c944_143 = arith.constant 944 : index
    %c0_144 = arith.constant 0 : index
    %369 = vector.load %arg1[%c944_143, %c0_144] : memref<960x128xbf16, #tpu.memory_space<vmem>>, vector<1x128xbf16>
    %370 = arith.extf %369 : vector<1x128xbf16> to vector<1x128xf32>
    %371 = arith.truncf %361 : vector<8x4xf32> to vector<8x4xbf16>
    %cst_145 = arith.constant dense<0.000000e+00> : vector<8x128xf32>
    %372 = tpu.matmul %371, %362, %cst_145 {dimension_numbers = #tpu.dot_dimension_numbers<[1], [0], [0], [1], [0, 0, 1, 1], [], []>} : vector<8x4xbf16>, vector<4x128xbf16>, vector<8x128xf32> -> vector<8x128xf32>
    %373 = vector.broadcast %364 : vector<1x128xf32> to vector<8x128xf32>
    %374 = arith.addf %372, %373 : vector<8x128xf32>
    %cst_146 = arith.constant 0.000000e+00 : f32
    %375 = vector.broadcast %cst_146 : f32 to vector<8x128xf32>
    %376 = arith.cmpf ogt, %374, %375 : vector<8x128xf32>
    %cst_147 = arith.constant 0.00999999977 : f32
    %377 = vector.broadcast %cst_147 : f32 to vector<8x128xf32>
    %378 = arith.mulf %377, %374 : vector<8x128xf32>
    %379 = arith.select %376, %374, %378 : vector<8x128xi1>, vector<8x128xf32>
    %380 = arith.truncf %379 : vector<8x128xf32> to vector<8x128xbf16>
    %cst_148 = arith.constant dense<0.000000e+00> : vector<8x128xf32>
    %381 = tpu.matmul %380, %365, %cst_148 {dimension_numbers = #tpu.dot_dimension_numbers<[1], [0], [0], [1], [0, 0, 1, 1], [], []>} : vector<8x128xbf16>, vector<128x128xbf16>, vector<8x128xf32> -> vector<8x128xf32>
    %382 = vector.broadcast %367 : vector<1x128xf32> to vector<8x128xf32>
    %383 = arith.addf %381, %382 : vector<8x128xf32>
    %cst_149 = arith.constant 0.000000e+00 : f32
    %384 = vector.broadcast %cst_149 : f32 to vector<8x128xf32>
    %385 = arith.cmpf ogt, %383, %384 : vector<8x128xf32>
    %cst_150 = arith.constant 0.00999999977 : f32
    %386 = vector.broadcast %cst_150 : f32 to vector<8x128xf32>
    %387 = arith.mulf %386, %383 : vector<8x128xf32>
    %388 = arith.select %385, %383, %387 : vector<8x128xi1>, vector<8x128xf32>
    %389 = arith.truncf %388 : vector<8x128xf32> to vector<8x128xbf16>
    %cst_151 = arith.constant dense<0.000000e+00> : vector<8x128xf32>
    %390 = tpu.matmul %389, %368, %cst_151 {dimension_numbers = #tpu.dot_dimension_numbers<[1], [0], [0], [1], [0, 0, 1, 1], [], []>} : vector<8x128xbf16>, vector<128x128xbf16>, vector<8x128xf32> -> vector<8x128xf32>
    %391 = vector.broadcast %370 : vector<1x128xf32> to vector<8x128xf32>
    %392 = arith.addf %390, %391 : vector<8x128xf32>
    %393 = vector.extract_strided_slice %392 {offsets = [0, 0], sizes = [8, 4], strides = [1, 1]} : vector<8x128xf32> to vector<8x4xf32>
    %394 = math.tanh %393 : vector<8x4xf32>
    %395 = vector.extract_strided_slice %392 {offsets = [0, 4], sizes = [8, 4], strides = [1, 1]} : vector<8x128xf32> to vector<8x4xf32>
    %396 = vector.broadcast %267 : vector<1x4xf32> to vector<8x4xf32>
    %397 = arith.mulf %394, %396 : vector<8x4xf32>
    %398 = vector.broadcast %267 : vector<1x4xf32> to vector<8x4xf32>
    %399 = arith.mulf %395, %398 : vector<8x4xf32>
    %400 = math.exp %397 : vector<8x4xf32>
    %401 = arith.mulf %359, %400 : vector<8x4xf32>
    %402 = arith.addf %401, %399 : vector<8x4xf32>
    %403 = vector.broadcast %267 : vector<1x4xf32> to vector<8x4xf32>
    %404 = arith.mulf %403, %402 : vector<8x4xf32>
    %405 = arith.addf %361, %404 : vector<8x4xf32>
    %cst_152 = arith.constant 0.000000e+00 : f32
    %406 = vector.broadcast %cst_152 : f32 to vector<8x128xf32>
    %c0_153 = arith.constant 0 : index
    %c0_154 = arith.constant 0 : index
    %407 = vector.load %arg3[%c0_153, %c0_154] : memref<8x128xf32, #tpu.memory_space<vmem>>, vector<8x128xf32>
    tpu.vector_store %arg3[%c0_153, %c0_154], %406 {strides = array<i32>} : memref<8x128xf32, #tpu.memory_space<vmem>>, vector<8x128xf32>,
    %c0_155 = arith.constant 0 : index
    %c0_156 = arith.constant 0 : index
    %408 = vector.load %arg3[%c0_155, %c0_156] : memref<8x128xf32, #tpu.memory_space<vmem>>, vector<8x4xf32>
    tpu.vector_store %arg3[%c0_155, %c0_156], %405 {strides = array<i32>} : memref<8x128xf32, #tpu.memory_space<vmem>>, vector<8x4xf32>,
    %c0_157 = arith.constant 0 : index
    %c4 = arith.constant 4 : index
    %409 = vector.load %arg3[%c0_157, %c4] : memref<8x128xf32, #tpu.memory_space<vmem>>, vector<8x2xf32>
    tpu.vector_store %arg3[%c0_157, %c4], %152 {strides = array<i32>} : memref<8x128xf32, #tpu.memory_space<vmem>>, vector<8x2xf32>,
    %c0_158 = arith.constant 0 : index
    %c6 = arith.constant 6 : index
    %410 = vector.load %arg3[%c0_158, %c6] : memref<8x128xf32, #tpu.memory_space<vmem>>, vector<8x2xf32>
    tpu.vector_store %arg3[%c0_158, %c6], %153 {strides = array<i32>} : memref<8x128xf32, #tpu.memory_space<vmem>>, vector<8x2xf32>,
    %c0_159 = arith.constant 0 : index
    %c8 = arith.constant 8 : index
    %411 = vector.load %arg3[%c0_159, %c8] : memref<8x128xf32, #tpu.memory_space<vmem>>, vector<8x2xf32>
    tpu.vector_store %arg3[%c0_159, %c8], %256 {strides = array<i32>} : memref<8x128xf32, #tpu.memory_space<vmem>>, vector<8x2xf32>,
    return
  }
}

</mosaic_0001>

<llo_original>
// kernel: fwd.1
$region0: #{fwd.1}
  #allocation0 [shape = 'u32[]', space=smem, size = 0x4, offset = 0x4, fixed_abs, tag = 'smem constant byte address 0x4 - core index']
  #allocation1 [shape = 'u32[144,128]{1,0:T(1,128)}', space=vmem, size = 0x12000, scoped, tag = 'internal scratch']
  #allocation2 [shape = 'f32[8,4]{1,0:T(8,128)}', space=vmem, size = 0x1000, scoped, tag = 'scratch operand']
  %s0 = inlined_call_operand.vmem [shape: f32[24,4], index: 0, kind: input, shape index: {}]
  %s1 = inlined_call_operand.hbm [shape: bf16[960,128], index: 1, kind: input, shape index: {}]
  %s2 = inlined_call_operand.hbm [shape: bf16[640,128], index: 2, kind: input, shape index: {}]
  %s3 = inlined_call_operand.vmem [shape: f32[8,128], index: 3, kind: output, shape index: {}]
  %s4 = sld [smem:[#allocation0]]
  $region30: #{fwd.1} parent=0
    _
  %s6 = ssub.s32 1, %s4
  %s7 = scalar_select 0, %s6, %s4
  $region1: #{fwd.1} parent=0
    #allocation3 [shape = 'u8[245760]{0}', space=vmem, size = 0x3c000, scoped, tag = 'input window, operand 1, single buffered']
    #allocation4 [shape = 's32[1]{0}', space=sflag, size = 0x4, scoped, tag = 'scoped memory for fwd.1']
    #allocation5 [shape = 'u8[163840]{0}', space=vmem, size = 0x28000, scoped, tag = 'input window, operand 2, single buffered']
    #allocation6 [shape = 's32[1]{0}', space=sflag, size = 0x4, scoped, tag = 'scoped memory for fwd.1']
    %8 = vsyncpa [#allocation4], 0
    %9 = vsyncpa [#allocation6], 0
    // Predicated region
    $region2: #{fwd.1} parent=1 // pred_check
      _
    $region3: #{fwd.1} parent=1 // pred_check_branch
      %11 = sbr.rel (0) target = $region5
    $region4: #{fwd.1} parent=1 // pred_region
      _
    $region5: #{fwd.1} parent=1 // pred_fallthru
      _
    // Predicated region
    $region6: #{fwd.1} parent=1 // pred_check
      _
    $region7: #{fwd.1} parent=1 // pred_check_branch
      %13 = sbr.rel (0) target = $region9
    $region8: #{fwd.1} parent=1 // pred_region
      %s15 = ssub.s32 7680, 7680
      %16 = vsyncadd [#allocation4], %s15
      %s17 = sshll.u32 [#allocation3], 4
      %s18 = int_to_ptr.vmem [resolvable:$true] %s17
      %23 = dma.hbm_to_vmem [thread:$0]  %s1, 7680, %s18, [#allocation4], 64, 64, 4
    $region9: #{fwd.1} parent=1 // pred_fallthru
      _
    // Predicated region
    $region10: #{fwd.1} parent=1 // pred_check
      _
    $region11: #{fwd.1} parent=1 // pred_check_branch
      %25 = sbr.rel (0) target = $region13
    $region12: #{fwd.1} parent=1 // pred_region
      %s27 = ssub.s32 5120, 5120
      %28 = vsyncadd [#allocation6], %s27
      %s29 = sshll.u32 [#allocation5], 4
      %s30 = int_to_ptr.vmem [resolvable:$true] %s29
      %35 = dma.hbm_to_vmem [thread:$0]  %s2, 5120, %s30, [#allocation6], 64, 64, 4
    $region13: #{fwd.1} parent=1 // pred_fallthru
      _
    // Predicated region
    $region14: #{fwd.1} parent=1 // pred_check
      _
    $region15: #{fwd.1} parent=1 // pred_check_branch
      %37 = sbr.rel (0) target = $region17
    $region16: #{fwd.1} parent=1 // pred_region
      %38 = dma.done [#allocation4], 7680
    $region17: #{fwd.1} parent=1 // pred_fallthru
      _
    // Predicated region
    $region18: #{fwd.1} parent=1 // pred_check
      _
    $region19: #{fwd.1} parent=1 // pred_check_branch
      %40 = sbr.rel (0) target = $region21
    $region20: #{fwd.1} parent=1 // pred_region
      %41 = dma.done [#allocation6], 5120
    $region21: #{fwd.1} parent=1 // pred_fallthru
      _
    %v43 = vld [vmem:[%s0] sm:$0xff]
    %v44 = vld [vmem:[%s0 + $0x8] sm:$0xff]
    %v45 = vlaneseq
    %v46 = vand.u32 %v45, 127
    %vm47 = vcmp.ge.s32.totalorder %v46, 2
    %v48 = vsel %vm47, 1, 0
    %v49 = vcvt.s32.f32 %v48
    %v50 = vsub.f32 1.0, %v49
    %v51 = vmul.f32 %v49, %v43
    %v52 = vmul.f32 %v49, %v44
    %v53 = vld [vmem:[#allocation3 + $0x140] sm:$0x3]
    %v54 = vld [vmem:[#allocation3 + $0x148] sm:$0x1]
    %v55 = vunpack.c.l.bf16 %v54
    %v56 = vld [vmem:[#allocation3 + $0x150] sm:$0xf]
    %v57 = vld [vmem:[#allocation3 + $0x154] sm:$0xf]
    %v58 = vld [vmem:[#allocation3 + $0x158] sm:$0xf]
    %v59 = vld [vmem:[#allocation3 + $0x15c] sm:$0xf]
    %v60 = vld [vmem:[#allocation3 + $0x160] sm:$0xf]
    %v61 = vld [vmem:[#allocation3 + $0x164] sm:$0xf]
    %v62 = vld [vmem:[#allocation3 + $0x168] sm:$0xf]
    %v63 = vld [vmem:[#allocation3 + $0x16c] sm:$0xf]
    %v64 = vld [vmem:[#allocation3 + $0x170] sm:$0xf]
    %v65 = vld [vmem:[#allocation3 + $0x174] sm:$0xf]
    %v66 = vld [vmem:[#allocation3 + $0x178] sm:$0xf]
    %v67 = vld [vmem:[#allocation3 + $0x17c] sm:$0xf]
    %v68 = vld [vmem:[#allocation3 + $0x180] sm:$0xf]
    %v69 = vld [vmem:[#allocation3 + $0x184] sm:$0xf]
    %v70 = vld [vmem:[#allocation3 + $0x188] sm:$0xf]
    %v71 = vld [vmem:[#allocation3 + $0x18c] sm:$0xf]
    %v72 = vld [vmem:[#allocation3 + $0x190] sm:$0x1]
    %v73 = vunpack.c.l.bf16 %v72
    %v74 = vld [vmem:[#allocation3 + $0x198] sm:$0xf]
    %v75 = vld [vmem:[#allocation3 + $0x19c] sm:$0xf]
    %v76 = vld [vmem:[#allocation3 + $0x1a0] sm:$0xf]
    %v77 = vld [vmem:[#allocation3 + $0x1a4] sm:$0xf]
    %v78 = vld [vmem:[#allocation3 + $0x1a8] sm:$0xf]
    %v79 = vld [vmem:[#allocation3 + $0x1ac] sm:$0xf]
    %v80 = vld [vmem:[#allocation3 + $0x1b0] sm:$0xf]
    %v81 = vld [vmem:[#allocation3 + $0x1b4] sm:$0xf]
    %v82 = vld [vmem:[#allocation3 + $0x1b8] sm:$0xf]
    %v83 = vld [vmem:[#allocation3 + $0x1bc] sm:$0xf]
    %v84 = vld [vmem:[#allocation3 + $0x1c0] sm:$0xf]
    %v85 = vld [vmem:[#allocation3 + $0x1c4] sm:$0xf]
    %v86 = vld [vmem:[#allocation3 + $0x1c8] sm:$0xf]
    %v87 = vld [vmem:[#allocation3 + $0x1cc] sm:$0xf]
    %v88 = vld [vmem:[#allocation3 + $0x1d0] sm:$0xf]
    %v89 = vld [vmem:[#allocation3 + $0x1d4] sm:$0xf]
    %v90 = vld [vmem:[#allocation3 + $0x1d8] sm:$0x1]
    %v91 = vunpack.c.l.bf16 %v90
    %v92 = vpack.c.bf16 %v52, %v51
    %v93 = vlaneseq
    %v94 = vshrl.u32 %v93, 7
    %v95 = vsub.s32 0, %v94
    %v96 = vrot.slane %v55, %v95
    %vm97 = vcmask 31744
    %v99 = vsel %vm97, %v92, 0
    %vm101 = vcmask 1041408
    %v103 = vsel %vm101, %v53, 0
    %105 = vmatprep.subr.bf16.mxu0 0
    %106 = vmatpush1.bf16.msra.mxu0 %v103
    %107 = vmatprep.subr.bf16.mxu0 0
    %108 = vmatpush1.bf16.msra.mxu0 0
    %109 = vmatprep.subr.bf16.mxu0 0
    %110 = vmatpush1.bf16.msra.mxu0 0
    %111 = vmatprep.subr.bf16.mxu0 0
    %112 = vmatpush1.bf16.msra.mxu0 0
    %113 = vmatprep.subr.bf16.mxu0 0
    %114 = vmatpush1.bf16.msra.mxu0 0
    %115 = vmatprep.subr.bf16.mxu0 0
    %116 = vmatpush1.bf16.msra.mxu0 0
    %117 = vmatprep.subr.bf16.mxu0 0
    %118 = vmatpush1.bf16.msra.mxu0 0
    %119 = vmatprep.subr.bf16.mxu0 0
    %120 = vmatpush1.bf16.msra.mxu0 0
    %121 = vmatprep.subr.bf16.mxu0 0
    %122 = vmatpush1.bf16.msra.mxu0 0
    %123 = vmatprep.subr.bf16.mxu0 0
    %124 = vmatpush1.bf16.msra.mxu0 0
    %125 = vmatprep.subr.bf16.mxu0 0
    %126 = vmatpush1.bf16.msra.mxu0 0
    %127 = vmatprep.subr.bf16.mxu0 0
    %128 = vmatpush1.bf16.msra.mxu0 0
    %129 = vmatprep.subr.bf16.mxu0 0
    %130 = vmatpush1.bf16.msra.mxu0 0
    %131 = vmatprep.subr.bf16.mxu0 0
    %132 = vmatpush1.bf16.msra.mxu0 0
    %133 = vmatprep.subr.bf16.mxu0 0
    %134 = vmatpush1.bf16.msra.mxu0 0
    %135 = vmatprep.subr.bf16.mxu0 0
    %136 = vmatpush1.bf16.msra.mxu0 0
    %137 = vmatprep.mubr.bf16.mxu0 0
    %138 = vmatmul.mubr.bf16.gmra.mrb[0].mxu0 %v99
    %v139 = vpop.f32.mrb[0].mxu0
    %v140 = vadd.f32 %v96, %v139
    %v141 = vpop.f32.mrb[0].mxu0
    %v142 = vpop.f32.mrb[0].mxu0
    %v143 = vadd.f32 %v96, %v142
    %v144 = vpop.f32.mrb[0].mxu0
    %145 = vdwg.mxu0
    %vm146 = vcmp.gt.f32.partialorder %v140, 0.0
    %vm147 = vcmp.gt.f32.partialorder %v143, 0.0
    %v148 = vmul.f32 %v140, 0.01
    %v149 = vmul.f32 %v143, 0.01
    %v150 = vsel %vm146, %v140, %v148
    %v151 = vsel %vm147, %v143, %v149
    %v152 = vpack.c.bf16 %v151, %v150
    %v153 = vlaneseq
    %v154 = vshrl.u32 %v153, 7
    %v155 = vsub.s32 0, %v154
    %v156 = vrot.slane %v73, %v155
    %v173 = vunpack.c.l.b16 %v56
    %v174 = vunpack.c.l.b16 %v57
    %v175 = vunpack.c.l.b16 %v58
    %v176 = vunpack.c.l.b16 %v59
    %v177 = vunpack.c.l.b16 %v60
    %v178 = vunpack.c.l.b16 %v61
    %v179 = vunpack.c.l.b16 %v62
    %v180 = vunpack.c.l.b16 %v63
    %v181 = vunpack.c.l.b16 %v64
    %v182 = vunpack.c.l.b16 %v65
    %v183 = vunpack.c.l.b16 %v66
    %v184 = vunpack.c.l.b16 %v67
    %v185 = vunpack.c.l.b16 %v68
    %v186 = vunpack.c.l.b16 %v69
    %v187 = vunpack.c.l.b16 %v70
    %v188 = vunpack.c.l.b16 %v71
    %v189 = vpack.c.b16 %v174, %v173
    %v190 = vpack.c.b16 %v176, %v175
    %v191 = vpack.c.b16 %v178, %v177
    %v192 = vpack.c.b16 %v180, %v179
    %v193 = vpack.c.b16 %v182, %v181
    %v194 = vpack.c.b16 %v184, %v183
    %v195 = vpack.c.b16 %v186, %v185
    %v196 = vpack.c.b16 %v188, %v187
    %205 = vmatprep.subr.bf16.mxu0 0
    %206 = vmatpush1.bf16.msra.mxu0 %v189
    %207 = vmatprep.subr.bf16.mxu0 0
    %208 = vmatpush1.bf16.msra.mxu0 %v190
    %209 = vmatprep.subr.bf16.mxu0 0
    %210 = vmatpush1.bf16.msra.mxu0 %v191
    %211 = vmatprep.subr.bf16.mxu0 0
    %212 = vmatpush1.bf16.msra.mxu0 %v192
    %213 = vmatprep.subr.bf16.mxu0 0
    %214 = vmatpush1.bf16.msra.mxu0 %v193
    %215 = vmatprep.subr.bf16.mxu0 0
    %216 = vmatpush1.bf16.msra.mxu0 %v194
    %217 = vmatprep.subr.bf16.mxu0 0
    %218 = vmatpush1.bf16.msra.mxu0 %v195
    %219 = vmatprep.subr.bf16.mxu0 0
    %220 = vmatpush1.bf16.msra.mxu0 %v196
    %221 = vmatprep.subr.bf16.mxu0 0
    %222 = vmatpush1.bf16.msra.mxu0 0
    %223 = vmatprep.subr.bf16.mxu0 0
    %224 = vmatpush1.bf16.msra.mxu0 0
    %225 = vmatprep.subr.bf16.mxu0 0
    %226 = vmatpush1.bf16.msra.mxu0 0
    %227 = vmatprep.subr.bf16.mxu0 0
    %228 = vmatpush1.bf16.msra.mxu0 0
    %229 = vmatprep.subr.bf16.mxu0 0
    %230 = vmatpush1.bf16.msra.mxu0 0
    %231 = vmatprep.subr.bf16.mxu0 0
    %232 = vmatpush1.bf16.msra.mxu0 0
    %233 = vmatprep.subr.bf16.mxu0 0
    %234 = vmatpush1.bf16.msra.mxu0 0
    %235 = vmatprep.subr.bf16.mxu0 0
    %236 = vmatpush1.bf16.msra.mxu0 0
    %237 = vmatprep.mubr.bf16.mxu0 0
    %238 = vmatmul.mubr.bf16.gmra.mrb[0].mxu0 %v152
    %v239 = vpop.f32.mrb[0].mxu0
    %v240 = vadd.f32 %v156, %v239
    %v241 = vpop.f32.mrb[0].mxu0
    %v242 = vpop.f32.mrb[0].mxu0
    %v243 = vadd.f32 %v156, %v242
    %v244 = vpop.f32.mrb[0].mxu0
    %245 = vdwg.mxu0
    %vm246 = vcmp.gt.f32.partialorder %v240, 0.0
    %vm247 = vcmp.gt.f32.partialorder %v243, 0.0
    %v248 = vmul.f32 %v240, 0.01
    %v249 = vmul.f32 %v243, 0.01
    %v250 = vsel %vm246, %v240, %v248
    %v251 = vsel %vm247, %v243, %v249
    %v252 = vpack.c.bf16 %v251, %v250
    %v253 = vlaneseq
    %v254 = vshrl.u32 %v253, 7
    %v255 = vsub.s32 0, %v254
    %v256 = vrot.slane %v91, %v255
    %v273 = vunpack.c.l.b16 %v74
    %v274 = vunpack.c.l.b16 %v75
    %v275 = vunpack.c.l.b16 %v76
    %v276 = vunpack.c.l.b16 %v77
    %v277 = vunpack.c.l.b16 %v78
    %v278 = vunpack.c.l.b16 %v79
    %v279 = vunpack.c.l.b16 %v80
    %v280 = vunpack.c.l.b16 %v81
    %v281 = vunpack.c.l.b16 %v82
    %v282 = vunpack.c.l.b16 %v83
    %v283 = vunpack.c.l.b16 %v84
    %v284 = vunpack.c.l.b16 %v85
    %v285 = vunpack.c.l.b16 %v86
    %v286 = vunpack.c.l.b16 %v87
    %v287 = vunpack.c.l.b16 %v88
    %v288 = vunpack.c.l.b16 %v89
    %v289 = vpack.c.b16 %v274, %v273
    %v290 = vpack.c.b16 %v276, %v275
    %v291 = vpack.c.b16 %v278, %v277
    %v292 = vpack.c.b16 %v280, %v279
    %v293 = vpack.c.b16 %v282, %v281
    %v294 = vpack.c.b16 %v284, %v283
    %v295 = vpack.c.b16 %v286, %v285
    %v296 = vpack.c.b16 %v288, %v287
    %305 = vmatprep.subr.bf16.mxu0 0
    %306 = vmatpush1.bf16.msra.mxu0 %v289
    %307 = vmatprep.subr.bf16.mxu0 0
    %308 = vmatpush1.bf16.msra.mxu0 %v290
    %309 = vmatprep.subr.bf16.mxu0 0
    %310 = vmatpush1.bf16.msra.mxu0 %v291
    %311 = vmatprep.subr.bf16.mxu0 0
    %312 = vmatpush1.bf16.msra.mxu0 %v292
    %313 = vmatprep.subr.bf16.mxu0 0
    %314 = vmatpush1.bf16.msra.mxu0 %v293
    %315 = vmatprep.subr.bf16.mxu0 0
    %316 = vmatpush1.bf16.msra.mxu0 %v294
    %317 = vmatprep.subr.bf16.mxu0 0
    %318 = vmatpush1.bf16.msra.mxu0 %v295
    %319 = vmatprep.subr.bf16.mxu0 0
    %320 = vmatpush1.bf16.msra.mxu0 %v296
    %321 = vmatprep.subr.bf16.mxu0 0
    %322 = vmatpush1.bf16.msra.mxu0 0
    %323 = vmatprep.subr.bf16.mxu0 0
    %324 = vmatpush1.bf16.msra.mxu0 0
    %325 = vmatprep.subr.bf16.mxu0 0
    %326 = vmatpush1.bf16.msra.mxu0 0
    %327 = vmatprep.subr.bf16.mxu0 0
    %328 = vmatpush1.bf16.msra.mxu0 0
    %329 = vmatprep.subr.bf16.mxu0 0
    %330 = vmatpush1.bf16.msra.mxu0 0
    %331 = vmatprep.subr.bf16.mxu0 0
    %332 = vmatpush1.bf16.msra.mxu0 0
    %333 = vmatprep.subr.bf16.mxu0 0
    %334 = vmatpush1.bf16.msra.mxu0 0
    %335 = vmatprep.subr.bf16.mxu0 0
    %336 = vmatpush1.bf16.msra.mxu0 0
    %337 = vmatprep.mubr.bf16.mxu0 0
    %338 = vmatmul.mubr.bf16.gmra.mrb[0].mxu0 %v252
    %v339 = vpop.f32.mrb[0].mxu0
    %v340 = vadd.f32 %v256, %v339
    %v341 = vpop.f32.mrb[0].mxu0
    %v342 = vpop.f32.mrb[0].mxu0
    %v343 = vadd.f32 %v256, %v342
    %v344 = vpop.f32.mrb[0].mxu0
    %345 = vdwg.mxu0
    %v346 = vtanh.pop %v340
    %v347 = vtanh.pop %v343
    %v348 = vmul.f32 %v346, %v50
    %v349 = vmul.f32 %v347, %v50
    %351 = vrot.lane.b32.xlu0 %v50, 4
    %v352 = vpop.permute.xlu0 %351
    %v354 = vmul.f32 %v340, %v352
    %v355 = vmul.f32 %v343, %v352
    %358 = vrot.lane.b32.xlu0 %v354, 124
    %v359 = vpop.permute.xlu0 %358
    %360 = vrot.lane.b32.xlu0 %v355, 124
    %v361 = vpop.permute.xlu0 %360
    %v364 = vsub.f32 %v43, %v359
    %v365 = vsub.f32 %v44, %v361
    %v366 = vmul.f32 %v50, %v364
    %v367 = vmul.f32 %v50, %v365
    %v368 = vsub.f32 0.0, %v348
    %v369 = vsub.f32 0.0, %v349
    %v370 = vmul.f32 %v368, 1.442695
    %v371 = vpow.pop %v370
    %v372 = vmul.f32 %v369, 1.442695
    %v373 = vpow.pop %v372
    %v374 = vmul.f32 %v366, %v371
    %v375 = vmul.f32 %v367, %v373
    %v376 = vadd.f32 %v374, %v51
    %v377 = vadd.f32 %v375, %v52
    %v378 = vmul.f32 %v50, %v376
    %v379 = vmul.f32 %v50, %v377
    %v380 = vld [vmem:[#allocation3 + $0xa0] sm:$0x3]
    %v381 = vld [vmem:[#allocation3 + $0xa8] sm:$0x1]
    %v382 = vunpack.c.l.bf16 %v381
    %v383 = vld [vmem:[#allocation3 + $0xb0] sm:$0xf]
    %v384 = vld [vmem:[#allocation3 + $0xb4] sm:$0xf]
    %v385 = vld [vmem:[#allocation3 + $0xb8] sm:$0xf]
    %v386 = vld [vmem:[#allocation3 + $0xbc] sm:$0xf]
    %v387 = vld [vmem:[#allocation3 + $0xc0] sm:$0xf]
    %v388 = vld [vmem:[#allocation3 + $0xc4] sm:$0xf]
    %v389 = vld [vmem:[#allocation3 + $0xc8] sm:$0xf]
    %v390 = vld [vmem:[#allocation3 + $0xcc] sm:$0xf]
    %v391 = vld [vmem:[#allocation3 + $0xd0] sm:$0xf]
    %v392 = vld [vmem:[#allocation3 + $0xd4] sm:$0xf]
    %v393 = vld [vmem:[#allocation3 + $0xd8] sm:$0xf]
    %v394 = vld [vmem:[#allocation3 + $0xdc] sm:$0xf]
    %v395 = vld [vmem:[#allocation3 + $0xe0] sm:$0xf]
    %v396 = vld [vmem:[#allocation3 + $0xe4] sm:$0xf]
    %v397 = vld [vmem:[#allocation3 + $0xe8] sm:$0xf]
    %v398 = vld [vmem:[#allocation3 + $0xec] sm:$0xf]
    %v399 = vld [vmem:[#allocation3 + $0xf0] sm:$0x1]
    %v400 = vunpack.c.l.bf16 %v399
    %v401 = vld [vmem:[#allocation3 + $0xf8] sm:$0xf]
    %v402 = vld [vmem:[#allocation3 + $0xfc] sm:$0xf]
    %v403 = vld [vmem:[#allocation3 + $0x100] sm:$0xf]
    %v404 = vld [vmem:[#allocation3 + $0x104] sm:$0xf]
    %v405 = vld [vmem:[#allocation3 + $0x108] sm:$0xf]
    %v406 = vld [vmem:[#allocation3 + $0x10c] sm:$0xf]
    %v407 = vld [vmem:[#allocation3 + $0x110] sm:$0xf]
    %v408 = vld [vmem:[#allocation3 + $0x114] sm:$0xf]
    %v409 = vld [vmem:[#allocation3 + $0x118] sm:$0xf]
    %v410 = vld [vmem:[#allocation3 + $0x11c] sm:$0xf]
    %v411 = vld [vmem:[#allocation3 + $0x120] sm:$0xf]
    %v412 = vld [vmem:[#allocation3 + $0x124] sm:$0xf]
    %v413 = vld [vmem:[#allocation3 + $0x128] sm:$0xf]
    %v414 = vld [vmem:[#allocation3 + $0x12c] sm:$0xf]
    %v415 = vld [vmem:[#allocation3 + $0x130] sm:$0xf]
    %v416 = vld [vmem:[#allocation3 + $0x134] sm:$0xf]
    %v417 = vld [vmem:[#allocation3 + $0x138] sm:$0x1]
    %v418 = vunpack.c.l.bf16 %v417
    %v419 = vpack.c.bf16 %v379, %v378
    %v420 = vlaneseq
    %v421 = vshrl.u32 %v420, 7
    %v422 = vsub.s32 0, %v421
    %v423 = vrot.slane %v382, %v422
    %v425 = vsel %vm97, %v419, 0
    %v428 = vsel %vm101, %v380, 0
    %430 = vmatprep.subr.bf16.mxu0 0
    %431 = vmatpush1.bf16.msra.mxu0 %v428
    %432 = vmatprep.subr.bf16.mxu0 0
    %433 = vmatpush1.bf16.msra.mxu0 0
    %434 = vmatprep.subr.bf16.mxu0 0
    %435 = vmatpush1.bf16.msra.mxu0 0
    %436 = vmatprep.subr.bf16.mxu0 0
    %437 = vmatpush1.bf16.msra.mxu0 0
    %438 = vmatprep.subr.bf16.mxu0 0
    %439 = vmatpush1.bf16.msra.mxu0 0
    %440 = vmatprep.subr.bf16.mxu0 0
    %441 = vmatpush1.bf16.msra.mxu0 0
    %442 = vmatprep.subr.bf16.mxu0 0
    %443 = vmatpush1.bf16.msra.mxu0 0
    %444 = vmatprep.subr.bf16.mxu0 0
    %445 = vmatpush1.bf16.msra.mxu0 0
    %446 = vmatprep.subr.bf16.mxu0 0
    %447 = vmatpush1.bf16.msra.mxu0 0
    %448 = vmatprep.subr.bf16.mxu0 0
    %449 = vmatpush1.bf16.msra.mxu0 0
    %450 = vmatprep.subr.bf16.mxu0 0
    %451 = vmatpush1.bf16.msra.mxu0 0
    %452 = vmatprep.subr.bf16.mxu0 0
    %453 = vmatpush1.bf16.msra.mxu0 0
    %454 = vmatprep.subr.bf16.mxu0 0
    %455 = vmatpush1.bf16.msra.mxu0 0
    %456 = vmatprep.subr.bf16.mxu0 0
    %457 = vmatpush1.bf16.msra.mxu0 0
    %458 = vmatprep.subr.bf16.mxu0 0
    %459 = vmatpush1.bf16.msra.mxu0 0
    %460 = vmatprep.subr.bf16.mxu0 0
    %461 = vmatpush1.bf16.msra.mxu0 0
    %462 = vmatprep.mubr.bf16.mxu0 0
    %463 = vmatmul.mubr.bf16.gmra.mrb[0].mxu0 %v425
    %v464 = vpop.f32.mrb[0].mxu0
    %v465 = vadd.f32 %v423, %v464
    %v466 = vpop.f32.mrb[0].mxu0
    %v467 = vpop.f32.mrb[0].mxu0
    %v468 = vadd.f32 %v423, %v467
    %v469 = vpop.f32.mrb[0].mxu0
    %470 = vdwg.mxu0
    %vm471 = vcmp.gt.f32.partialorder %v465, 0.0
    %vm472 = vcmp.gt.f32.partialorder %v468, 0.0
    %v473 = vmul.f32 %v465, 0.01
    %v474 = vmul.f32 %v468, 0.01
    %v475 = vsel %vm471, %v465, %v473
    %v476 = vsel %vm472, %v468, %v474
    %v477 = vpack.c.bf16 %v476, %v475
    %v478 = vlaneseq
    %v479 = vshrl.u32 %v478, 7
    %v480 = vsub.s32 0, %v479
    %v481 = vrot.slane %v400, %v480
    %v498 = vunpack.c.l.b16 %v383
    %v499 = vunpack.c.l.b16 %v384
    %v500 = vunpack.c.l.b16 %v385
    %v501 = vunpack.c.l.b16 %v386
    %v502 = vunpack.c.l.b16 %v387
    %v503 = vunpack.c.l.b16 %v388
    %v504 = vunpack.c.l.b16 %v389
    %v505 = vunpack.c.l.b16 %v390
    %v506 = vunpack.c.l.b16 %v391
    %v507 = vunpack.c.l.b16 %v392
    %v508 = vunpack.c.l.b16 %v393
    %v509 = vunpack.c.l.b16 %v394
    %v510 = vunpack.c.l.b16 %v395
    %v511 = vunpack.c.l.b16 %v396
    %v512 = vunpack.c.l.b16 %v397
    %v513 = vunpack.c.l.b16 %v398
    %v514 = vpack.c.b16 %v499, %v498
    %v515 = vpack.c.b16 %v501, %v500
    %v516 = vpack.c.b16 %v503, %v502
    %v517 = vpack.c.b16 %v505, %v504
    %v518 = vpack.c.b16 %v507, %v506
    %v519 = vpack.c.b16 %v509, %v508
    %v520 = vpack.c.b16 %v511, %v510
    %v521 = vpack.c.b16 %v513, %v512
    %530 = vmatprep.subr.bf16.mxu0 0
    %531 = vmatpush1.bf16.msra.mxu0 %v514
    %532 = vmatprep.subr.bf16.mxu0 0
    %533 = vmatpush1.bf16.msra.mxu0 %v515
    %534 = vmatprep.subr.bf16.mxu0 0
    %535 = vmatpush1.bf16.msra.mxu0 %v516
    %536 = vmatprep.subr.bf16.mxu0 0
    %537 = vmatpush1.bf16.msra.mxu0 %v517
    %538 = vmatprep.subr.bf16.mxu0 0
    %539 = vmatpush1.bf16.msra.mxu0 %v518
    %540 = vmatprep.subr.bf16.mxu0 0
    %541 = vmatpush1.bf16.msra.mxu0 %v519
    %542 = vmatprep.subr.bf16.mxu0 0
    %543 = vmatpush1.bf16.msra.mxu0 %v520
    %544 = vmatprep.subr.bf16.mxu0 0
    %545 = vmatpush1.bf16.msra.mxu0 %v521
    %546 = vmatprep.subr.bf16.mxu0 0
    %547 = vmatpush1.bf16.msra.mxu0 0
    %548 = vmatprep.subr.bf16.mxu0 0
    %549 = vmatpush1.bf16.msra.mxu0 0
    %550 = vmatprep.subr.bf16.mxu0 0
    %551 = vmatpush1.bf16.msra.mxu0 0
    %552 = vmatprep.subr.bf16.mxu0 0
    %553 = vmatpush1.bf16.msra.mxu0 0
    %554 = vmatprep.subr.bf16.mxu0 0
    %555 = vmatpush1.bf16.msra.mxu0 0
    %556 = vmatprep.subr.bf16.mxu0 0
    %557 = vmatpush1.bf16.msra.mxu0 0
    %558 = vmatprep.subr.bf16.mxu0 0
    %559 = vmatpush1.bf16.msra.mxu0 0
    %560 = vmatprep.subr.bf16.mxu0 0
    %561 = vmatpush1.bf16.msra.mxu0 0
    %562 = vmatprep.mubr.bf16.mxu0 0
    %563 = vmatmul.mubr.bf16.gmra.mrb[0].mxu0 %v477
    %v564 = vpop.f32.mrb[0].mxu0
    %v565 = vadd.f32 %v481, %v564
    %v566 = vpop.f32.mrb[0].mxu0
    %v567 = vpop.f32.mrb[0].mxu0
    %v568 = vadd.f32 %v481, %v567
    %v569 = vpop.f32.mrb[0].mxu0
    %570 = vdwg.mxu0
    %vm571 = vcmp.gt.f32.partialorder %v565, 0.0
    %vm572 = vcmp.gt.f32.partialorder %v568, 0.0
    %v573 = vmul.f32 %v565, 0.01
    %v574 = vmul.f32 %v568, 0.01
    %v575 = vsel %vm571, %v565, %v573
    %v576 = vsel %vm572, %v568, %v574
    %v577 = vpack.c.bf16 %v576, %v575
    %v578 = vlaneseq
    %v579 = vshrl.u32 %v578, 7
    %v580 = vsub.s32 0, %v579
    %v581 = vrot.slane %v418, %v580
    %v598 = vunpack.c.l.b16 %v401
    %v599 = vunpack.c.l.b16 %v402
    %v600 = vunpack.c.l.b16 %v403
    %v601 = vunpack.c.l.b16 %v404
    %v602 = vunpack.c.l.b16 %v405
    %v603 = vunpack.c.l.b16 %v406
    %v604 = vunpack.c.l.b16 %v407
    %v605 = vunpack.c.l.b16 %v408
    %v606 = vunpack.c.l.b16 %v409
    %v607 = vunpack.c.l.b16 %v410
    %v608 = vunpack.c.l.b16 %v411
    %v609 = vunpack.c.l.b16 %v412
    %v610 = vunpack.c.l.b16 %v413
    %v611 = vunpack.c.l.b16 %v414
    %v612 = vunpack.c.l.b16 %v415
    %v613 = vunpack.c.l.b16 %v416
    %v614 = vpack.c.b16 %v599, %v598
    %v615 = vpack.c.b16 %v601, %v600
    %v616 = vpack.c.b16 %v603, %v602
    %v617 = vpack.c.b16 %v605, %v604
    %v618 = vpack.c.b16 %v607, %v606
    %v619 = vpack.c.b16 %v609, %v608
    %v620 = vpack.c.b16 %v611, %v610
    %v621 = vpack.c.b16 %v613, %v612
    %630 = vmatprep.subr.bf16.mxu0 0
    %631 = vmatpush1.bf16.msra.mxu0 %v614
    %632 = vmatprep.subr.bf16.mxu0 0
    %633 = vmatpush1.bf16.msra.mxu0 %v615
    %634 = vmatprep.subr.bf16.mxu0 0
    %635 = vmatpush1.bf16.msra.mxu0 %v616
    %636 = vmatprep.subr.bf16.mxu0 0
    %637 = vmatpush1.bf16.msra.mxu0 %v617
    %638 = vmatprep.subr.bf16.mxu0 0
    %639 = vmatpush1.bf16.msra.mxu0 %v618
    %640 = vmatprep.subr.bf16.mxu0 0
    %641 = vmatpush1.bf16.msra.mxu0 %v619
    %642 = vmatprep.subr.bf16.mxu0 0
    %643 = vmatpush1.bf16.msra.mxu0 %v620
    %644 = vmatprep.subr.bf16.mxu0 0
    %645 = vmatpush1.bf16.msra.mxu0 %v621
    %646 = vmatprep.subr.bf16.mxu0 0
    %647 = vmatpush1.bf16.msra.mxu0 0
    %648 = vmatprep.subr.bf16.mxu0 0
    %649 = vmatpush1.bf16.msra.mxu0 0
    %650 = vmatprep.subr.bf16.mxu0 0
    %651 = vmatpush1.bf16.msra.mxu0 0
    %652 = vmatprep.subr.bf16.mxu0 0
    %653 = vmatpush1.bf16.msra.mxu0 0
    %654 = vmatprep.subr.bf16.mxu0 0
    %655 = vmatpush1.bf16.msra.mxu0 0
    %656 = vmatprep.subr.bf16.mxu0 0
    %657 = vmatpush1.bf16.msra.mxu0 0
    %658 = vmatprep.subr.bf16.mxu0 0
    %659 = vmatpush1.bf16.msra.mxu0 0
    %660 = vmatprep.subr.bf16.mxu0 0
    %661 = vmatpush1.bf16.msra.mxu0 0
    %662 = vmatprep.mubr.bf16.mxu0 0
    %663 = vmatmul.mubr.bf16.gmra.mrb[0].mxu0 %v577
    %v664 = vpop.f32.mrb[0].mxu0
    %v665 = vadd.f32 %v581, %v664
    %v666 = vpop.f32.mrb[0].mxu0
    %v667 = vpop.f32.mrb[0].mxu0
    %v668 = vadd.f32 %v581, %v667
    %v669 = vpop.f32.mrb[0].mxu0
    %670 = vdwg.mxu0
    %v671 = vtanh.pop %v665
    %v672 = vtanh.pop %v668
    %v673 = vmul.f32 %v671, %v49
    %v674 = vmul.f32 %v672, %v49
    %676 = vrot.lane.b32.xlu0 %v49, 4
    %v677 = vpop.permute.xlu0 %676
    %v679 = vmul.f32 %v665, %v677
    %v680 = vmul.f32 %v668, %v677
    %683 = vrot.lane.b32.xlu0 %v679, 124
    %v684 = vpop.permute.xlu0 %683
    %685 = vrot.lane.b32.xlu0 %v680, 124
    %v686 = vpop.permute.xlu0 %685
    %v689 = vsub.f32 %v376, %v684
    %v690 = vsub.f32 %v377, %v686
    %v691 = vmul.f32 %v49, %v689
    %v692 = vmul.f32 %v49, %v690
    %v693 = vsub.f32 0.0, %v673
    %v694 = vsub.f32 0.0, %v674
    %v695 = vmul.f32 %v693, 1.442695
    %v696 = vpow.pop %v695
    %v697 = vmul.f32 %v694, 1.442695
    %v698 = vpow.pop %v697
    %v699 = vmul.f32 %v691, %v696
    %v700 = vmul.f32 %v692, %v698
    %v701 = vadd.f32 %v699, %v378
    %v702 = vadd.f32 %v700, %v379
    %v703 = vmul.f32 %v49, %v701
    %v704 = vmul.f32 %v49, %v702
    %v705 = vld [vmem:[#allocation3] sm:$0x3]
    %v706 = vld [vmem:[#allocation3 + $0x8] sm:$0x1]
    %v707 = vunpack.c.l.bf16 %v706
    %v708 = vld [vmem:[#allocation3 + $0x10] sm:$0xf]
    %v709 = vld [vmem:[#allocation3 + $0x14] sm:$0xf]
    %v710 = vld [vmem:[#allocation3 + $0x18] sm:$0xf]
    %v711 = vld [vmem:[#allocation3 + $0x1c] sm:$0xf]
    %v712 = vld [vmem:[#allocation3 + $0x20] sm:$0xf]
    %v713 = vld [vmem:[#allocation3 + $0x24] sm:$0xf]
    %v714 = vld [vmem:[#allocation3 + $0x28] sm:$0xf]
    %v715 = vld [vmem:[#allocation3 + $0x2c] sm:$0xf]
    %v716 = vld [vmem:[#allocation3 + $0x30] sm:$0xf]
    %v717 = vld [vmem:[#allocation3 + $0x34] sm:$0xf]
    %v718 = vld [vmem:[#allocation3 + $0x38] sm:$0xf]
    %v719 = vld [vmem:[#allocation3 + $0x3c] sm:$0xf]
    %v720 = vld [vmem:[#allocation3 + $0x40] sm:$0xf]
    %v721 = vld [vmem:[#allocation3 + $0x44] sm:$0xf]
    %v722 = vld [vmem:[#allocation3 + $0x48] sm:$0xf]
    %v723 = vld [vmem:[#allocation3 + $0x4c] sm:$0xf]
    %v724 = vld [vmem:[#allocation3 + $0x50] sm:$0x1]
    %v725 = vunpack.c.l.bf16 %v724
    %v726 = vld [vmem:[#allocation3 + $0x58] sm:$0xf]
    %v727 = vld [vmem:[#allocation3 + $0x5c] sm:$0xf]
    %v728 = vld [vmem:[#allocation3 + $0x60] sm:$0xf]
    %v729 = vld [vmem:[#allocation3 + $0x64] sm:$0xf]
    %v730 = vld [vmem:[#allocation3 + $0x68] sm:$0xf]
    %v731 = vld [vmem:[#allocation3 + $0x6c] sm:$0xf]
    %v732 = vld [vmem:[#allocation3 + $0x70] sm:$0xf]
    %v733 = vld [vmem:[#allocation3 + $0x74] sm:$0xf]
    %v734 = vld [vmem:[#allocation3 + $0x78] sm:$0xf]
    %v735 = vld [vmem:[#allocation3 + $0x7c] sm:$0xf]
    %v736 = vld [vmem:[#allocation3 + $0x80] sm:$0xf]
    %v737 = vld [vmem:[#allocation3 + $0x84] sm:$0xf]
    %v738 = vld [vmem:[#allocation3 + $0x88] sm:$0xf]
    %v739 = vld [vmem:[#allocation3 + $0x8c] sm:$0xf]
    %v740 = vld [vmem:[#allocation3 + $0x90] sm:$0xf]
    %v741 = vld [vmem:[#allocation3 + $0x94] sm:$0xf]
    %v742 = vld [vmem:[#allocation3 + $0x98] sm:$0x1]
    %v743 = vunpack.c.l.bf16 %v742
    %v744 = vpack.c.bf16 %v704, %v703
    %v745 = vlaneseq
    %v746 = vshrl.u32 %v745, 7
    %v747 = vsub.s32 0, %v746
    %v748 = vrot.slane %v707, %v747
    %v750 = vsel %vm97, %v744, 0
    %v753 = vsel %vm101, %v705, 0
    %755 = vmatprep.subr.bf16.mxu0 0
    %756 = vmatpush1.bf16.msra.mxu0 %v753
    %757 = vmatprep.subr.bf16.mxu0 0
    %758 = vmatpush1.bf16.msra.mxu0 0
    %759 = vmatprep.subr.bf16.mxu0 0
    %760 = vmatpush1.bf16.msra.mxu0 0
    %761 = vmatprep.subr.bf16.mxu0 0
    %762 = vmatpush1.bf16.msra.mxu0 0
    %763 = vmatprep.subr.bf16.mxu0 0
    %764 = vmatpush1.bf16.msra.mxu0 0
    %765 = vmatprep.subr.bf16.mxu0 0
    %766 = vmatpush1.bf16.msra.mxu0 0
    %767 = vmatprep.subr.bf16.mxu0 0
    %768 = vmatpush1.bf16.msra.mxu0 0
    %769 = vmatprep.subr.bf16.mxu0 0
    %770 = vmatpush1.bf16.msra.mxu0 0
    %771 = vmatprep.subr.bf16.mxu0 0
    %772 = vmatpush1.bf16.msra.mxu0 0
    %773 = vmatprep.subr.bf16.mxu0 0
    %774 = vmatpush1.bf16.msra.mxu0 0
    %775 = vmatprep.subr.bf16.mxu0 0
    %776 = vmatpush1.bf16.msra.mxu0 0
    %777 = vmatprep.subr.bf16.mxu0 0
    %778 = vmatpush1.bf16.msra.mxu0 0
    %779 = vmatprep.subr.bf16.mxu0 0
    %780 = vmatpush1.bf16.msra.mxu0 0
    %781 = vmatprep.subr.bf16.mxu0 0
    %782 = vmatpush1.bf16.msra.mxu0 0
    %783 = vmatprep.subr.bf16.mxu0 0
    %784 = vmatpush1.bf16.msra.mxu0 0
    %785 = vmatprep.subr.bf16.mxu0 0
    %786 = vmatpush1.bf16.msra.mxu0 0
    %787 = vmatprep.mubr.bf16.mxu0 0
    %788 = vmatmul.mubr.bf16.gmra.mrb[0].mxu0 %v750
    %v789 = vpop.f32.mrb[0].mxu0
    %v790 = vadd.f32 %v748, %v789
    %v791 = vpop.f32.mrb[0].mxu0
    %v792 = vpop.f32.mrb[0].mxu0
    %v793 = vadd.f32 %v748, %v792
    %v794 = vpop.f32.mrb[0].mxu0
    %795 = vdwg.mxu0
    %vm796 = vcmp.gt.f32.partialorder %v790, 0.0
    %vm797 = vcmp.gt.f32.partialorder %v793, 0.0
    %v798 = vmul.f32 %v790, 0.01
    %v799 = vmul.f32 %v793, 0.01
    %v800 = vsel %vm796, %v790, %v798
    %v801 = vsel %vm797, %v793, %v799
    %v802 = vpack.c.bf16 %v801, %v800
    %v803 = vlaneseq
    %v804 = vshrl.u32 %v803, 7
    %v805 = vsub.s32 0, %v804
    %v806 = vrot.slane %v725, %v805
    %v823 = vunpack.c.l.b16 %v708
    %v824 = vunpack.c.l.b16 %v709
    %v825 = vunpack.c.l.b16 %v710
    %v826 = vunpack.c.l.b16 %v711
    %v827 = vunpack.c.l.b16 %v712
    %v828 = vunpack.c.l.b16 %v713
    %v829 = vunpack.c.l.b16 %v714
    %v830 = vunpack.c.l.b16 %v715
    %v831 = vunpack.c.l.b16 %v716
    %v832 = vunpack.c.l.b16 %v717
    %v833 = vunpack.c.l.b16 %v718
    %v834 = vunpack.c.l.b16 %v719
    %v835 = vunpack.c.l.b16 %v720
    %v836 = vunpack.c.l.b16 %v721
    %v837 = vunpack.c.l.b16 %v722
    %v838 = vunpack.c.l.b16 %v723
    %v839 = vpack.c.b16 %v824, %v823
    %v840 = vpack.c.b16 %v826, %v825
    %v841 = vpack.c.b16 %v828, %v827
    %v842 = vpack.c.b16 %v830, %v829
    %v843 = vpack.c.b16 %v832, %v831
    %v844 = vpack.c.b16 %v834, %v833
    %v845 = vpack.c.b16 %v836, %v835
    %v846 = vpack.c.b16 %v838, %v837
    %855 = vmatprep.subr.bf16.mxu0 0
    %856 = vmatpush1.bf16.msra.mxu0 %v839
    %857 = vmatprep.subr.bf16.mxu0 0
    %858 = vmatpush1.bf16.msra.mxu0 %v840
    %859 = vmatprep.subr.bf16.mxu0 0
    %860 = vmatpush1.bf16.msra.mxu0 %v841
    %861 = vmatprep.subr.bf16.mxu0 0
    %862 = vmatpush1.bf16.msra.mxu0 %v842
    %863 = vmatprep.subr.bf16.mxu0 0
    %864 = vmatpush1.bf16.msra.mxu0 %v843
    %865 = vmatprep.subr.bf16.mxu0 0
    %866 = vmatpush1.bf16.msra.mxu0 %v844
    %867 = vmatprep.subr.bf16.mxu0 0
    %868 = vmatpush1.bf16.msra.mxu0 %v845
    %869 = vmatprep.subr.bf16.mxu0 0
    %870 = vmatpush1.bf16.msra.mxu0 %v846
    %871 = vmatprep.subr.bf16.mxu0 0
    %872 = vmatpush1.bf16.msra.mxu0 0
    %873 = vmatprep.subr.bf16.mxu0 0
    %874 = vmatpush1.bf16.msra.mxu0 0
    %875 = vmatprep.subr.bf16.mxu0 0
    %876 = vmatpush1.bf16.msra.mxu0 0
    %877 = vmatprep.subr.bf16.mxu0 0
    %878 = vmatpush1.bf16.msra.mxu0 0
    %879 = vmatprep.subr.bf16.mxu0 0
    %880 = vmatpush1.bf16.msra.mxu0 0
    %881 = vmatprep.subr.bf16.mxu0 0
    %882 = vmatpush1.bf16.msra.mxu0 0
    %883 = vmatprep.subr.bf16.mxu0 0
    %884 = vmatpush1.bf16.msra.mxu0 0
    %885 = vmatprep.subr.bf16.mxu0 0
    %886 = vmatpush1.bf16.msra.mxu0 0
    %887 = vmatprep.mubr.bf16.mxu0 0
    %888 = vmatmul.mubr.bf16.gmra.mrb[0].mxu0 %v802
    %v889 = vpop.f32.mrb[0].mxu0
    %v890 = vadd.f32 %v806, %v889
    %v891 = vpop.f32.mrb[0].mxu0
    %v892 = vpop.f32.mrb[0].mxu0
    %v893 = vadd.f32 %v806, %v892
    %v894 = vpop.f32.mrb[0].mxu0
    %895 = vdwg.mxu0
    %vm896 = vcmp.gt.f32.partialorder %v890, 0.0
    %vm897 = vcmp.gt.f32.partialorder %v893, 0.0
    %v898 = vmul.f32 %v890, 0.01
    %v899 = vmul.f32 %v893, 0.01
    %v900 = vsel %vm896, %v890, %v898
    %v901 = vsel %vm897, %v893, %v899
    %v902 = vpack.c.bf16 %v901, %v900
    %v903 = vlaneseq
    %v904 = vshrl.u32 %v903, 7
    %v905 = vsub.s32 0, %v904
    %v906 = vrot.slane %v743, %v905
    %v923 = vunpack.c.l.b16 %v726
    %v924 = vunpack.c.l.b16 %v727
    %v925 = vunpack.c.l.b16 %v728
    %v926 = vunpack.c.l.b16 %v729
    %v927 = vunpack.c.l.b16 %v730
    %v928 = vunpack.c.l.b16 %v731
    %v929 = vunpack.c.l.b16 %v732
    %v930 = vunpack.c.l.b16 %v733
    %v931 = vunpack.c.l.b16 %v734
    %v932 = vunpack.c.l.b16 %v735
    %v933 = vunpack.c.l.b16 %v736
    %v934 = vunpack.c.l.b16 %v737
    %v935 = vunpack.c.l.b16 %v738
    %v936 = vunpack.c.l.b16 %v739
    %v937 = vunpack.c.l.b16 %v740
    %v938 = vunpack.c.l.b16 %v741
    %v939 = vpack.c.b16 %v924, %v923
    %v940 = vpack.c.b16 %v926, %v925
    %v941 = vpack.c.b16 %v928, %v927
    %v942 = vpack.c.b16 %v930, %v929
    %v943 = vpack.c.b16 %v932, %v931
    %v944 = vpack.c.b16 %v934, %v933
    %v945 = vpack.c.b16 %v936, %v935
    %v946 = vpack.c.b16 %v938, %v937
    %955 = vmatprep.subr.bf16.mxu0 0
    %956 = vmatpush1.bf16.msra.mxu0 %v939
    %957 = vmatprep.subr.bf16.mxu0 0
    %958 = vmatpush1.bf16.msra.mxu0 %v940
    %959 = vmatprep.subr.bf16.mxu0 0
    %960 = vmatpush1.bf16.msra.mxu0 %v941
    %961 = vmatprep.subr.bf16.mxu0 0
    %962 = vmatpush1.bf16.msra.mxu0 %v942
    %963 = vmatprep.subr.bf16.mxu0 0
    %964 = vmatpush1.bf16.msra.mxu0 %v943
    %965 = vmatprep.subr.bf16.mxu0 0
    %966 = vmatpush1.bf16.msra.mxu0 %v944
    %967 = vmatprep.subr.bf16.mxu0 0
    %968 = vmatpush1.bf16.msra.mxu0 %v945
    %969 = vmatprep.subr.bf16.mxu0 0
    %970 = vmatpush1.bf16.msra.mxu0 %v946
    %971 = vmatprep.subr.bf16.mxu0 0
    %972 = vmatpush1.bf16.msra.mxu0 0
    %973 = vmatprep.subr.bf16.mxu0 0
    %974 = vmatpush1.bf16.msra.mxu0 0
    %975 = vmatprep.subr.bf16.mxu0 0
    %976 = vmatpush1.bf16.msra.mxu0 0
    %977 = vmatprep.subr.bf16.mxu0 0
    %978 = vmatpush1.bf16.msra.mxu0 0
    %979 = vmatprep.subr.bf16.mxu0 0
    %980 = vmatpush1.bf16.msra.mxu0 0
    %981 = vmatprep.subr.bf16.mxu0 0
    %982 = vmatpush1.bf16.msra.mxu0 0
    %983 = vmatprep.subr.bf16.mxu0 0
    %984 = vmatpush1.bf16.msra.mxu0 0
    %985 = vmatprep.subr.bf16.mxu0 0
    %986 = vmatpush1.bf16.msra.mxu0 0
    %987 = vmatprep.mubr.bf16.mxu0 0
    %988 = vmatmul.mubr.bf16.gmra.mrb[0].mxu0 %v902
    %v989 = vpop.f32.mrb[0].mxu0
    %v990 = vadd.f32 %v906, %v989
    %v991 = vpop.f32.mrb[0].mxu0
    %v992 = vpop.f32.mrb[0].mxu0
    %v993 = vadd.f32 %v906, %v992
    %v994 = vpop.f32.mrb[0].mxu0
    %995 = vdwg.mxu0
    %v996 = vtanh.pop %v990
    %v997 = vtanh.pop %v993
    %v998 = vmul.f32 %v996, %v50
    %v999 = vmul.f32 %v997, %v50
    %v1000 = vmul.f32 %v990, %v352
    %v1001 = vmul.f32 %v993, %v352
    %1004 = vrot.lane.b32.xlu0 %v1000, 124
    %v1005 = vpop.permute.xlu0 %1004
    %1006 = vrot.lane.b32.xlu0 %v1001, 124
    %v1007 = vpop.permute.xlu0 %1006
    %v1010 = vsub.f32 %v701, %v1005
    %v1011 = vsub.f32 %v702, %v1007
    %v1012 = vmul.f32 %v50, %v1010
    %v1013 = vmul.f32 %v50, %v1011
    %v1014 = vsub.f32 0.0, %v998
    %v1015 = vsub.f32 0.0, %v999
    %v1016 = vmul.f32 %v1014, 1.442695
    %v1017 = vpow.pop %v1016
    %v1018 = vmul.f32 %v1015, 1.442695
    %v1019 = vpow.pop %v1018
    %v1020 = vmul.f32 %v1012, %v1017
    %v1021 = vmul.f32 %v1013, %v1019
    %v1022 = vadd.f32 %v1020, %v703
    %v1023 = vadd.f32 %v1021, %v704
    %vm1024 = vcmp.ge.s32.totalorder %v46, 1
    %v1025 = vsel %vm1024, 1, 0
    %v1026 = vcvt.s32.f32 %v1025
    %v1027 = vsub.f32 1.0, %v1026
    %v1028 = vmul.f32 %v1027, %v1022
    %v1029 = vld [vmem:[#allocation5 + $0xa0] sm:$0x1]
    %v1030 = vld [vmem:[#allocation5 + $0xa8] sm:$0x1]
    %v1031 = vunpack.c.l.bf16 %v1030
    %v1032 = vld [vmem:[#allocation5 + $0xb0] sm:$0xf]
    %v1033 = vld [vmem:[#allocation5 + $0xb4] sm:$0xf]
    %v1034 = vld [vmem:[#allocation5 + $0xb8] sm:$0xf]
    %v1035 = vld [vmem:[#allocation5 + $0xbc] sm:$0xf]
    %v1036 = vld [vmem:[#allocation5 + $0xc0] sm:$0xf]
    %v1037 = vld [vmem:[#allocation5 + $0xc4] sm:$0xf]
    %v1038 = vld [vmem:[#allocation5 + $0xc8] sm:$0xf]
    %v1039 = vld [vmem:[#allocation5 + $0xcc] sm:$0xf]
    %v1040 = vld [vmem:[#allocation5 + $0xd0] sm:$0xf]
    %v1041 = vld [vmem:[#allocation5 + $0xd4] sm:$0xf]
    %v1042 = vld [vmem:[#allocation5 + $0xd8] sm:$0xf]
    %v1043 = vld [vmem:[#allocation5 + $0xdc] sm:$0xf]
    %v1044 = vld [vmem:[#allocation5 + $0xe0] sm:$0xf]
    %v1045 = vld [vmem:[#allocation5 + $0xe4] sm:$0xf]
    %v1046 = vld [vmem:[#allocation5 + $0xe8] sm:$0xf]
    %v1047 = vld [vmem:[#allocation5 + $0xec] sm:$0xf]
    %v1048 = vld [vmem:[#allocation5 + $0xf0] sm:$0x1]
    %v1049 = vunpack.c.l.bf16 %v1048
    %v1050 = vld [vmem:[#allocation5 + $0xf8] sm:$0xf]
    %v1051 = vld [vmem:[#allocation5 + $0xfc] sm:$0xf]
    %v1052 = vld [vmem:[#allocation5 + $0x100] sm:$0xf]
    %v1053 = vld [vmem:[#allocation5 + $0x104] sm:$0xf]
    %v1054 = vld [vmem:[#allocation5 + $0x108] sm:$0xf]
    %v1055 = vld [vmem:[#allocation5 + $0x10c] sm:$0xf]
    %v1056 = vld [vmem:[#allocation5 + $0x110] sm:$0xf]
    %v1057 = vld [vmem:[#allocation5 + $0x114] sm:$0xf]
    %v1058 = vld [vmem:[#allocation5 + $0x118] sm:$0xf]
    %v1059 = vld [vmem:[#allocation5 + $0x11c] sm:$0xf]
    %v1060 = vld [vmem:[#allocation5 + $0x120] sm:$0xf]
    %v1061 = vld [vmem:[#allocation5 + $0x124] sm:$0xf]
    %v1062 = vld [vmem:[#allocation5 + $0x128] sm:$0xf]
    %v1063 = vld [vmem:[#allocation5 + $0x12c] sm:$0xf]
    %v1064 = vld [vmem:[#allocation5 + $0x130] sm:$0xf]
    %v1065 = vld [vmem:[#allocation5 + $0x134] sm:$0xf]
    %v1066 = vld [vmem:[#allocation5 + $0x138] sm:$0x1]
    %v1067 = vunpack.c.l.bf16 %v1066
    %v1068 = vpack.c.bf16 %v1028, %v1028
    %v1069 = vlaneseq
    %v1070 = vshrl.u32 %v1069, 7
    %v1071 = vsub.s32 0, %v1070
    %v1072 = vrot.slane %v1031, %v1071
    %vm1073 = vcmask 15360
    %v1075 = vsel %vm1073, %v1068, 0
    %vm1077 = vcmask 1040384
    %v1079 = vsel %vm1077, %v1029, 0
    %1081 = vmatprep.subr.bf16.mxu0 0
    %1082 = vmatpush1.bf16.msra.mxu0 %v1079
    %1083 = vmatprep.subr.bf16.mxu0 0
    %1084 = vmatpush1.bf16.msra.mxu0 0
    %1085 = vmatprep.subr.bf16.mxu0 0
    %1086 = vmatpush1.bf16.msra.mxu0 0
    %1087 = vmatprep.subr.bf16.mxu0 0
    %1088 = vmatpush1.bf16.msra.mxu0 0
    %1089 = vmatprep.subr.bf16.mxu0 0
    %1090 = vmatpush1.bf16.msra.mxu0 0
    %1091 = vmatprep.subr.bf16.mxu0 0
    %1092 = vmatpush1.bf16.msra.mxu0 0
    %1093 = vmatprep.subr.bf16.mxu0 0
    %1094 = vmatpush1.bf16.msra.mxu0 0
    %1095 = vmatprep.subr.bf16.mxu0 0
    %1096 = vmatpush1.bf16.msra.mxu0 0
    %1097 = vmatprep.subr.bf16.mxu0 0
    %1098 = vmatpush1.bf16.msra.mxu0 0
    %1099 = vmatprep.subr.bf16.mxu0 0
    %1100 = vmatpush1.bf16.msra.mxu0 0
    %1101 = vmatprep.subr.bf16.mxu0 0
    %1102 = vmatpush1.bf16.msra.mxu0 0
    %1103 = vmatprep.subr.bf16.mxu0 0
    %1104 = vmatpush1.bf16.msra.mxu0 0
    %1105 = vmatprep.subr.bf16.mxu0 0
    %1106 = vmatpush1.bf16.msra.mxu0 0
    %1107 = vmatprep.subr.bf16.mxu0 0
    %1108 = vmatpush1.bf16.msra.mxu0 0
    %1109 = vmatprep.subr.bf16.mxu0 0
    %1110 = vmatpush1.bf16.msra.mxu0 0
    %1111 = vmatprep.subr.bf16.mxu0 0
    %1112 = vmatpush1.bf16.msra.mxu0 0
    %1113 = vmatprep.mubr.bf16.mxu0 0
    %1114 = vmatmul.mubr.bf16.gmra.mrb[0].mxu0 %v1075
    %v1115 = vpop.f32.mrb[0].mxu0
    %v1116 = vadd.f32 %v1072, %v1115
    %v1117 = vpop.f32.mrb[0].mxu0
    %v1118 = vpop.f32.mrb[0].mxu0
    %v1119 = vpop.f32.mrb[0].mxu0
    %1120 = vdwg.mxu0
    %vm1121 = vcmp.gt.f32.partialorder %v1116, 0.0
    %v1122 = vmul.f32 %v1116, 0.01
    %v1123 = vsel %vm1121, %v1116, %v1122
    %v1124 = vpack.c.bf16 %v1123, %v1123
    %v1125 = vlaneseq
    %v1126 = vshrl.u32 %v1125, 7
    %v1127 = vsub.s32 0, %v1126
    %v1128 = vrot.slane %v1049, %v1127
    %v1145 = vunpack.c.l.b16 %v1032
    %v1146 = vunpack.c.l.b16 %v1033
    %v1147 = vunpack.c.l.b16 %v1034
    %v1148 = vunpack.c.l.b16 %v1035
    %v1149 = vunpack.c.l.b16 %v1036
    %v1150 = vunpack.c.l.b16 %v1037
    %v1151 = vunpack.c.l.b16 %v1038
    %v1152 = vunpack.c.l.b16 %v1039
    %v1153 = vunpack.c.l.b16 %v1040
    %v1154 = vunpack.c.l.b16 %v1041
    %v1155 = vunpack.c.l.b16 %v1042
    %v1156 = vunpack.c.l.b16 %v1043
    %v1157 = vunpack.c.l.b16 %v1044
    %v1158 = vunpack.c.l.b16 %v1045
    %v1159 = vunpack.c.l.b16 %v1046
    %v1160 = vunpack.c.l.b16 %v1047
    %v1161 = vpack.c.b16 %v1146, %v1145
    %v1162 = vpack.c.b16 %v1148, %v1147
    %v1163 = vpack.c.b16 %v1150, %v1149
    %v1164 = vpack.c.b16 %v1152, %v1151
    %v1165 = vpack.c.b16 %v1154, %v1153
    %v1166 = vpack.c.b16 %v1156, %v1155
    %v1167 = vpack.c.b16 %v1158, %v1157
    %v1168 = vpack.c.b16 %v1160, %v1159
    %1177 = vmatprep.subr.bf16.mxu0 0
    %1178 = vmatpush1.bf16.msra.mxu0 %v1161
    %1179 = vmatprep.subr.bf16.mxu0 0
    %1180 = vmatpush1.bf16.msra.mxu0 %v1162
    %1181 = vmatprep.subr.bf16.mxu0 0
    %1182 = vmatpush1.bf16.msra.mxu0 %v1163
    %1183 = vmatprep.subr.bf16.mxu0 0
    %1184 = vmatpush1.bf16.msra.mxu0 %v1164
    %1185 = vmatprep.subr.bf16.mxu0 0
    %1186 = vmatpush1.bf16.msra.mxu0 %v1165
    %1187 = vmatprep.subr.bf16.mxu0 0
    %1188 = vmatpush1.bf16.msra.mxu0 %v1166
    %1189 = vmatprep.subr.bf16.mxu0 0
    %1190 = vmatpush1.bf16.msra.mxu0 %v1167
    %1191 = vmatprep.subr.bf16.mxu0 0
    %1192 = vmatpush1.bf16.msra.mxu0 %v1168
    %1193 = vmatprep.subr.bf16.mxu0 0
    %1194 = vmatpush1.bf16.msra.mxu0 0
    %1195 = vmatprep.subr.bf16.mxu0 0
    %1196 = vmatpush1.bf16.msra.mxu0 0
    %1197 = vmatprep.subr.bf16.mxu0 0
    %1198 = vmatpush1.bf16.msra.mxu0 0
    %1199 = vmatprep.subr.bf16.mxu0 0
    %1200 = vmatpush1.bf16.msra.mxu0 0
    %1201 = vmatprep.subr.bf16.mxu0 0
    %1202 = vmatpush1.bf16.msra.mxu0 0
    %1203 = vmatprep.subr.bf16.mxu0 0
    %1204 = vmatpush1.bf16.msra.mxu0 0
    %1205 = vmatprep.subr.bf16.mxu0 0
    %1206 = vmatpush1.bf16.msra.mxu0 0
    %1207 = vmatprep.subr.bf16.mxu0 0
    %1208 = vmatpush1.bf16.msra.mxu0 0
    %1209 = vmatprep.mubr.bf16.mxu0 0
    %1210 = vmatmul.mubr.bf16.gmra.mrb[0].mxu0 %v1124
    %v1211 = vpop.f32.mrb[0].mxu0
    %v1212 = vadd.f32 %v1128, %v1211
    %v1213 = vpop.f32.mrb[0].mxu0
    %v1214 = vpop.f32.mrb[0].mxu0
    %v1215 = vpop.f32.mrb[0].mxu0
    %1216 = vdwg.mxu0
    %vm1217 = vcmp.gt.f32.partialorder %v1212, 0.0
    %v1218 = vmul.f32 %v1212, 0.01
    %v1219 = vsel %vm1217, %v1212, %v1218
    %v1220 = vpack.c.bf16 %v1219, %v1219
    %v1221 = vlaneseq
    %v1222 = vshrl.u32 %v1221, 7
    %v1223 = vsub.s32 0, %v1222
    %v1224 = vrot.slane %v1067, %v1223
    %v1241 = vunpack.c.l.b16 %v1050
    %v1242 = vunpack.c.l.b16 %v1051
    %v1243 = vunpack.c.l.b16 %v1052
    %v1244 = vunpack.c.l.b16 %v1053
    %v1245 = vunpack.c.l.b16 %v1054
    %v1246 = vunpack.c.l.b16 %v1055
    %v1247 = vunpack.c.l.b16 %v1056
    %v1248 = vunpack.c.l.b16 %v1057
    %v1249 = vunpack.c.l.b16 %v1058
    %v1250 = vunpack.c.l.b16 %v1059
    %v1251 = vunpack.c.l.b16 %v1060
    %v1252 = vunpack.c.l.b16 %v1061
    %v1253 = vunpack.c.l.b16 %v1062
    %v1254 = vunpack.c.l.b16 %v1063
    %v1255 = vunpack.c.l.b16 %v1064
    %v1256 = vunpack.c.l.b16 %v1065
    %v1257 = vpack.c.b16 %v1242, %v1241
    %v1258 = vpack.c.b16 %v1244, %v1243
    %v1259 = vpack.c.b16 %v1246, %v1245
    %v1260 = vpack.c.b16 %v1248, %v1247
    %v1261 = vpack.c.b16 %v1250, %v1249
    %v1262 = vpack.c.b16 %v1252, %v1251
    %v1263 = vpack.c.b16 %v1254, %v1253
    %v1264 = vpack.c.b16 %v1256, %v1255
    %1273 = vmatprep.subr.bf16.mxu0 0
    %1274 = vmatpush1.bf16.msra.mxu0 %v1257
    %1275 = vmatprep.subr.bf16.mxu0 0
    %1276 = vmatpush1.bf16.msra.mxu0 %v1258
    %1277 = vmatprep.subr.bf16.mxu0 0
    %1278 = vmatpush1.bf16.msra.mxu0 %v1259
    %1279 = vmatprep.subr.bf16.mxu0 0
    %1280 = vmatpush1.bf16.msra.mxu0 %v1260
    %1281 = vmatprep.subr.bf16.mxu0 0
    %1282 = vmatpush1.bf16.msra.mxu0 %v1261
    %1283 = vmatprep.subr.bf16.mxu0 0
    %1284 = vmatpush1.bf16.msra.mxu0 %v1262
    %1285 = vmatprep.subr.bf16.mxu0 0
    %1286 = vmatpush1.bf16.msra.mxu0 %v1263
    %1287 = vmatprep.subr.bf16.mxu0 0
    %1288 = vmatpush1.bf16.msra.mxu0 %v1264
    %1289 = vmatprep.subr.bf16.mxu0 0
    %1290 = vmatpush1.bf16.msra.mxu0 0
    %1291 = vmatprep.subr.bf16.mxu0 0
    %1292 = vmatpush1.bf16.msra.mxu0 0
    %1293 = vmatprep.subr.bf16.mxu0 0
    %1294 = vmatpush1.bf16.msra.mxu0 0
    %1295 = vmatprep.subr.bf16.mxu0 0
    %1296 = vmatpush1.bf16.msra.mxu0 0
    %1297 = vmatprep.subr.bf16.mxu0 0
    %1298 = vmatpush1.bf16.msra.mxu0 0
    %1299 = vmatprep.subr.bf16.mxu0 0
    %1300 = vmatpush1.bf16.msra.mxu0 0
    %1301 = vmatprep.subr.bf16.mxu0 0
    %1302 = vmatpush1.bf16.msra.mxu0 0
    %1303 = vmatprep.subr.bf16.mxu0 0
    %1304 = vmatpush1.bf16.msra.mxu0 0
    %1305 = vmatprep.mubr.bf16.mxu0 0
    %1306 = vmatmul.mubr.bf16.gmra.mrb[0].mxu0 %v1220
    %v1307 = vpop.f32.mrb[0].mxu0
    %v1308 = vadd.f32 %v1224, %v1307
    %v1309 = vpop.f32.mrb[0].mxu0
    %v1310 = vpop.f32.mrb[0].mxu0
    %v1311 = vpop.f32.mrb[0].mxu0
    %1312 = vdwg.mxu0
    %v1313 = vtanh.pop %v1308
    %v1314 = vmul.f32 %v1313, %v1026
    %1316 = vrot.lane.b32.xlu0 %v1026, 2
    %v1317 = vpop.permute.xlu0 %1316
    %v1319 = vmul.f32 %v1308, %v1317
    %1321 = vrot.lane.b32.xlu0 %v1319, 126
    %v1322 = vpop.permute.xlu0 %1321
    %v1324 = vsub.f32 %v1022, %v1322
    %v1325 = vmul.f32 %v1026, %v1324
    %v1326 = vsub.f32 0.0, %v1314
    %v1327 = vmul.f32 %v1326, 1.442695
    %v1328 = vpow.pop %v1327
    %v1329 = vmul.f32 %v1325, %v1328
    %v1330 = vadd.f32 %v1329, %v1028
    %v1331 = vmul.f32 %v1026, %v1330
    %v1332 = vld [vmem:[#allocation5] sm:$0x1]
    %v1333 = vld [vmem:[#allocation5 + $0x8] sm:$0x1]
    %v1334 = vunpack.c.l.bf16 %v1333
    %v1335 = vld [vmem:[#allocation5 + $0x10] sm:$0xf]
    %v1336 = vld [vmem:[#allocation5 + $0x14] sm:$0xf]
    %v1337 = vld [vmem:[#allocation5 + $0x18] sm:$0xf]
    %v1338 = vld [vmem:[#allocation5 + $0x1c] sm:$0xf]
    %v1339 = vld [vmem:[#allocation5 + $0x20] sm:$0xf]
    %v1340 = vld [vmem:[#allocation5 + $0x24] sm:$0xf]
    %v1341 = vld [vmem:[#allocation5 + $0x28] sm:$0xf]
    %v1342 = vld [vmem:[#allocation5 + $0x2c] sm:$0xf]
    %v1343 = vld [vmem:[#allocation5 + $0x30] sm:$0xf]
    %v1344 = vld [vmem:[#allocation5 + $0x34] sm:$0xf]
    %v1345 = vld [vmem:[#allocation5 + $0x38] sm:$0xf]
    %v1346 = vld [vmem:[#allocation5 + $0x3c] sm:$0xf]
    %v1347 = vld [vmem:[#allocation5 + $0x40] sm:$0xf]
    %v1348 = vld [vmem:[#allocation5 + $0x44] sm:$0xf]
    %v1349 = vld [vmem:[#allocation5 + $0x48] sm:$0xf]
    %v1350 = vld [vmem:[#allocation5 + $0x4c] sm:$0xf]
    %v1351 = vld [vmem:[#allocation5 + $0x50] sm:$0x1]
    %v1352 = vunpack.c.l.bf16 %v1351
    %v1353 = vld [vmem:[#allocation5 + $0x58] sm:$0xf]
    %v1354 = vld [vmem:[#allocation5 + $0x5c] sm:$0xf]
    %v1355 = vld [vmem:[#allocation5 + $0x60] sm:$0xf]
    %v1356 = vld [vmem:[#allocation5 + $0x64] sm:$0xf]
    %v1357 = vld [vmem:[#allocation5 + $0x68] sm:$0xf]
    %v1358 = vld [vmem:[#allocation5 + $0x6c] sm:$0xf]
    %v1359 = vld [vmem:[#allocation5 + $0x70] sm:$0xf]
    %v1360 = vld [vmem:[#allocation5 + $0x74] sm:$0xf]
    %v1361 = vld [vmem:[#allocation5 + $0x78] sm:$0xf]
    %v1362 = vld [vmem:[#allocation5 + $0x7c] sm:$0xf]
    %v1363 = vld [vmem:[#allocation5 + $0x80] sm:$0xf]
    %v1364 = vld [vmem:[#allocation5 + $0x84] sm:$0xf]
    %v1365 = vld [vmem:[#allocation5 + $0x88] sm:$0xf]
    %v1366 = vld [vmem:[#allocation5 + $0x8c] sm:$0xf]
    %v1367 = vld [vmem:[#allocation5 + $0x90] sm:$0xf]
    %v1368 = vld [vmem:[#allocation5 + $0x94] sm:$0xf]
    %v1369 = vld [vmem:[#allocation5 + $0x98] sm:$0x1]
    %v1370 = vunpack.c.l.bf16 %v1369
    %v1371 = vpack.c.bf16 %v1331, %v1331
    %v1372 = vlaneseq
    %v1373 = vshrl.u32 %v1372, 7
    %v1374 = vsub.s32 0, %v1373
    %v1375 = vrot.slane %v1334, %v1374
    %v1377 = vsel %vm1073, %v1371, 0
    %v1380 = vsel %vm1077, %v1332, 0
    %1382 = vmatprep.subr.bf16.mxu0 0
    %1383 = vmatpush1.bf16.msra.mxu0 %v1380
    %1384 = vmatprep.subr.bf16.mxu0 0
    %1385 = vmatpush1.bf16.msra.mxu0 0
    %1386 = vmatprep.subr.bf16.mxu0 0
    %1387 = vmatpush1.bf16.msra.mxu0 0
    %1388 = vmatprep.subr.bf16.mxu0 0
    %1389 = vmatpush1.bf16.msra.mxu0 0
    %1390 = vmatprep.subr.bf16.mxu0 0
    %1391 = vmatpush1.bf16.msra.mxu0 0
    %1392 = vmatprep.subr.bf16.mxu0 0
    %1393 = vmatpush1.bf16.msra.mxu0 0
    %1394 = vmatprep.subr.bf16.mxu0 0
    %1395 = vmatpush1.bf16.msra.mxu0 0
    %1396 = vmatprep.subr.bf16.mxu0 0
    %1397 = vmatpush1.bf16.msra.mxu0 0
    %1398 = vmatprep.subr.bf16.mxu0 0
    %1399 = vmatpush1.bf16.msra.mxu0 0
    %1400 = vmatprep.subr.bf16.mxu0 0
    %1401 = vmatpush1.bf16.msra.mxu0 0
    %1402 = vmatprep.subr.bf16.mxu0 0
    %1403 = vmatpush1.bf16.msra.mxu0 0
    %1404 = vmatprep.subr.bf16.mxu0 0
    %1405 = vmatpush1.bf16.msra.mxu0 0
    %1406 = vmatprep.subr.bf16.mxu0 0
    %1407 = vmatpush1.bf16.msra.mxu0 0
    %1408 = vmatprep.subr.bf16.mxu0 0
    %1409 = vmatpush1.bf16.msra.mxu0 0
    %1410 = vmatprep.subr.bf16.mxu0 0
    %1411 = vmatpush1.bf16.msra.mxu0 0
    %1412 = vmatprep.subr.bf16.mxu0 0
    %1413 = vmatpush1.bf16.msra.mxu0 0
    %1414 = vmatprep.mubr.bf16.mxu0 0
    %1415 = vmatmul.mubr.bf16.gmra.mrb[0].mxu0 %v1377
    %v1416 = vpop.f32.mrb[0].mxu0
    %v1417 = vadd.f32 %v1375, %v1416
    %v1418 = vpop.f32.mrb[0].mxu0
    %v1419 = vpop.f32.mrb[0].mxu0
    %v1420 = vpop.f32.mrb[0].mxu0
    %1421 = vdwg.mxu0
    %vm1422 = vcmp.gt.f32.partialorder %v1417, 0.0
    %v1423 = vmul.f32 %v1417, 0.01
    %v1424 = vsel %vm1422, %v1417, %v1423
    %v1425 = vpack.c.bf16 %v1424, %v1424
    %v1426 = vlaneseq
    %v1427 = vshrl.u32 %v1426, 7
    %v1428 = vsub.s32 0, %v1427
    %v1429 = vrot.slane %v1352, %v1428
    %v1446 = vunpack.c.l.b16 %v1335
    %v1447 = vunpack.c.l.b16 %v1336
    %v1448 = vunpack.c.l.b16 %v1337
    %v1449 = vunpack.c.l.b16 %v1338
    %v1450 = vunpack.c.l.b16 %v1339
    %v1451 = vunpack.c.l.b16 %v1340
    %v1452 = vunpack.c.l.b16 %v1341
    %v1453 = vunpack.c.l.b16 %v1342
    %v1454 = vunpack.c.l.b16 %v1343
    %v1455 = vunpack.c.l.b16 %v1344
    %v1456 = vunpack.c.l.b16 %v1345
    %v1457 = vunpack.c.l.b16 %v1346
    %v1458 = vunpack.c.l.b16 %v1347
    %v1459 = vunpack.c.l.b16 %v1348
    %v1460 = vunpack.c.l.b16 %v1349
    %v1461 = vunpack.c.l.b16 %v1350
    %v1462 = vpack.c.b16 %v1447, %v1446
    %v1463 = vpack.c.b16 %v1449, %v1448
    %v1464 = vpack.c.b16 %v1451, %v1450
    %v1465 = vpack.c.b16 %v1453, %v1452
    %v1466 = vpack.c.b16 %v1455, %v1454
    %v1467 = vpack.c.b16 %v1457, %v1456
    %v1468 = vpack.c.b16 %v1459, %v1458
    %v1469 = vpack.c.b16 %v1461, %v1460
    %1478 = vmatprep.subr.bf16.mxu0 0
    %1479 = vmatpush1.bf16.msra.mxu0 %v1462
    %1480 = vmatprep.subr.bf16.mxu0 0
    %1481 = vmatpush1.bf16.msra.mxu0 %v1463
    %1482 = vmatprep.subr.bf16.mxu0 0
    %1483 = vmatpush1.bf16.msra.mxu0 %v1464
    %1484 = vmatprep.subr.bf16.mxu0 0
    %1485 = vmatpush1.bf16.msra.mxu0 %v1465
    %1486 = vmatprep.subr.bf16.mxu0 0
    %1487 = vmatpush1.bf16.msra.mxu0 %v1466
    %1488 = vmatprep.subr.bf16.mxu0 0
    %1489 = vmatpush1.bf16.msra.mxu0 %v1467
    %1490 = vmatprep.subr.bf16.mxu0 0
    %1491 = vmatpush1.bf16.msra.mxu0 %v1468
    %1492 = vmatprep.subr.bf16.mxu0 0
    %1493 = vmatpush1.bf16.msra.mxu0 %v1469
    %1494 = vmatprep.subr.bf16.mxu0 0
    %1495 = vmatpush1.bf16.msra.mxu0 0
    %1496 = vmatprep.subr.bf16.mxu0 0
    %1497 = vmatpush1.bf16.msra.mxu0 0
    %1498 = vmatprep.subr.bf16.mxu0 0
    %1499 = vmatpush1.bf16.msra.mxu0 0
    %1500 = vmatprep.subr.bf16.mxu0 0
    %1501 = vmatpush1.bf16.msra.mxu0 0
    %1502 = vmatprep.subr.bf16.mxu0 0
    %1503 = vmatpush1.bf16.msra.mxu0 0
    %1504 = vmatprep.subr.bf16.mxu0 0
    %1505 = vmatpush1.bf16.msra.mxu0 0
    %1506 = vmatprep.subr.bf16.mxu0 0
    %1507 = vmatpush1.bf16.msra.mxu0 0
    %1508 = vmatprep.subr.bf16.mxu0 0
    %1509 = vmatpush1.bf16.msra.mxu0 0
    %1510 = vmatprep.mubr.bf16.mxu0 0
    %1511 = vmatmul.mubr.bf16.gmra.mrb[0].mxu0 %v1425
    %v1512 = vpop.f32.mrb[0].mxu0
    %v1513 = vadd.f32 %v1429, %v1512
    %v1514 = vpop.f32.mrb[0].mxu0
    %v1515 = vpop.f32.mrb[0].mxu0
    %v1516 = vpop.f32.mrb[0].mxu0
    %1517 = vdwg.mxu0
    %vm1518 = vcmp.gt.f32.partialorder %v1513, 0.0
    %v1519 = vmul.f32 %v1513, 0.01
    %v1520 = vsel %vm1518, %v1513, %v1519
    %v1521 = vpack.c.bf16 %v1520, %v1520
    %v1522 = vlaneseq
    %v1523 = vshrl.u32 %v1522, 7
    %v1524 = vsub.s32 0, %v1523
    %v1525 = vrot.slane %v1370, %v1524
    %v1542 = vunpack.c.l.b16 %v1353
    %v1543 = vunpack.c.l.b16 %v1354
    %v1544 = vunpack.c.l.b16 %v1355
    %v1545 = vunpack.c.l.b16 %v1356
    %v1546 = vunpack.c.l.b16 %v1357
    %v1547 = vunpack.c.l.b16 %v1358
    %v1548 = vunpack.c.l.b16 %v1359
    %v1549 = vunpack.c.l.b16 %v1360
    %v1550 = vunpack.c.l.b16 %v1361
    %v1551 = vunpack.c.l.b16 %v1362
    %v1552 = vunpack.c.l.b16 %v1363
    %v1553 = vunpack.c.l.b16 %v1364
    %v1554 = vunpack.c.l.b16 %v1365
    %v1555 = vunpack.c.l.b16 %v1366
    %v1556 = vunpack.c.l.b16 %v1367
    %v1557 = vunpack.c.l.b16 %v1368
    %v1558 = vpack.c.b16 %v1543, %v1542
    %v1559 = vpack.c.b16 %v1545, %v1544
    %v1560 = vpack.c.b16 %v1547, %v1546
    %v1561 = vpack.c.b16 %v1549, %v1548
    %v1562 = vpack.c.b16 %v1551, %v1550
    %v1563 = vpack.c.b16 %v1553, %v1552
    %v1564 = vpack.c.b16 %v1555, %v1554
    %v1565 = vpack.c.b16 %v1557, %v1556
    %1574 = vmatprep.subr.bf16.mxu0 0
    %1575 = vmatpush1.bf16.msra.mxu0 %v1558
    %1576 = vmatprep.subr.bf16.mxu0 0
    %1577 = vmatpush1.bf16.msra.mxu0 %v1559
    %1578 = vmatprep.subr.bf16.mxu0 0
    %1579 = vmatpush1.bf16.msra.mxu0 %v1560
    %1580 = vmatprep.subr.bf16.mxu0 0
    %1581 = vmatpush1.bf16.msra.mxu0 %v1561
    %1582 = vmatprep.subr.bf16.mxu0 0
    %1583 = vmatpush1.bf16.msra.mxu0 %v1562
    %1584 = vmatprep.subr.bf16.mxu0 0
    %1585 = vmatpush1.bf16.msra.mxu0 %v1563
    %1586 = vmatprep.subr.bf16.mxu0 0
    %1587 = vmatpush1.bf16.msra.mxu0 %v1564
    %1588 = vmatprep.subr.bf16.mxu0 0
    %1589 = vmatpush1.bf16.msra.mxu0 %v1565
    %1590 = vmatprep.subr.bf16.mxu0 0
    %1591 = vmatpush1.bf16.msra.mxu0 0
    %1592 = vmatprep.subr.bf16.mxu0 0
    %1593 = vmatpush1.bf16.msra.mxu0 0
    %1594 = vmatprep.subr.bf16.mxu0 0
    %1595 = vmatpush1.bf16.msra.mxu0 0
    %1596 = vmatprep.subr.bf16.mxu0 0
    %1597 = vmatpush1.bf16.msra.mxu0 0
    %1598 = vmatprep.subr.bf16.mxu0 0
    %1599 = vmatpush1.bf16.msra.mxu0 0
    %1600 = vmatprep.subr.bf16.mxu0 0
    %1601 = vmatpush1.bf16.msra.mxu0 0
    %1602 = vmatprep.subr.bf16.mxu0 0
    %1603 = vmatpush1.bf16.msra.mxu0 0
    %1604 = vmatprep.subr.bf16.mxu0 0
    %1605 = vmatpush1.bf16.msra.mxu0 0
    %1606 = vmatprep.mubr.bf16.mxu0 0
    %1607 = vmatmul.mubr.bf16.gmra.mrb[0].mxu0 %v1521
    %v1608 = vpop.f32.mrb[0].mxu0
    %v1609 = vadd.f32 %v1525, %v1608
    %v1610 = vpop.f32.mrb[0].mxu0
    %v1611 = vpop.f32.mrb[0].mxu0
    %v1612 = vpop.f32.mrb[0].mxu0
    %1613 = vdwg.mxu0
    %v1614 = vtanh.pop %v1609
    %v1615 = vmul.f32 %v1614, %v1027
    %1617 = vrot.lane.b32.xlu0 %v1027, 2
    %v1618 = vpop.permute.xlu0 %1617
    %v1620 = vmul.f32 %v1609, %v1618
    %1622 = vrot.lane.b32.xlu0 %v1620, 126
    %v1623 = vpop.permute.xlu0 %1622
    %v1625 = vsub.f32 %v1330, %v1623
    %v1626 = vmul.f32 %v1027, %v1625
    %v1627 = vsub.f32 0.0, %v1615
    %v1628 = vmul.f32 %v1627, 1.442695
    %v1629 = vpow.pop %v1628
    %v1630 = vmul.f32 %v1626, %v1629
    %v1631 = vadd.f32 %v1630, %v1331
    %v1632 = vld [vmem:[%s0 + $0x10] sm:$0xff]
    %1633 = vst.msk [vmem:[#allocation2] sm:$0xff] %vm97, %v1632
    %1634 = vst.msk [vmem:[#allocation2] sm:$0xff] %vm1073, %v1631
    %v1635 = vld [vmem:[#allocation2] sm:$0xff]
    %v1636 = vmul.f32 %v49, %v1635
    %v1637 = vld [vmem:[#allocation3] sm:$0x3]
    %v1638 = vld [vmem:[#allocation3 + $0x8] sm:$0x1]
    %v1639 = vunpack.c.l.bf16 %v1638
    %v1640 = vld [vmem:[#allocation3 + $0x10] sm:$0xf]
    %v1641 = vld [vmem:[#allocation3 + $0x14] sm:$0xf]
    %v1642 = vld [vmem:[#allocation3 + $0x18] sm:$0xf]
    %v1643 = vld [vmem:[#allocation3 + $0x1c] sm:$0xf]
    %v1644 = vld [vmem:[#allocation3 + $0x20] sm:$0xf]
    %v1645 = vld [vmem:[#allocation3 + $0x24] sm:$0xf]
    %v1646 = vld [vmem:[#allocation3 + $0x28] sm:$0xf]
    %v1647 = vld [vmem:[#allocation3 + $0x2c] sm:$0xf]
    %v1648 = vld [vmem:[#allocation3 + $0x30] sm:$0xf]
    %v1649 = vld [vmem:[#allocation3 + $0x34] sm:$0xf]
    %v1650 = vld [vmem:[#allocation3 + $0x38] sm:$0xf]
    %v1651 = vld [vmem:[#allocation3 + $0x3c] sm:$0xf]
    %v1652 = vld [vmem:[#allocation3 + $0x40] sm:$0xf]
    %v1653 = vld [vmem:[#allocation3 + $0x44] sm:$0xf]
    %v1654 = vld [vmem:[#allocation3 + $0x48] sm:$0xf]
    %v1655 = vld [vmem:[#allocation3 + $0x4c] sm:$0xf]
    %v1656 = vld [vmem:[#allocation3 + $0x50] sm:$0x1]
    %v1657 = vunpack.c.l.bf16 %v1656
    %v1658 = vld [vmem:[#allocation3 + $0x58] sm:$0xf]
    %v1659 = vld [vmem:[#allocation3 + $0x5c] sm:$0xf]
    %v1660 = vld [vmem:[#allocation3 + $0x60] sm:$0xf]
    %v1661 = vld [vmem:[#allocation3 + $0x64] sm:$0xf]
    %v1662 = vld [vmem:[#allocation3 + $0x68] sm:$0xf]
    %v1663 = vld [vmem:[#allocation3 + $0x6c] sm:$0xf]
    %v1664 = vld [vmem:[#allocation3 + $0x70] sm:$0xf]
    %v1665 = vld [vmem:[#allocation3 + $0x74] sm:$0xf]
    %v1666 = vld [vmem:[#allocation3 + $0x78] sm:$0xf]
    %v1667 = vld [vmem:[#allocation3 + $0x7c] sm:$0xf]
    %v1668 = vld [vmem:[#allocation3 + $0x80] sm:$0xf]
    %v1669 = vld [vmem:[#allocation3 + $0x84] sm:$0xf]
    %v1670 = vld [vmem:[#allocation3 + $0x88] sm:$0xf]
    %v1671 = vld [vmem:[#allocation3 + $0x8c] sm:$0xf]
    %v1672 = vld [vmem:[#allocation3 + $0x90] sm:$0xf]
    %v1673 = vld [vmem:[#allocation3 + $0x94] sm:$0xf]
    %v1674 = vld [vmem:[#allocation3 + $0x98] sm:$0x1]
    %v1675 = vunpack.c.l.bf16 %v1674
    %v1676 = vpack.c.bf16 %v1636, %v1636
    %v1677 = vlaneseq
    %v1678 = vshrl.u32 %v1677, 7
    %v1679 = vsub.s32 0, %v1678
    %v1680 = vrot.slane %v1639, %v1679
    %v1682 = vsel %vm97, %v1676, 0
    %v1685 = vsel %vm101, %v1637, 0
    %1687 = vmatprep.subr.bf16.mxu0 0
    %1688 = vmatpush1.bf16.msra.mxu0 %v1685
    %1689 = vmatprep.subr.bf16.mxu0 0
    %1690 = vmatpush1.bf16.msra.mxu0 0
    %1691 = vmatprep.subr.bf16.mxu0 0
    %1692 = vmatpush1.bf16.msra.mxu0 0
    %1693 = vmatprep.subr.bf16.mxu0 0
    %1694 = vmatpush1.bf16.msra.mxu0 0
    %1695 = vmatprep.subr.bf16.mxu0 0
    %1696 = vmatpush1.bf16.msra.mxu0 0
    %1697 = vmatprep.subr.bf16.mxu0 0
    %1698 = vmatpush1.bf16.msra.mxu0 0
    %1699 = vmatprep.subr.bf16.mxu0 0
    %1700 = vmatpush1.bf16.msra.mxu0 0
    %1701 = vmatprep.subr.bf16.mxu0 0
    %1702 = vmatpush1.bf16.msra.mxu0 0
    %1703 = vmatprep.subr.bf16.mxu0 0
    %1704 = vmatpush1.bf16.msra.mxu0 0
    %1705 = vmatprep.subr.bf16.mxu0 0
    %1706 = vmatpush1.bf16.msra.mxu0 0
    %1707 = vmatprep.subr.bf16.mxu0 0
    %1708 = vmatpush1.bf16.msra.mxu0 0
    %1709 = vmatprep.subr.bf16.mxu0 0
    %1710 = vmatpush1.bf16.msra.mxu0 0
    %1711 = vmatprep.subr.bf16.mxu0 0
    %1712 = vmatpush1.bf16.msra.mxu0 0
    %1713 = vmatprep.subr.bf16.mxu0 0
    %1714 = vmatpush1.bf16.msra.mxu0 0
    %1715 = vmatprep.subr.bf16.mxu0 0
    %1716 = vmatpush1.bf16.msra.mxu0 0
    %1717 = vmatprep.subr.bf16.mxu0 0
    %1718 = vmatpush1.bf16.msra.mxu0 0
    %1719 = vmatprep.mubr.bf16.mxu0 0
    %1720 = vmatmul.mubr.bf16.gmra.mrb[0].mxu0 %v1682
    %v1721 = vpop.f32.mrb[0].mxu0
    %v1722 = vadd.f32 %v1680, %v1721
    %v1723 = vpop.f32.mrb[0].mxu0
    %v1724 = vpop.f32.mrb[0].mxu0
    %v1725 = vpop.f32.mrb[0].mxu0
    %1726 = vdwg.mxu0
    %vm1727 = vcmp.gt.f32.partialorder %v1722, 0.0
    %v1728 = vmul.f32 %v1722, 0.01
    %v1729 = vsel %vm1727, %v1722, %v1728
    %v1730 = vpack.c.bf16 %v1729, %v1729
    %v1731 = vlaneseq
    %v1732 = vshrl.u32 %v1731, 7
    %v1733 = vsub.s32 0, %v1732
    %v1734 = vrot.slane %v1657, %v1733
    %v1751 = vunpack.c.l.b16 %v1640
    %v1752 = vunpack.c.l.b16 %v1641
    %v1753 = vunpack.c.l.b16 %v1642
    %v1754 = vunpack.c.l.b16 %v1643
    %v1755 = vunpack.c.l.b16 %v1644
    %v1756 = vunpack.c.l.b16 %v1645
    %v1757 = vunpack.c.l.b16 %v1646
    %v1758 = vunpack.c.l.b16 %v1647
    %v1759 = vunpack.c.l.b16 %v1648
    %v1760 = vunpack.c.l.b16 %v1649
    %v1761 = vunpack.c.l.b16 %v1650
    %v1762 = vunpack.c.l.b16 %v1651
    %v1763 = vunpack.c.l.b16 %v1652
    %v1764 = vunpack.c.l.b16 %v1653
    %v1765 = vunpack.c.l.b16 %v1654
    %v1766 = vunpack.c.l.b16 %v1655
    %v1767 = vpack.c.b16 %v1752, %v1751
    %v1768 = vpack.c.b16 %v1754, %v1753
    %v1769 = vpack.c.b16 %v1756, %v1755
    %v1770 = vpack.c.b16 %v1758, %v1757
    %v1771 = vpack.c.b16 %v1760, %v1759
    %v1772 = vpack.c.b16 %v1762, %v1761
    %v1773 = vpack.c.b16 %v1764, %v1763
    %v1774 = vpack.c.b16 %v1766, %v1765
    %1783 = vmatprep.subr.bf16.mxu0 0
    %1784 = vmatpush1.bf16.msra.mxu0 %v1767
    %1785 = vmatprep.subr.bf16.mxu0 0
    %1786 = vmatpush1.bf16.msra.mxu0 %v1768
    %1787 = vmatprep.subr.bf16.mxu0 0
    %1788 = vmatpush1.bf16.msra.mxu0 %v1769
    %1789 = vmatprep.subr.bf16.mxu0 0
    %1790 = vmatpush1.bf16.msra.mxu0 %v1770
    %1791 = vmatprep.subr.bf16.mxu0 0
    %1792 = vmatpush1.bf16.msra.mxu0 %v1771
    %1793 = vmatprep.subr.bf16.mxu0 0
    %1794 = vmatpush1.bf16.msra.mxu0 %v1772
    %1795 = vmatprep.subr.bf16.mxu0 0
    %1796 = vmatpush1.bf16.msra.mxu0 %v1773
    %1797 = vmatprep.subr.bf16.mxu0 0
    %1798 = vmatpush1.bf16.msra.mxu0 %v1774
    %1799 = vmatprep.subr.bf16.mxu0 0
    %1800 = vmatpush1.bf16.msra.mxu0 0
    %1801 = vmatprep.subr.bf16.mxu0 0
    %1802 = vmatpush1.bf16.msra.mxu0 0
    %1803 = vmatprep.subr.bf16.mxu0 0
    %1804 = vmatpush1.bf16.msra.mxu0 0
    %1805 = vmatprep.subr.bf16.mxu0 0
    %1806 = vmatpush1.bf16.msra.mxu0 0
    %1807 = vmatprep.subr.bf16.mxu0 0
    %1808 = vmatpush1.bf16.msra.mxu0 0
    %1809 = vmatprep.subr.bf16.mxu0 0
    %1810 = vmatpush1.bf16.msra.mxu0 0
    %1811 = vmatprep.subr.bf16.mxu0 0
    %1812 = vmatpush1.bf16.msra.mxu0 0
    %1813 = vmatprep.subr.bf16.mxu0 0
    %1814 = vmatpush1.bf16.msra.mxu0 0
    %1815 = vmatprep.mubr.bf16.mxu0 0
    %1816 = vmatmul.mubr.bf16.gmra.mrb[0].mxu0 %v1730
    %v1817 = vpop.f32.mrb[0].mxu0
    %v1818 = vadd.f32 %v1734, %v1817
    %v1819 = vpop.f32.mrb[0].mxu0
    %v1820 = vpop.f32.mrb[0].mxu0
    %v1821 = vpop.f32.mrb[0].mxu0
    %1822 = vdwg.mxu0
    %vm1823 = vcmp.gt.f32.partialorder %v1818, 0.0
    %v1824 = vmul.f32 %v1818, 0.01
    %v1825 = vsel %vm1823, %v1818, %v1824
    %v1826 = vpack.c.bf16 %v1825, %v1825
    %v1827 = vlaneseq
    %v1828 = vshrl.u32 %v1827, 7
    %v1829 = vsub.s32 0, %v1828
    %v1830 = vrot.slane %v1675, %v1829
    %v1847 = vunpack.c.l.b16 %v1658
    %v1848 = vunpack.c.l.b16 %v1659
    %v1849 = vunpack.c.l.b16 %v1660
    %v1850 = vunpack.c.l.b16 %v1661
    %v1851 = vunpack.c.l.b16 %v1662
    %v1852 = vunpack.c.l.b16 %v1663
    %v1853 = vunpack.c.l.b16 %v1664
    %v1854 = vunpack.c.l.b16 %v1665
    %v1855 = vunpack.c.l.b16 %v1666
    %v1856 = vunpack.c.l.b16 %v1667
    %v1857 = vunpack.c.l.b16 %v1668
    %v1858 = vunpack.c.l.b16 %v1669
    %v1859 = vunpack.c.l.b16 %v1670
    %v1860 = vunpack.c.l.b16 %v1671
    %v1861 = vunpack.c.l.b16 %v1672
    %v1862 = vunpack.c.l.b16 %v1673
    %v1863 = vpack.c.b16 %v1848, %v1847
    %v1864 = vpack.c.b16 %v1850, %v1849
    %v1865 = vpack.c.b16 %v1852, %v1851
    %v1866 = vpack.c.b16 %v1854, %v1853
    %v1867 = vpack.c.b16 %v1856, %v1855
    %v1868 = vpack.c.b16 %v1858, %v1857
    %v1869 = vpack.c.b16 %v1860, %v1859
    %v1870 = vpack.c.b16 %v1862, %v1861
    %1879 = vmatprep.subr.bf16.mxu0 0
    %1880 = vmatpush1.bf16.msra.mxu0 %v1863
    %1881 = vmatprep.subr.bf16.mxu0 0
    %1882 = vmatpush1.bf16.msra.mxu0 %v1864
    %1883 = vmatprep.subr.bf16.mxu0 0
    %1884 = vmatpush1.bf16.msra.mxu0 %v1865
    %1885 = vmatprep.subr.bf16.mxu0 0
    %1886 = vmatpush1.bf16.msra.mxu0 %v1866
    %1887 = vmatprep.subr.bf16.mxu0 0
    %1888 = vmatpush1.bf16.msra.mxu0 %v1867
    %1889 = vmatprep.subr.bf16.mxu0 0
    %1890 = vmatpush1.bf16.msra.mxu0 %v1868
    %1891 = vmatprep.subr.bf16.mxu0 0
    %1892 = vmatpush1.bf16.msra.mxu0 %v1869
    %1893 = vmatprep.subr.bf16.mxu0 0
    %1894 = vmatpush1.bf16.msra.mxu0 %v1870
    %1895 = vmatprep.subr.bf16.mxu0 0
    %1896 = vmatpush1.bf16.msra.mxu0 0
    %1897 = vmatprep.subr.bf16.mxu0 0
    %1898 = vmatpush1.bf16.msra.mxu0 0
    %1899 = vmatprep.subr.bf16.mxu0 0
    %1900 = vmatpush1.bf16.msra.mxu0 0
    %1901 = vmatprep.subr.bf16.mxu0 0
    %1902 = vmatpush1.bf16.msra.mxu0 0
    %1903 = vmatprep.subr.bf16.mxu0 0
    %1904 = vmatpush1.bf16.msra.mxu0 0
    %1905 = vmatprep.subr.bf16.mxu0 0
    %1906 = vmatpush1.bf16.msra.mxu0 0
    %1907 = vmatprep.subr.bf16.mxu0 0
    %1908 = vmatpush1.bf16.msra.mxu0 0
    %1909 = vmatprep.subr.bf16.mxu0 0
    %1910 = vmatpush1.bf16.msra.mxu0 0
    %1911 = vmatprep.mubr.bf16.mxu0 0
    %1912 = vmatmul.mubr.bf16.gmra.mrb[0].mxu0 %v1826
    %v1913 = vpop.f32.mrb[0].mxu0
    %v1914 = vadd.f32 %v1830, %v1913
    %v1915 = vpop.f32.mrb[0].mxu0
    %v1916 = vpop.f32.mrb[0].mxu0
    %v1917 = vpop.f32.mrb[0].mxu0
    %1918 = vdwg.mxu0
    %v1919 = vtanh.pop %v1914
    %v1920 = vmul.f32 %v1919, %v50
    %v1921 = vmul.f32 %v1914, %v352
    %v1922 = vmul.f32 %v1920, 1.442695
    %v1923 = vpow.pop %v1922
    %v1924 = vmul.f32 %v1635, %v1923
    %1926 = vrot.lane.b32.xlu0 %v1921, 124
    %v1927 = vpop.permute.xlu0 %1926
    %v1929 = vadd.f32 %v1924, %v1927
    %v1930 = vmul.f32 %v50, %v1929
    %v1931 = vadd.f32 %v1636, %v1930
    %v1932 = vmul.f32 %v50, %v1931
    %v1933 = vld [vmem:[#allocation3 + $0xa0] sm:$0x3]
    %v1934 = vld [vmem:[#allocation3 + $0xa8] sm:$0x1]
    %v1935 = vunpack.c.l.bf16 %v1934
    %v1936 = vld [vmem:[#allocation3 + $0xb0] sm:$0xf]
    %v1937 = vld [vmem:[#allocation3 + $0xb4] sm:$0xf]
    %v1938 = vld [vmem:[#allocation3 + $0xb8] sm:$0xf]
    %v1939 = vld [vmem:[#allocation3 + $0xbc] sm:$0xf]
    %v1940 = vld [vmem:[#allocation3 + $0xc0] sm:$0xf]
    %v1941 = vld [vmem:[#allocation3 + $0xc4] sm:$0xf]
    %v1942 = vld [vmem:[#allocation3 + $0xc8] sm:$0xf]
    %v1943 = vld [vmem:[#allocation3 + $0xcc] sm:$0xf]
    %v1944 = vld [vmem:[#allocation3 + $0xd0] sm:$0xf]
    %v1945 = vld [vmem:[#allocation3 + $0xd4] sm:$0xf]
    %v1946 = vld [vmem:[#allocation3 + $0xd8] sm:$0xf]
    %v1947 = vld [vmem:[#allocation3 + $0xdc] sm:$0xf]
    %v1948 = vld [vmem:[#allocation3 + $0xe0] sm:$0xf]
    %v1949 = vld [vmem:[#allocation3 + $0xe4] sm:$0xf]
    %v1950 = vld [vmem:[#allocation3 + $0xe8] sm:$0xf]
    %v1951 = vld [vmem:[#allocation3 + $0xec] sm:$0xf]
    %v1952 = vld [vmem:[#allocation3 + $0xf0] sm:$0x1]
    %v1953 = vunpack.c.l.bf16 %v1952
    %v1954 = vld [vmem:[#allocation3 + $0xf8] sm:$0xf]
    %v1955 = vld [vmem:[#allocation3 + $0xfc] sm:$0xf]
    %v1956 = vld [vmem:[#allocation3 + $0x100] sm:$0xf]
    %v1957 = vld [vmem:[#allocation3 + $0x104] sm:$0xf]
    %v1958 = vld [vmem:[#allocation3 + $0x108] sm:$0xf]
    %v1959 = vld [vmem:[#allocation3 + $0x10c] sm:$0xf]
    %v1960 = vld [vmem:[#allocation3 + $0x110] sm:$0xf]
    %v1961 = vld [vmem:[#allocation3 + $0x114] sm:$0xf]
    %v1962 = vld [vmem:[#allocation3 + $0x118] sm:$0xf]
    %v1963 = vld [vmem:[#allocation3 + $0x11c] sm:$0xf]
    %v1964 = vld [vmem:[#allocation3 + $0x120] sm:$0xf]
    %v1965 = vld [vmem:[#allocation3 + $0x124] sm:$0xf]
    %v1966 = vld [vmem:[#allocation3 + $0x128] sm:$0xf]
    %v1967 = vld [vmem:[#allocation3 + $0x12c] sm:$0xf]
    %v1968 = vld [vmem:[#allocation3 + $0x130] sm:$0xf]
    %v1969 = vld [vmem:[#allocation3 + $0x134] sm:$0xf]
    %v1970 = vld [vmem:[#allocation3 + $0x138] sm:$0x1]
    %v1971 = vunpack.c.l.bf16 %v1970
    %v1972 = vpack.c.bf16 %v1932, %v1932
    %v1973 = vlaneseq
    %v1974 = vshrl.u32 %v1973, 7
    %v1975 = vsub.s32 0, %v1974
    %v1976 = vrot.slane %v1935, %v1975
    %v1978 = vsel %vm97, %v1972, 0
    %v1981 = vsel %vm101, %v1933, 0
    %1983 = vmatprep.subr.bf16.mxu0 0
    %1984 = vmatpush1.bf16.msra.mxu0 %v1981
    %1985 = vmatprep.subr.bf16.mxu0 0
    %1986 = vmatpush1.bf16.msra.mxu0 0
    %1987 = vmatprep.subr.bf16.mxu0 0
    %1988 = vmatpush1.bf16.msra.mxu0 0
    %1989 = vmatprep.subr.bf16.mxu0 0
    %1990 = vmatpush1.bf16.msra.mxu0 0
    %1991 = vmatprep.subr.bf16.mxu0 0
    %1992 = vmatpush1.bf16.msra.mxu0 0
    %1993 = vmatprep.subr.bf16.mxu0 0
    %1994 = vmatpush1.bf16.msra.mxu0 0
    %1995 = vmatprep.subr.bf16.mxu0 0
    %1996 = vmatpush1.bf16.msra.mxu0 0
    %1997 = vmatprep.subr.bf16.mxu0 0
    %1998 = vmatpush1.bf16.msra.mxu0 0
    %1999 = vmatprep.subr.bf16.mxu0 0
    %2000 = vmatpush1.bf16.msra.mxu0 0
    %2001 = vmatprep.subr.bf16.mxu0 0
    %2002 = vmatpush1.bf16.msra.mxu0 0
    %2003 = vmatprep.subr.bf16.mxu0 0
    %2004 = vmatpush1.bf16.msra.mxu0 0
    %2005 = vmatprep.subr.bf16.mxu0 0
    %2006 = vmatpush1.bf16.msra.mxu0 0
    %2007 = vmatprep.subr.bf16.mxu0 0
    %2008 = vmatpush1.bf16.msra.mxu0 0
    %2009 = vmatprep.subr.bf16.mxu0 0
    %2010 = vmatpush1.bf16.msra.mxu0 0
    %2011 = vmatprep.subr.bf16.mxu0 0
    %2012 = vmatpush1.bf16.msra.mxu0 0
    %2013 = vmatprep.subr.bf16.mxu0 0
    %2014 = vmatpush1.bf16.msra.mxu0 0
    %2015 = vmatprep.mubr.bf16.mxu0 0
    %2016 = vmatmul.mubr.bf16.gmra.mrb[0].mxu0 %v1978
    %v2017 = vpop.f32.mrb[0].mxu0
    %v2018 = vadd.f32 %v1976, %v2017
    %v2019 = vpop.f32.mrb[0].mxu0
    %v2020 = vpop.f32.mrb[0].mxu0
    %v2021 = vpop.f32.mrb[0].mxu0
    %2022 = vdwg.mxu0
    %vm2023 = vcmp.gt.f32.partialorder %v2018, 0.0
    %v2024 = vmul.f32 %v2018, 0.01
    %v2025 = vsel %vm2023, %v2018, %v2024
    %v2026 = vpack.c.bf16 %v2025, %v2025
    %v2027 = vlaneseq
    %v2028 = vshrl.u32 %v2027, 7
    %v2029 = vsub.s32 0, %v2028
    %v2030 = vrot.slane %v1953, %v2029
    %v2047 = vunpack.c.l.b16 %v1936
    %v2048 = vunpack.c.l.b16 %v1937
    %v2049 = vunpack.c.l.b16 %v1938
    %v2050 = vunpack.c.l.b16 %v1939
    %v2051 = vunpack.c.l.b16 %v1940
    %v2052 = vunpack.c.l.b16 %v1941
    %v2053 = vunpack.c.l.b16 %v1942
    %v2054 = vunpack.c.l.b16 %v1943
    %v2055 = vunpack.c.l.b16 %v1944
    %v2056 = vunpack.c.l.b16 %v1945
    %v2057 = vunpack.c.l.b16 %v1946
    %v2058 = vunpack.c.l.b16 %v1947
    %v2059 = vunpack.c.l.b16 %v1948
    %v2060 = vunpack.c.l.b16 %v1949
    %v2061 = vunpack.c.l.b16 %v1950
    %v2062 = vunpack.c.l.b16 %v1951
    %v2063 = vpack.c.b16 %v2048, %v2047
    %v2064 = vpack.c.b16 %v2050, %v2049
    %v2065 = vpack.c.b16 %v2052, %v2051
    %v2066 = vpack.c.b16 %v2054, %v2053
    %v2067 = vpack.c.b16 %v2056, %v2055
    %v2068 = vpack.c.b16 %v2058, %v2057
    %v2069 = vpack.c.b16 %v2060, %v2059
    %v2070 = vpack.c.b16 %v2062, %v2061
    %2079 = vmatprep.subr.bf16.mxu0 0
    %2080 = vmatpush1.bf16.msra.mxu0 %v2063
    %2081 = vmatprep.subr.bf16.mxu0 0
    %2082 = vmatpush1.bf16.msra.mxu0 %v2064
    %2083 = vmatprep.subr.bf16.mxu0 0
    %2084 = vmatpush1.bf16.msra.mxu0 %v2065
    %2085 = vmatprep.subr.bf16.mxu0 0
    %2086 = vmatpush1.bf16.msra.mxu0 %v2066
    %2087 = vmatprep.subr.bf16.mxu0 0
    %2088 = vmatpush1.bf16.msra.mxu0 %v2067
    %2089 = vmatprep.subr.bf16.mxu0 0
    %2090 = vmatpush1.bf16.msra.mxu0 %v2068
    %2091 = vmatprep.subr.bf16.mxu0 0
    %2092 = vmatpush1.bf16.msra.mxu0 %v2069
    %2093 = vmatprep.subr.bf16.mxu0 0
    %2094 = vmatpush1.bf16.msra.mxu0 %v2070
    %2095 = vmatprep.subr.bf16.mxu0 0
    %2096 = vmatpush1.bf16.msra.mxu0 0
    %2097 = vmatprep.subr.bf16.mxu0 0
    %2098 = vmatpush1.bf16.msra.mxu0 0
    %2099 = vmatprep.subr.bf16.mxu0 0
    %2100 = vmatpush1.bf16.msra.mxu0 0
    %2101 = vmatprep.subr.bf16.mxu0 0
    %2102 = vmatpush1.bf16.msra.mxu0 0
    %2103 = vmatprep.subr.bf16.mxu0 0
    %2104 = vmatpush1.bf16.msra.mxu0 0
    %2105 = vmatprep.subr.bf16.mxu0 0
    %2106 = vmatpush1.bf16.msra.mxu0 0
    %2107 = vmatprep.subr.bf16.mxu0 0
    %2108 = vmatpush1.bf16.msra.mxu0 0
    %2109 = vmatprep.subr.bf16.mxu0 0
    %2110 = vmatpush1.bf16.msra.mxu0 0
    %2111 = vmatprep.mubr.bf16.mxu0 0
    %2112 = vmatmul.mubr.bf16.gmra.mrb[0].mxu0 %v2026
    %v2113 = vpop.f32.mrb[0].mxu0
    %v2114 = vadd.f32 %v2030, %v2113
    %v2115 = vpop.f32.mrb[0].mxu0
    %v2116 = vpop.f32.mrb[0].mxu0
    %v2117 = vpop.f32.mrb[0].mxu0
    %2118 = vdwg.mxu0
    %vm2119 = vcmp.gt.f32.partialorder %v2114, 0.0
    %v2120 = vmul.f32 %v2114, 0.01
    %v2121 = vsel %vm2119, %v2114, %v2120
    %v2122 = vpack.c.bf16 %v2121, %v2121
    %v2123 = vlaneseq
    %v2124 = vshrl.u32 %v2123, 7
    %v2125 = vsub.s32 0, %v2124
    %v2126 = vrot.slane %v1971, %v2125
    %v2143 = vunpack.c.l.b16 %v1954
    %v2144 = vunpack.c.l.b16 %v1955
    %v2145 = vunpack.c.l.b16 %v1956
    %v2146 = vunpack.c.l.b16 %v1957
    %v2147 = vunpack.c.l.b16 %v1958
    %v2148 = vunpack.c.l.b16 %v1959
    %v2149 = vunpack.c.l.b16 %v1960
    %v2150 = vunpack.c.l.b16 %v1961
    %v2151 = vunpack.c.l.b16 %v1962
    %v2152 = vunpack.c.l.b16 %v1963
    %v2153 = vunpack.c.l.b16 %v1964
    %v2154 = vunpack.c.l.b16 %v1965
    %v2155 = vunpack.c.l.b16 %v1966
    %v2156 = vunpack.c.l.b16 %v1967
    %v2157 = vunpack.c.l.b16 %v1968
    %v2158 = vunpack.c.l.b16 %v1969
    %v2159 = vpack.c.b16 %v2144, %v2143
    %v2160 = vpack.c.b16 %v2146, %v2145
    %v2161 = vpack.c.b16 %v2148, %v2147
    %v2162 = vpack.c.b16 %v2150, %v2149
    %v2163 = vpack.c.b16 %v2152, %v2151
    %v2164 = vpack.c.b16 %v2154, %v2153
    %v2165 = vpack.c.b16 %v2156, %v2155
    %v2166 = vpack.c.b16 %v2158, %v2157
    %2175 = vmatprep.subr.bf16.mxu0 0
    %2176 = vmatpush1.bf16.msra.mxu0 %v2159
    %2177 = vmatprep.subr.bf16.mxu0 0
    %2178 = vmatpush1.bf16.msra.mxu0 %v2160
    %2179 = vmatprep.subr.bf16.mxu0 0
    %2180 = vmatpush1.bf16.msra.mxu0 %v2161
    %2181 = vmatprep.subr.bf16.mxu0 0
    %2182 = vmatpush1.bf16.msra.mxu0 %v2162
    %2183 = vmatprep.subr.bf16.mxu0 0
    %2184 = vmatpush1.bf16.msra.mxu0 %v2163
    %2185 = vmatprep.subr.bf16.mxu0 0
    %2186 = vmatpush1.bf16.msra.mxu0 %v2164
    %2187 = vmatprep.subr.bf16.mxu0 0
    %2188 = vmatpush1.bf16.msra.mxu0 %v2165
    %2189 = vmatprep.subr.bf16.mxu0 0
    %2190 = vmatpush1.bf16.msra.mxu0 %v2166
    %2191 = vmatprep.subr.bf16.mxu0 0
    %2192 = vmatpush1.bf16.msra.mxu0 0
    %2193 = vmatprep.subr.bf16.mxu0 0
    %2194 = vmatpush1.bf16.msra.mxu0 0
    %2195 = vmatprep.subr.bf16.mxu0 0
    %2196 = vmatpush1.bf16.msra.mxu0 0
    %2197 = vmatprep.subr.bf16.mxu0 0
    %2198 = vmatpush1.bf16.msra.mxu0 0
    %2199 = vmatprep.subr.bf16.mxu0 0
    %2200 = vmatpush1.bf16.msra.mxu0 0
    %2201 = vmatprep.subr.bf16.mxu0 0
    %2202 = vmatpush1.bf16.msra.mxu0 0
    %2203 = vmatprep.subr.bf16.mxu0 0
    %2204 = vmatpush1.bf16.msra.mxu0 0
    %2205 = vmatprep.subr.bf16.mxu0 0
    %2206 = vmatpush1.bf16.msra.mxu0 0
    %2207 = vmatprep.mubr.bf16.mxu0 0
    %2208 = vmatmul.mubr.bf16.gmra.mrb[0].mxu0 %v2122
    %v2209 = vpop.f32.mrb[0].mxu0
    %v2210 = vadd.f32 %v2126, %v2209
    %v2211 = vpop.f32.mrb[0].mxu0
    %v2212 = vpop.f32.mrb[0].mxu0
    %v2213 = vpop.f32.mrb[0].mxu0
    %2214 = vdwg.mxu0
    %v2215 = vtanh.pop %v2210
    %v2216 = vmul.f32 %v2215, %v49
    %v2217 = vmul.f32 %v2210, %v677
    %v2218 = vmul.f32 %v2216, 1.442695
    %v2219 = vpow.pop %v2218
    %v2220 = vmul.f32 %v1931, %v2219
    %2222 = vrot.lane.b32.xlu0 %v2217, 124
    %v2223 = vpop.permute.xlu0 %2222
    %v2225 = vadd.f32 %v2220, %v2223
    %v2226 = vmul.f32 %v49, %v2225
    %v2227 = vadd.f32 %v1932, %v2226
    %v2228 = vmul.f32 %v49, %v2227
    %v2229 = vld [vmem:[#allocation3 + $0x140] sm:$0x3]
    %v2230 = vld [vmem:[#allocation3 + $0x148] sm:$0x1]
    %v2231 = vunpack.c.l.bf16 %v2230
    %v2232 = vld [vmem:[#allocation3 + $0x150] sm:$0xf]
    %v2233 = vld [vmem:[#allocation3 + $0x154] sm:$0xf]
    %v2234 = vld [vmem:[#allocation3 + $0x158] sm:$0xf]
    %v2235 = vld [vmem:[#allocation3 + $0x15c] sm:$0xf]
    %v2236 = vld [vmem:[#allocation3 + $0x160] sm:$0xf]
    %v2237 = vld [vmem:[#allocation3 + $0x164] sm:$0xf]
    %v2238 = vld [vmem:[#allocation3 + $0x168] sm:$0xf]
    %v2239 = vld [vmem:[#allocation3 + $0x16c] sm:$0xf]
    %v2240 = vld [vmem:[#allocation3 + $0x170] sm:$0xf]
    %v2241 = vld [vmem:[#allocation3 + $0x174] sm:$0xf]
    %v2242 = vld [vmem:[#allocation3 + $0x178] sm:$0xf]
    %v2243 = vld [vmem:[#allocation3 + $0x17c] sm:$0xf]
    %v2244 = vld [vmem:[#allocation3 + $0x180] sm:$0xf]
    %v2245 = vld [vmem:[#allocation3 + $0x184] sm:$0xf]
    %v2246 = vld [vmem:[#allocation3 + $0x188] sm:$0xf]
    %v2247 = vld [vmem:[#allocation3 + $0x18c] sm:$0xf]
    %v2248 = vld [vmem:[#allocation3 + $0x190] sm:$0x1]
    %v2249 = vunpack.c.l.bf16 %v2248
    %v2250 = vld [vmem:[#allocation3 + $0x198] sm:$0xf]
    %v2251 = vld [vmem:[#allocation3 + $0x19c] sm:$0xf]
    %v2252 = vld [vmem:[#allocation3 + $0x1a0] sm:$0xf]
    %v2253 = vld [vmem:[#allocation3 + $0x1a4] sm:$0xf]
    %v2254 = vld [vmem:[#allocation3 + $0x1a8] sm:$0xf]
    %v2255 = vld [vmem:[#allocation3 + $0x1ac] sm:$0xf]
    %v2256 = vld [vmem:[#allocation3 + $0x1b0] sm:$0xf]
    %v2257 = vld [vmem:[#allocation3 + $0x1b4] sm:$0xf]
    %v2258 = vld [vmem:[#allocation3 + $0x1b8] sm:$0xf]
    %v2259 = vld [vmem:[#allocation3 + $0x1bc] sm:$0xf]
    %v2260 = vld [vmem:[#allocation3 + $0x1c0] sm:$0xf]
    %v2261 = vld [vmem:[#allocation3 + $0x1c4] sm:$0xf]
    %v2262 = vld [vmem:[#allocation3 + $0x1c8] sm:$0xf]
    %v2263 = vld [vmem:[#allocation3 + $0x1cc] sm:$0xf]
    %v2264 = vld [vmem:[#allocation3 + $0x1d0] sm:$0xf]
    %v2265 = vld [vmem:[#allocation3 + $0x1d4] sm:$0xf]
    %v2266 = vld [vmem:[#allocation3 + $0x1d8] sm:$0x1]
    %v2267 = vunpack.c.l.bf16 %v2266
    %v2268 = vpack.c.bf16 %v2228, %v2228
    %v2269 = vlaneseq
    %v2270 = vshrl.u32 %v2269, 7
    %v2271 = vsub.s32 0, %v2270
    %v2272 = vrot.slane %v2231, %v2271
    %v2274 = vsel %vm97, %v2268, 0
    %v2277 = vsel %vm101, %v2229, 0
    %2279 = vmatprep.subr.bf16.mxu0 0
    %2280 = vmatpush1.bf16.msra.mxu0 %v2277
    %2281 = vmatprep.subr.bf16.mxu0 0
    %2282 = vmatpush1.bf16.msra.mxu0 0
    %2283 = vmatprep.subr.bf16.mxu0 0
    %2284 = vmatpush1.bf16.msra.mxu0 0
    %2285 = vmatprep.subr.bf16.mxu0 0
    %2286 = vmatpush1.bf16.msra.mxu0 0
    %2287 = vmatprep.subr.bf16.mxu0 0
    %2288 = vmatpush1.bf16.msra.mxu0 0
    %2289 = vmatprep.subr.bf16.mxu0 0
    %2290 = vmatpush1.bf16.msra.mxu0 0
    %2291 = vmatprep.subr.bf16.mxu0 0
    %2292 = vmatpush1.bf16.msra.mxu0 0
    %2293 = vmatprep.subr.bf16.mxu0 0
    %2294 = vmatpush1.bf16.msra.mxu0 0
    %2295 = vmatprep.subr.bf16.mxu0 0
    %2296 = vmatpush1.bf16.msra.mxu0 0
    %2297 = vmatprep.subr.bf16.mxu0 0
    %2298 = vmatpush1.bf16.msra.mxu0 0
    %2299 = vmatprep.subr.bf16.mxu0 0
    %2300 = vmatpush1.bf16.msra.mxu0 0
    %2301 = vmatprep.subr.bf16.mxu0 0
    %2302 = vmatpush1.bf16.msra.mxu0 0
    %2303 = vmatprep.subr.bf16.mxu0 0
    %2304 = vmatpush1.bf16.msra.mxu0 0
    %2305 = vmatprep.subr.bf16.mxu0 0
    %2306 = vmatpush1.bf16.msra.mxu0 0
    %2307 = vmatprep.subr.bf16.mxu0 0
    %2308 = vmatpush1.bf16.msra.mxu0 0
    %2309 = vmatprep.subr.bf16.mxu0 0
    %2310 = vmatpush1.bf16.msra.mxu0 0
    %2311 = vmatprep.mubr.bf16.mxu0 0
    %2312 = vmatmul.mubr.bf16.gmra.mrb[0].mxu0 %v2274
    %v2313 = vpop.f32.mrb[0].mxu0
    %v2314 = vadd.f32 %v2272, %v2313
    %v2315 = vpop.f32.mrb[0].mxu0
    %v2316 = vpop.f32.mrb[0].mxu0
    %v2317 = vpop.f32.mrb[0].mxu0
    %2318 = vdwg.mxu0
    %vm2319 = vcmp.gt.f32.partialorder %v2314, 0.0
    %v2320 = vmul.f32 %v2314, 0.01
    %v2321 = vsel %vm2319, %v2314, %v2320
    %v2322 = vpack.c.bf16 %v2321, %v2321
    %v2323 = vlaneseq
    %v2324 = vshrl.u32 %v2323, 7
    %v2325 = vsub.s32 0, %v2324
    %v2326 = vrot.slane %v2249, %v2325
    %v2343 = vunpack.c.l.b16 %v2232
    %v2344 = vunpack.c.l.b16 %v2233
    %v2345 = vunpack.c.l.b16 %v2234
    %v2346 = vunpack.c.l.b16 %v2235
    %v2347 = vunpack.c.l.b16 %v2236
    %v2348 = vunpack.c.l.b16 %v2237
    %v2349 = vunpack.c.l.b16 %v2238
    %v2350 = vunpack.c.l.b16 %v2239
    %v2351 = vunpack.c.l.b16 %v2240
    %v2352 = vunpack.c.l.b16 %v2241
    %v2353 = vunpack.c.l.b16 %v2242
    %v2354 = vunpack.c.l.b16 %v2243
    %v2355 = vunpack.c.l.b16 %v2244
    %v2356 = vunpack.c.l.b16 %v2245
    %v2357 = vunpack.c.l.b16 %v2246
    %v2358 = vunpack.c.l.b16 %v2247
    %v2359 = vpack.c.b16 %v2344, %v2343
    %v2360 = vpack.c.b16 %v2346, %v2345
    %v2361 = vpack.c.b16 %v2348, %v2347
    %v2362 = vpack.c.b16 %v2350, %v2349
    %v2363 = vpack.c.b16 %v2352, %v2351
    %v2364 = vpack.c.b16 %v2354, %v2353
    %v2365 = vpack.c.b16 %v2356, %v2355
    %v2366 = vpack.c.b16 %v2358, %v2357
    %2375 = vmatprep.subr.bf16.mxu0 0
    %2376 = vmatpush1.bf16.msra.mxu0 %v2359
    %2377 = vmatprep.subr.bf16.mxu0 0
    %2378 = vmatpush1.bf16.msra.mxu0 %v2360
    %2379 = vmatprep.subr.bf16.mxu0 0
    %2380 = vmatpush1.bf16.msra.mxu0 %v2361
    %2381 = vmatprep.subr.bf16.mxu0 0
    %2382 = vmatpush1.bf16.msra.mxu0 %v2362
    %2383 = vmatprep.subr.bf16.mxu0 0
    %2384 = vmatpush1.bf16.msra.mxu0 %v2363
    %2385 = vmatprep.subr.bf16.mxu0 0
    %2386 = vmatpush1.bf16.msra.mxu0 %v2364
    %2387 = vmatprep.subr.bf16.mxu0 0
    %2388 = vmatpush1.bf16.msra.mxu0 %v2365
    %2389 = vmatprep.subr.bf16.mxu0 0
    %2390 = vmatpush1.bf16.msra.mxu0 %v2366
    %2391 = vmatprep.subr.bf16.mxu0 0
    %2392 = vmatpush1.bf16.msra.mxu0 0
    %2393 = vmatprep.subr.bf16.mxu0 0
    %2394 = vmatpush1.bf16.msra.mxu0 0
    %2395 = vmatprep.subr.bf16.mxu0 0
    %2396 = vmatpush1.bf16.msra.mxu0 0
    %2397 = vmatprep.subr.bf16.mxu0 0
    %2398 = vmatpush1.bf16.msra.mxu0 0
    %2399 = vmatprep.subr.bf16.mxu0 0
    %2400 = vmatpush1.bf16.msra.mxu0 0
    %2401 = vmatprep.subr.bf16.mxu0 0
    %2402 = vmatpush1.bf16.msra.mxu0 0
    %2403 = vmatprep.subr.bf16.mxu0 0
    %2404 = vmatpush1.bf16.msra.mxu0 0
    %2405 = vmatprep.subr.bf16.mxu0 0
    %2406 = vmatpush1.bf16.msra.mxu0 0
    %2407 = vmatprep.mubr.bf16.mxu0 0
    %2408 = vmatmul.mubr.bf16.gmra.mrb[0].mxu0 %v2322
    %v2409 = vpop.f32.mrb[0].mxu0
    %v2410 = vadd.f32 %v2326, %v2409
    %v2411 = vpop.f32.mrb[0].mxu0
    %v2412 = vpop.f32.mrb[0].mxu0
    %v2413 = vpop.f32.mrb[0].mxu0
    %2414 = vdwg.mxu0
    %vm2415 = vcmp.gt.f32.partialorder %v2410, 0.0
    %v2416 = vmul.f32 %v2410, 0.01
    %v2417 = vsel %vm2415, %v2410, %v2416
    %v2418 = vpack.c.bf16 %v2417, %v2417
    %v2419 = vlaneseq
    %v2420 = vshrl.u32 %v2419, 7
    %v2421 = vsub.s32 0, %v2420
    %v2422 = vrot.slane %v2267, %v2421
    %v2439 = vunpack.c.l.b16 %v2250
    %v2440 = vunpack.c.l.b16 %v2251
    %v2441 = vunpack.c.l.b16 %v2252
    %v2442 = vunpack.c.l.b16 %v2253
    %v2443 = vunpack.c.l.b16 %v2254
    %v2444 = vunpack.c.l.b16 %v2255
    %v2445 = vunpack.c.l.b16 %v2256
    %v2446 = vunpack.c.l.b16 %v2257
    %v2447 = vunpack.c.l.b16 %v2258
    %v2448 = vunpack.c.l.b16 %v2259
    %v2449 = vunpack.c.l.b16 %v2260
    %v2450 = vunpack.c.l.b16 %v2261
    %v2451 = vunpack.c.l.b16 %v2262
    %v2452 = vunpack.c.l.b16 %v2263
    %v2453 = vunpack.c.l.b16 %v2264
    %v2454 = vunpack.c.l.b16 %v2265
    %v2455 = vpack.c.b16 %v2440, %v2439
    %v2456 = vpack.c.b16 %v2442, %v2441
    %v2457 = vpack.c.b16 %v2444, %v2443
    %v2458 = vpack.c.b16 %v2446, %v2445
    %v2459 = vpack.c.b16 %v2448, %v2447
    %v2460 = vpack.c.b16 %v2450, %v2449
    %v2461 = vpack.c.b16 %v2452, %v2451
    %v2462 = vpack.c.b16 %v2454, %v2453
    %2471 = vmatprep.subr.bf16.mxu0 0
    %2472 = vmatpush1.bf16.msra.mxu0 %v2455
    %2473 = vmatprep.subr.bf16.mxu0 0
    %2474 = vmatpush1.bf16.msra.mxu0 %v2456
    %2475 = vmatprep.subr.bf16.mxu0 0
    %2476 = vmatpush1.bf16.msra.mxu0 %v2457
    %2477 = vmatprep.subr.bf16.mxu0 0
    %2478 = vmatpush1.bf16.msra.mxu0 %v2458
    %2479 = vmatprep.subr.bf16.mxu0 0
    %2480 = vmatpush1.bf16.msra.mxu0 %v2459
    %2481 = vmatprep.subr.bf16.mxu0 0
    %2482 = vmatpush1.bf16.msra.mxu0 %v2460
    %2483 = vmatprep.subr.bf16.mxu0 0
    %2484 = vmatpush1.bf16.msra.mxu0 %v2461
    %2485 = vmatprep.subr.bf16.mxu0 0
    %2486 = vmatpush1.bf16.msra.mxu0 %v2462
    %2487 = vmatprep.subr.bf16.mxu0 0
    %2488 = vmatpush1.bf16.msra.mxu0 0
    %2489 = vmatprep.subr.bf16.mxu0 0
    %2490 = vmatpush1.bf16.msra.mxu0 0
    %2491 = vmatprep.subr.bf16.mxu0 0
    %2492 = vmatpush1.bf16.msra.mxu0 0
    %2493 = vmatprep.subr.bf16.mxu0 0
    %2494 = vmatpush1.bf16.msra.mxu0 0
    %2495 = vmatprep.subr.bf16.mxu0 0
    %2496 = vmatpush1.bf16.msra.mxu0 0
    %2497 = vmatprep.subr.bf16.mxu0 0
    %2498 = vmatpush1.bf16.msra.mxu0 0
    %2499 = vmatprep.subr.bf16.mxu0 0
    %2500 = vmatpush1.bf16.msra.mxu0 0
    %2501 = vmatprep.subr.bf16.mxu0 0
    %2502 = vmatpush1.bf16.msra.mxu0 0
    %2503 = vmatprep.mubr.bf16.mxu0 0
    %2504 = vmatmul.mubr.bf16.gmra.mrb[0].mxu0 %v2418
    %v2505 = vpop.f32.mrb[0].mxu0
    %v2506 = vadd.f32 %v2422, %v2505
    %v2507 = vpop.f32.mrb[0].mxu0
    %v2508 = vpop.f32.mrb[0].mxu0
    %v2509 = vpop.f32.mrb[0].mxu0
    %2510 = vdwg.mxu0
    %v2511 = vtanh.pop %v2506
    %v2512 = vmul.f32 %v2511, %v50
    %v2513 = vmul.f32 %v2506, %v352
    %v2514 = vmul.f32 %v2512, 1.442695
    %v2515 = vpow.pop %v2514
    %v2516 = vmul.f32 %v2227, %v2515
    %2518 = vrot.lane.b32.xlu0 %v2513, 124
    %v2519 = vpop.permute.xlu0 %2518
    %v2521 = vadd.f32 %v2516, %v2519
    %v2522 = vmul.f32 %v50, %v2521
    %v2523 = vadd.f32 %v2228, %v2522
    %2524 = vst [vmem:[%s3] sm:$0xff] 0.0
    %2525 = vst.msk [vmem:[%s3] sm:$0xff] %vm97, %v2523
    %2527 = vrot.lane.b32.xlu0 %v1022, 4
    %v2528 = vpop.permute.xlu0 %2527
    %vm2530 = vcmask 48160
    %2531 = vst.msk [vmem:[%s3] sm:$0xff] %vm2530, %v2528
    %2533 = vrot.lane.b32.xlu0 %v1023, 6
    %v2534 = vpop.permute.xlu0 %2533
    %vm2536 = vcmask 64560
    %2537 = vst.msk [vmem:[%s3] sm:$0xff] %vm2536, %v2534
    %2539 = vrot.lane.b32.xlu0 %v1631, 8
    %v2540 = vpop.permute.xlu0 %2539
    %vm2542 = vcmask 80960
    %2543 = vst.msk [vmem:[%s3] sm:$0xff] %vm2542, %v2540
    // Predicated region
    $region22: #{fwd.1} parent=1 // pred_check
      _
    $region23: #{fwd.1} parent=1 // pred_check_branch
      %2545 = sbr.rel (0) target = $region25
    $region24: #{fwd.1} parent=1 // pred_region
      _
    $region25: #{fwd.1} parent=1 // pred_fallthru
      _
    // Predicated region
    $region26: #{fwd.1} parent=1 // pred_check
      _
    $region27: #{fwd.1} parent=1 // pred_check_branch
      %2547 = sbr.rel (0) target = $region29
    $region28: #{fwd.1} parent=1 // pred_region
      _
    $region29: #{fwd.1} parent=1 // pred_fallthru
      _
    %2548 = vsyncpa [#allocation4], 1
    %2549 = vsyncpa [#allocation6], 1

</llo_original>
